<compile_context>
chip_gen: v7x
topology: tpu7x:2x2x1
jax: 0.10.0
libtpu: 0.0.40
codegen_flags: <defaults>
</compile_context>

<pallas_src>
import functools

import jax
import jax.numpy as jnp
from jax import lax
from jax.experimental import pallas as pl
from jax.experimental.pallas import tpu as pltpu

BN_EPS = 1e-5
VMEM_LIMIT_BYTES = 64 * 1024 * 1024


def _compiler_params():
    return pltpu.CompilerParams(dimension_semantics=("parallel",),
                                vmem_limit_bytes=VMEM_LIMIT_BYTES)


# ----------------------------- Pallas kernels ------------------------------ #

def _conv1_kernel(x_ref, w1_ref, y1_ref, s_ref, q_ref):
    # conv1 (1x1): (P, Cin) @ (Cin, HW) on the MXU (bf16 in, f32 accumulate),
    # plus per-image partial BN1 statistics from the f32 accumulator.
    y = jnp.dot(w1_ref[...], x_ref[0].astype(jnp.bfloat16),
                preferred_element_type=jnp.float32)            # (P, HW) f32
    y1_ref[0] = y.astype(jnp.bfloat16)                         # bf16 intermediate
    s_ref[0] = jnp.sum(y, axis=1, keepdims=True)
    q_ref[0] = jnp.sum(y * y, axis=1, keepdims=True)


def _conv2_kernel(y1_ref, w2_ref, a1_ref, c1_ref, y2_ref, s_ref, q_ref, zp_ref,
                  *, W):
    # bn1 (precomputed scale/shift) + relu, then the 3x3 conv (stride=1,
    # pad=1) as 9 (P, P) @ (P, HW) matmuls against a zero-padded bf16 VMEM
    # scratch.  Channels on sublanes, flattened pixels on lanes.
    P = y1_ref.shape[1]
    HW = y1_ref.shape[2]
    pad = W + 1                                   # covers |dy*W + dx| <= W+1

    z = jnp.maximum(y1_ref[0].astype(jnp.float32) * a1_ref[...] + c1_ref[...],
                    0.0)                                        # (P, HW) f32
    # Single bf16 cast; the zero borders supply the out-of-image (dy) taps.
    zp_ref[:, :pad] = jnp.zeros((P, pad), jnp.bfloat16)
    zp_ref[:, pad + HW:] = jnp.zeros((P, pad), jnp.bfloat16)
    zp_ref[:, pad:pad + HW] = z.astype(jnp.bfloat16)

    # Each output pixel's w coordinate (lane axis), for width-boundary masks.
    col = lax.broadcasted_iota(jnp.int32, (1, HW), 1) % W

    acc = jnp.zeros((P, HW), jnp.float32)
    for kx in range(3):
        dx = kx - 1
        part = jnp.zeros((P, HW), jnp.float32)
        for ky in range(3):
            dy = ky - 1
            start = pad + dy * W + dx             # static slice start
            part = part + jnp.dot(w2_ref[ky * 3 + kx],
                                  zp_ref[:, start:start + HW],
                                  preferred_element_type=jnp.float32)
        # A whole-pixel mask commutes with the channel matmul, so one select
        # per kx group (2 total) replaces the 6 per-tap masks of v1.
        if dx == -1:
            part = jnp.where(col >= 1, part, 0.0)
        elif dx == 1:
            part = jnp.where(col <= W - 2, part, 0.0)
        acc = acc + part

    y2_ref[0] = acc.astype(jnp.bfloat16)                        # bf16 intermediate
    s_ref[0] = jnp.sum(acc, axis=1, keepdims=True)
    q_ref[0] = jnp.sum(acc * acc, axis=1, keepdims=True)


def _conv3_stats_kernel(y2_ref, w3_ref, a2_ref, c2_ref, s_ref, q_ref):
    # bn2 + relu + conv3 (1x1), emitting only partial BN3 statistics (y3 is
    # recomputed in the final pass instead of being written to HBM).
    z = jnp.maximum(y2_ref[0].astype(jnp.float32) * a2_ref[...] + c2_ref[...],
                    0.0)
    y = jnp.dot(w3_ref[...], z.astype(jnp.bfloat16),
                preferred_element_type=jnp.float32)             # (4P, HW)
    s_ref[0] = jnp.sum(y, axis=1, keepdims=True)
    q_ref[0] = jnp.sum(y * y, axis=1, keepdims=True)


def _final_kernel(y2_ref, x_ref, w3_ref, a2_ref, c2_ref, a3_ref, c3_ref, o_ref):
    # bn2 + relu + conv3 + bn3 + residual add + relu, all in NCHW layout.
    z = jnp.maximum(y2_ref[0].astype(jnp.float32) * a2_ref[...] + c2_ref[...],
                    0.0)
    y = jnp.dot(w3_ref[...], z.astype(jnp.bfloat16),
                preferred_element_type=jnp.float32)
    o_ref[0] = jnp.maximum(y * a3_ref[...] + c3_ref[...] + x_ref[0], 0.0)


# --------------------------- host-side glue -------------------------------- #

def _bn_scale_shift(sum_p, sq_p, count, gamma, beta):
    """Fold per-image (C, 1) partial sums into per-channel BN scale/shift."""
    s = jnp.sum(sum_p, axis=0)                    # (C, 1)
    q = jnp.sum(sq_p, axis=0)
    mean = s / count
    # Clamp guards against tiny negative variance from E[x^2]-E[x]^2
    # cancellation.  TODO(synk): use per-tile centered sums for huge counts.
    var = jnp.maximum(q / count - mean * mean, 0.0)
    scale = gamma.astype(jnp.float32).reshape(-1, 1) * lax.rsqrt(var + BN_EPS)
    shift = beta.astype(jnp.float32).reshape(-1, 1) - mean * scale
    return scale, shift


def bottleneck_forward(x_nchw, params):
    N, Cin, H, W = x_nchw.shape
    P = params['w1'].shape[0]                     # planes
    assert Cin == 4 * P, "downsample=None / stride=1 requires inplanes == planes*4"
    HW = H * W
    count = N * HW
    f32, bf16 = jnp.float32, jnp.bfloat16

    # NCHW -> (N, C, H*W): a free view.  No layout transposes anywhere.
    x_r = x_nchw.astype(f32).reshape(N, Cin, HW)

    # Conv weights reshaped once into (Cout, Cin) matmul form, bf16 for MXU.
    w1 = params['w1'].reshape(P, Cin).astype(bf16)                           # (P, Cin)
    w2 = jnp.transpose(params['w2'], (2, 3, 0, 1)).reshape(9, P, P).astype(bf16)
    w3 = params['w3'].reshape(4 * P, P).astype(bf16)                         # (4P, P)

    cp = _compiler_params()

    # ---- Pass 1: conv1 (1x1) + partial BN1 stats, one image per step. ------ #
    y1, s1, q1 = pl.pallas_call(
        _conv1_kernel,
        grid=(N,),
        in_specs=[
            pl.BlockSpec((1, Cin, HW), lambda n: (n, 0, 0)),
            pl.BlockSpec((P, Cin), lambda n: (0, 0)),          # resident weights
        ],
        out_specs=[
            pl.BlockSpec((1, P, HW), lambda n: (n, 0, 0)),
            pl.BlockSpec((1, P, 1), lambda n: (n, 0, 0)),
            pl.BlockSpec((1, P, 1), lambda n: (n, 0, 0)),
        ],
        out_shape=[
            jax.ShapeDtypeStruct((N, P, HW), bf16),
            jax.ShapeDtypeStruct((N, P, 1), f32),
            jax.ShapeDtypeStruct((N, P, 1), f32),
        ],
        compiler_params=cp,
        cost_estimate=pl.CostEstimate(flops=2 * count * Cin * P, transcendentals=0,
                                      bytes_accessed=4 * count * Cin + 2 * count * P),
    )(x_r, w1)
    scale1, shift1 = _bn_scale_shift(s1, q1, count, params['g1'], params['b1'])

    # ---- Pass 2: bn1+relu + conv2 (3x3) + partial BN2 stats, per image. ---- #
    y2, s2, q2 = pl.pallas_call(
        functools.partial(_conv2_kernel, W=W),
        grid=(N,),
        in_specs=[
            pl.BlockSpec((1, P, HW), lambda n: (n, 0, 0)),
            pl.BlockSpec((9, P, P), lambda n: (0, 0, 0)),
            pl.BlockSpec((P, 1), lambda n: (0, 0)),
            pl.BlockSpec((P, 1), lambda n: (0, 0)),
        ],
        out_specs=[
            pl.BlockSpec((1, P, HW), lambda n: (n, 0, 0)),
            pl.BlockSpec((1, P, 1), lambda n: (n, 0, 0)),
            pl.BlockSpec((1, P, 1), lambda n: (n, 0, 0)),
        ],
        out_shape=[
            jax.ShapeDtypeStruct((N, P, HW), bf16),
            jax.ShapeDtypeStruct((N, P, 1), f32),
            jax.ShapeDtypeStruct((N, P, 1), f32),
        ],
        scratch_shapes=[pltpu.VMEM((P, HW + 2 * (W + 1)), bf16)],
        compiler_params=cp,
        cost_estimate=pl.CostEstimate(flops=2 * count * 9 * P * P, transcendentals=0,
                                      bytes_accessed=4 * count * P),
    )(y1, w2, scale1, shift1)
    scale2, shift2 = _bn_scale_shift(s2, q2, count, params['g2'], params['b2'])

    # ---- Pass 3: bn2+relu + conv3 -> partial BN3 stats only. --------------- #
    s3, q3 = pl.pallas_call(
        _conv3_stats_kernel,
        grid=(N,),
        in_specs=[
            pl.BlockSpec((1, P, HW), lambda n: (n, 0, 0)),
            pl.BlockSpec((4 * P, P), lambda n: (0, 0)),
            pl.BlockSpec((P, 1), lambda n: (0, 0)),
            pl.BlockSpec((P, 1), lambda n: (0, 0)),
        ],
        out_specs=[
            pl.BlockSpec((1, 4 * P, 1), lambda n: (n, 0, 0)),
            pl.BlockSpec((1, 4 * P, 1), lambda n: (n, 0, 0)),
        ],
        out_shape=[
            jax.ShapeDtypeStruct((N, 4 * P, 1), f32),
            jax.ShapeDtypeStruct((N, 4 * P, 1), f32),
        ],
        compiler_params=cp,
        cost_estimate=pl.CostEstimate(flops=2 * count * P * 4 * P, transcendentals=0,
                                      bytes_accessed=2 * count * P),
    )(y2, w3, scale2, shift2)
    scale3, shift3 = _bn_scale_shift(s3, q3, count, params['g3'], params['b3'])

    # ---- Pass 4: bn2+relu + conv3 + bn3 + residual + relu (NCHW out). ------ #
    out_r = pl.pallas_call(
        _final_kernel,
        grid=(N,),
        in_specs=[
            pl.BlockSpec((1, P, HW), lambda n: (n, 0, 0)),
            pl.BlockSpec((1, Cin, HW), lambda n: (n, 0, 0)),
            pl.BlockSpec((4 * P, P), lambda n: (0, 0)),
            pl.BlockSpec((P, 1), lambda n: (0, 0)),
            pl.BlockSpec((P, 1), lambda n: (0, 0)),
            pl.BlockSpec((4 * P, 1), lambda n: (0, 0)),
            pl.BlockSpec((4 * P, 1), lambda n: (0, 0)),
        ],
        out_specs=pl.BlockSpec((1, Cin, HW), lambda n: (n, 0, 0)),
        out_shape=jax.ShapeDtypeStruct((N, Cin, HW), f32),
        compiler_params=cp,
        cost_estimate=pl.CostEstimate(flops=2 * count * P * 4 * P, transcendentals=0,
                                      bytes_accessed=2 * count * P + 8 * count * Cin),
    )(y2, x_r, w3, scale2, shift2, scale3, shift3)

    return out_r.reshape(N, Cin, H, W)            # NCHW throughout; free reshape


def reference_forward(x, p):
    """Pure-JAX (f32) reference mirroring the PyTorch forward (training-mode BN)."""
    def conv(x, w, stride, padding):
        return lax.conv_general_dilated(
            x, w, (stride, stride), [(padding, padding)] * 2,
            dimension_numbers=('NCHW', 'OIHW', 'NCHW'))

    def bn(x, g, b):
        mean = jnp.mean(x, axis=(0, 2, 3), keepdims=True)
        var = jnp.mean((x - mean) ** 2, axis=(0, 2, 3), keepdims=True)
        return ((x - mean) * lax.rsqrt(var + BN_EPS)
                * g.reshape(1, -1, 1, 1) + b.reshape(1, -1, 1, 1))

    out = jax.nn.relu(bn(conv(x, p['w1'], 1, 0), p['g1'], p['b1']))
    out = jax.nn.relu(bn(conv(out, p['w2'], 1, 1), p['g2'], p['b2']))
    out = bn(conv(out, p['w3'], 1, 0), p['g3'], p['b3'])
    return jax.nn.relu(out + x)


if __name__ == "__main__":
    key = jax.random.PRNGKey(0)
    planes = 8
    inplanes = planes * 4            # residual add valid without downsample
    N, H, W = 2, 16, 16

    ks = jax.random.split(key, 10)
    params = {
        'w1': 0.1 * jax.random.normal(ks[0], (planes, inplanes, 1, 1), jnp.float32),
        'w2': 0.1 * jax.random.normal(ks[1], (planes, planes, 3, 3), jnp.float32),
        'w3': 0.1 * jax.random.normal(ks[2], (planes * 4, planes, 1, 1), jnp.float32),
        'g1': 1.0 + 0.1 * jax.random.normal(ks[3], (planes,), jnp.float32),
        'b1': 0.1 * jax.random.normal(ks[4], (planes,), jnp.float32),
        'g2': 1.0 + 0.1 * jax.random.normal(ks[5], (planes,), jnp.float32),
        'b2': 0.1 * jax.random.normal(ks[6], (planes,), jnp.float32),
        'g3': 1.0 + 0.1 * jax.random.normal(ks[7], (planes * 4,), jnp.float32),
        'b3': 0.1 * jax.random.normal(ks[8], (planes * 4,), jnp.float32),
    }
    x = jax.random.normal(ks[9], (N, inplanes, H, W), jnp.float32)

    out = jax.block_until_ready(jax.jit(bottleneck_forward)(x, params))
    ref = jax.block_until_ready(jax.jit(reference_forward)(x, params))

    assert out.shape == (N, inplanes, H, W), out.shape
    # bf16 MXU inputs + bf16 y1/y2 intermediates (f32 accumulate, f32 BN
    # statistics) vs a pure-f32 reference: use a bf16-sized tolerance on the
    # normalised error.
    err = float(jnp.max(jnp.abs(out - ref) / (1.0 + jnp.abs(ref))))
    assert err < 5e-2, f"mismatch vs reference: normalized max err={err}"
    print("KERNEL_OK")
</pallas_src>

<mosaic_0001>
module attributes {stable_mosaic.version = 11 : i64} {
  func.func @_conv1_kernel(%arg0: i32, %arg1: memref<1x32x256xf32, #tpu.memory_space<vmem>>, %arg2: memref<8x32xbf16, #tpu.memory_space<vmem>>, %arg3: memref<1x8x256xbf16, #tpu.memory_space<vmem>>, %arg4: memref<1x8x1xf32, #tpu.memory_space<vmem>>, %arg5: memref<1x8x1xf32, #tpu.memory_space<vmem>>) attributes {dimension_semantics = [#tpu.dimension_semantics<parallel>], iteration_bounds = array<i64: 2>, scalar_prefetch = 0 : i64, scratch_operands = 0 : i64, tpu.core_type = #tpu.core_type<tc>, window_params = [{transform_indices = @transform_0, window_bounds = array<i64: 1, 32, 256>}, {pipeline_mode = #tpu.pipeline_mode<synchronous>, transform_indices = @transform_1, window_bounds = array<i64: 8, 32>}, {transform_indices = @transform_2, window_bounds = array<i64: 1, 8, 256>}, {transform_indices = @transform_3, window_bounds = array<i64: 1, 8, 1>}, {transform_indices = @transform_4, window_bounds = array<i64: 1, 8, 1>}]} {
    %c0 = arith.constant 0 : index
    %c0_0 = arith.constant 0 : index
    %0 = vector.load %arg2[%c0, %c0_0] : memref<8x32xbf16, #tpu.memory_space<vmem>>, vector<8x32xbf16>
    %c0_1 = arith.constant 0 : index
    %c0_2 = arith.constant 0 : index
    %c0_3 = arith.constant 0 : index
    %1 = vector.load %arg1[%c0_1, %c0_2, %c0_3] : memref<1x32x256xf32, #tpu.memory_space<vmem>>, vector<1x32x256xf32>
    %2 = vector.shape_cast %1 : vector<1x32x256xf32> to vector<32x256xf32>
    %3 = arith.truncf %2 : vector<32x256xf32> to vector<32x256xbf16>
    %cst = arith.constant dense<0.000000e+00> : vector<8x256xf32>
    %4 = tpu.matmul %0, %3, %cst {dimension_numbers = #tpu.dot_dimension_numbers<[1], [0], [0], [1], [0, 0, 1, 1], [], []>} : vector<8x32xbf16>, vector<32x256xbf16>, vector<8x256xf32> -> vector<8x256xf32>
    %5 = arith.truncf %4 : vector<8x256xf32> to vector<8x256xbf16>
    %c0_4 = arith.constant 0 : index
    %c0_5 = arith.constant 0 : index
    %c0_6 = arith.constant 0 : index
    %6 = vector.load %arg3[%c0_4, %c0_5, %c0_6] : memref<1x8x256xbf16, #tpu.memory_space<vmem>>, vector<1x8x256xbf16>
    %7 = vector.shape_cast %6 : vector<1x8x256xbf16> to vector<8x256xbf16>
    %8 = vector.shape_cast %5 : vector<8x256xbf16> to vector<1x8x256xbf16>
    tpu.vector_store %arg3[%c0_4, %c0_5, %c0_6], %8 {strides = array<i32>} : memref<1x8x256xbf16, #tpu.memory_space<vmem>>, vector<1x8x256xbf16>,
    %cst_7 = arith.constant dense<0.000000e+00> : vector<8xf32>
    %9 = vector.multi_reduction <add>, %4, %cst_7 [1] : vector<8x256xf32> to vector<8xf32>
    %10 = vector.shape_cast %9 : vector<8xf32> to vector<8x1xf32>
    %c0_8 = arith.constant 0 : index
    %c0_9 = arith.constant 0 : index
    %c0_10 = arith.constant 0 : index
    %11 = vector.load %arg4[%c0_8, %c0_9, %c0_10] : memref<1x8x1xf32, #tpu.memory_space<vmem>>, vector<1x8x1xf32>
    %12 = vector.shape_cast %11 : vector<1x8x1xf32> to vector<8x1xf32>
    %13 = vector.shape_cast %10 : vector<8x1xf32> to vector<1x8x1xf32>
    tpu.vector_store %arg4[%c0_8, %c0_9, %c0_10], %13 {strides = array<i32>} : memref<1x8x1xf32, #tpu.memory_space<vmem>>, vector<1x8x1xf32>,
    %14 = arith.mulf %4, %4 : vector<8x256xf32>
    %cst_11 = arith.constant dense<0.000000e+00> : vector<8xf32>
    %15 = vector.multi_reduction <add>, %14, %cst_11 [1] : vector<8x256xf32> to vector<8xf32>
    %16 = vector.shape_cast %15 : vector<8xf32> to vector<8x1xf32>
    %c0_12 = arith.constant 0 : index
    %c0_13 = arith.constant 0 : index
    %c0_14 = arith.constant 0 : index
    %17 = vector.load %arg5[%c0_12, %c0_13, %c0_14] : memref<1x8x1xf32, #tpu.memory_space<vmem>>, vector<1x8x1xf32>
    %18 = vector.shape_cast %17 : vector<1x8x1xf32> to vector<8x1xf32>
    %19 = vector.shape_cast %16 : vector<8x1xf32> to vector<1x8x1xf32>
    tpu.vector_store %arg5[%c0_12, %c0_13, %c0_14], %19 {strides = array<i32>} : memref<1x8x1xf32, #tpu.memory_space<vmem>>, vector<1x8x1xf32>,
    return
  }
  func.func @transform_0(%arg0: i32) -> (i32, i32, i32) {
    %c0_i32 = arith.constant 0 : i32
    %c0_i32_0 = arith.constant 0 : i32
    %c0_i32_1 = arith.constant 0 : i32
    return %arg0, %c0_i32, %c0_i32_0 : i32, i32, i32
  }
  func.func @transform_1(%arg0: i32) -> (i32, i32) {
    %c0_i32 = arith.constant 0 : i32
    %c0_i32_0 = arith.constant 0 : i32
    %c0_i32_1 = arith.constant 0 : i32
    return %c0_i32, %c0_i32_0 : i32, i32
  }
  func.func @transform_2(%arg0: i32) -> (i32, i32, i32) {
    %c0_i32 = arith.constant 0 : i32
    %c0_i32_0 = arith.constant 0 : i32
    %c0_i32_1 = arith.constant 0 : i32
    return %arg0, %c0_i32, %c0_i32_0 : i32, i32, i32
  }
  func.func @transform_3(%arg0: i32) -> (i32, i32, i32) {
    %c0_i32 = arith.constant 0 : i32
    %c0_i32_0 = arith.constant 0 : i32
    %c0_i32_1 = arith.constant 0 : i32
    return %arg0, %c0_i32, %c0_i32_0 : i32, i32, i32
  }
  func.func @transform_4(%arg0: i32) -> (i32, i32, i32) {
    %c0_i32 = arith.constant 0 : i32
    %c0_i32_0 = arith.constant 0 : i32
    %c0_i32_1 = arith.constant 0 : i32
    return %arg0, %c0_i32, %c0_i32_0 : i32, i32, i32
  }
}

module attributes {stable_mosaic.version = 11 : i64} {
  func.func @_conv3_stats_kernel(%arg0: i32, %arg1: memref<1x8x256xbf16, #tpu.memory_space<vmem>>, %arg2: memref<32x8xbf16, #tpu.memory_space<vmem>>, %arg3: memref<8x1xf32, #tpu.memory_space<vmem>>, %arg4: memref<8x1xf32, #tpu.memory_space<vmem>>, %arg5: memref<1x32x1xf32, #tpu.memory_space<vmem>>, %arg6: memref<1x32x1xf32, #tpu.memory_space<vmem>>) attributes {dimension_semantics = [#tpu.dimension_semantics<parallel>], iteration_bounds = array<i64: 2>, scalar_prefetch = 0 : i64, scratch_operands = 0 : i64, tpu.core_type = #tpu.core_type<tc>, window_params = [{transform_indices = @transform_0, window_bounds = array<i64: 1, 8, 256>}, {pipeline_mode = #tpu.pipeline_mode<synchronous>, transform_indices = @transform_1, window_bounds = array<i64: 32, 8>}, {pipeline_mode = #tpu.pipeline_mode<synchronous>, transform_indices = @transform_2, window_bounds = array<i64: 8, 1>}, {pipeline_mode = #tpu.pipeline_mode<synchronous>, transform_indices = @transform_3, window_bounds = array<i64: 8, 1>}, {transform_indices = @transform_4, window_bounds = array<i64: 1, 32, 1>}, {transform_indices = @transform_5, window_bounds = array<i64: 1, 32, 1>}]} {
    %c0 = arith.constant 0 : index
    %c0_0 = arith.constant 0 : index
    %c0_1 = arith.constant 0 : index
    %0 = vector.load %arg1[%c0, %c0_0, %c0_1] : memref<1x8x256xbf16, #tpu.memory_space<vmem>>, vector<1x8x256xbf16>
    %1 = vector.shape_cast %0 : vector<1x8x256xbf16> to vector<8x256xbf16>
    %2 = arith.extf %1 : vector<8x256xbf16> to vector<8x256xf32>
    %c0_2 = arith.constant 0 : index
    %c0_3 = arith.constant 0 : index
    %3 = vector.load %arg3[%c0_2, %c0_3] : memref<8x1xf32, #tpu.memory_space<vmem>>, vector<8x1xf32>
    %4 = vector.broadcast %3 : vector<8x1xf32> to vector<8x256xf32>
    %5 = arith.mulf %2, %4 : vector<8x256xf32>
    %c0_4 = arith.constant 0 : index
    %c0_5 = arith.constant 0 : index
    %6 = vector.load %arg4[%c0_4, %c0_5] : memref<8x1xf32, #tpu.memory_space<vmem>>, vector<8x1xf32>
    %7 = vector.broadcast %6 : vector<8x1xf32> to vector<8x256xf32>
    %8 = arith.addf %5, %7 : vector<8x256xf32>
    %cst = arith.constant 0.000000e+00 : f32
    %9 = vector.broadcast %cst : f32 to vector<8x256xf32>
    %10 = arith.maximumf %8, %9 : vector<8x256xf32>
    %c0_6 = arith.constant 0 : index
    %c0_7 = arith.constant 0 : index
    %11 = vector.load %arg2[%c0_6, %c0_7] : memref<32x8xbf16, #tpu.memory_space<vmem>>, vector<32x8xbf16>
    %12 = arith.truncf %10 : vector<8x256xf32> to vector<8x256xbf16>
    %cst_8 = arith.constant dense<0.000000e+00> : vector<32x256xf32>
    %13 = tpu.matmul %11, %12, %cst_8 {dimension_numbers = #tpu.dot_dimension_numbers<[1], [0], [0], [1], [0, 0, 1, 1], [], []>} : vector<32x8xbf16>, vector<8x256xbf16>, vector<32x256xf32> -> vector<32x256xf32>
    %cst_9 = arith.constant dense<0.000000e+00> : vector<32xf32>
    %14 = vector.multi_reduction <add>, %13, %cst_9 [1] : vector<32x256xf32> to vector<32xf32>
    %15 = vector.shape_cast %14 : vector<32xf32> to vector<32x1xf32>
    %c0_10 = arith.constant 0 : index
    %c0_11 = arith.constant 0 : index
    %c0_12 = arith.constant 0 : index
    %16 = vector.load %arg5[%c0_10, %c0_11, %c0_12] : memref<1x32x1xf32, #tpu.memory_space<vmem>>, vector<1x32x1xf32>
    %17 = vector.shape_cast %16 : vector<1x32x1xf32> to vector<32x1xf32>
    %18 = vector.shape_cast %15 : vector<32x1xf32> to vector<1x32x1xf32>
    tpu.vector_store %arg5[%c0_10, %c0_11, %c0_12], %18 {strides = array<i32>} : memref<1x32x1xf32, #tpu.memory_space<vmem>>, vector<1x32x1xf32>,
    %19 = arith.mulf %13, %13 : vector<32x256xf32>
    %cst_13 = arith.constant dense<0.000000e+00> : vector<32xf32>
    %20 = vector.multi_reduction <add>, %19, %cst_13 [1] : vector<32x256xf32> to vector<32xf32>
    %21 = vector.shape_cast %20 : vector<32xf32> to vector<32x1xf32>
    %c0_14 = arith.constant 0 : index
    %c0_15 = arith.constant 0 : index
    %c0_16 = arith.constant 0 : index
    %22 = vector.load %arg6[%c0_14, %c0_15, %c0_16] : memref<1x32x1xf32, #tpu.memory_space<vmem>>, vector<1x32x1xf32>
    %23 = vector.shape_cast %22 : vector<1x32x1xf32> to vector<32x1xf32>
    %24 = vector.shape_cast %21 : vector<32x1xf32> to vector<1x32x1xf32>
    tpu.vector_store %arg6[%c0_14, %c0_15, %c0_16], %24 {strides = array<i32>} : memref<1x32x1xf32, #tpu.memory_space<vmem>>, vector<1x32x1xf32>,
    return
  }
  func.func @transform_0(%arg0: i32) -> (i32, i32, i32) {
    %c0_i32 = arith.constant 0 : i32
    %c0_i32_0 = arith.constant 0 : i32
    %c0_i32_1 = arith.constant 0 : i32
    return %arg0, %c0_i32, %c0_i32_0 : i32, i32, i32
  }
  func.func @transform_1(%arg0: i32) -> (i32, i32) {
    %c0_i32 = arith.constant 0 : i32
    %c0_i32_0 = arith.constant 0 : i32
    %c0_i32_1 = arith.constant 0 : i32
    return %c0_i32, %c0_i32_0 : i32, i32
  }
  func.func @transform_2(%arg0: i32) -> (i32, i32) {
    %c0_i32 = arith.constant 0 : i32
    %c0_i32_0 = arith.constant 0 : i32
    %c0_i32_1 = arith.constant 0 : i32
    return %c0_i32, %c0_i32_0 : i32, i32
  }
  func.func @transform_3(%arg0: i32) -> (i32, i32) {
    %c0_i32 = arith.constant 0 : i32
    %c0_i32_0 = arith.constant 0 : i32
    %c0_i32_1 = arith.constant 0 : i32
    return %c0_i32, %c0_i32_0 : i32, i32
  }
  func.func @transform_4(%arg0: i32) -> (i32, i32, i32) {
    %c0_i32 = arith.constant 0 : i32
    %c0_i32_0 = arith.constant 0 : i32
    %c0_i32_1 = arith.constant 0 : i32
    return %arg0, %c0_i32, %c0_i32_0 : i32, i32, i32
  }
  func.func @transform_5(%arg0: i32) -> (i32, i32, i32) {
    %c0_i32 = arith.constant 0 : i32
    %c0_i32_0 = arith.constant 0 : i32
    %c0_i32_1 = arith.constant 0 : i32
    return %arg0, %c0_i32, %c0_i32_0 : i32, i32, i32
  }
}

module attributes {stable_mosaic.version = 11 : i64} {
  func.func @_conv2_kernel(%arg0: i32, %arg1: memref<1x8x256xbf16, #tpu.memory_space<vmem>>, %arg2: memref<9x8x8xbf16, #tpu.memory_space<vmem>>, %arg3: memref<8x1xf32, #tpu.memory_space<vmem>>, %arg4: memref<8x1xf32, #tpu.memory_space<vmem>>, %arg5: memref<1x8x256xbf16, #tpu.memory_space<vmem>>, %arg6: memref<1x8x1xf32, #tpu.memory_space<vmem>>, %arg7: memref<1x8x1xf32, #tpu.memory_space<vmem>>, %arg8: memref<8x290xbf16, #tpu.memory_space<vmem>>) attributes {dimension_semantics = [#tpu.dimension_semantics<parallel>], iteration_bounds = array<i64: 2>, scalar_prefetch = 0 : i64, scratch_operands = 1 : i64, tpu.core_type = #tpu.core_type<tc>, window_params = [{transform_indices = @transform_0, window_bounds = array<i64: 1, 8, 256>}, {pipeline_mode = #tpu.pipeline_mode<synchronous>, transform_indices = @transform_1, window_bounds = array<i64: 9, 8, 8>}, {pipeline_mode = #tpu.pipeline_mode<synchronous>, transform_indices = @transform_2, window_bounds = array<i64: 8, 1>}, {pipeline_mode = #tpu.pipeline_mode<synchronous>, transform_indices = @transform_3, window_bounds = array<i64: 8, 1>}, {transform_indices = @transform_4, window_bounds = array<i64: 1, 8, 256>}, {transform_indices = @transform_5, window_bounds = array<i64: 1, 8, 1>}, {transform_indices = @transform_6, window_bounds = array<i64: 1, 8, 1>}]} {
    %c0 = arith.constant 0 : index
    %c0_0 = arith.constant 0 : index
    %c0_1 = arith.constant 0 : index
    %0 = vector.load %arg1[%c0, %c0_0, %c0_1] : memref<1x8x256xbf16, #tpu.memory_space<vmem>>, vector<1x8x256xbf16>
    %1 = vector.shape_cast %0 : vector<1x8x256xbf16> to vector<8x256xbf16>
    %2 = arith.extf %1 : vector<8x256xbf16> to vector<8x256xf32>
    %c0_2 = arith.constant 0 : index
    %c0_3 = arith.constant 0 : index
    %3 = vector.load %arg3[%c0_2, %c0_3] : memref<8x1xf32, #tpu.memory_space<vmem>>, vector<8x1xf32>
    %4 = vector.broadcast %3 : vector<8x1xf32> to vector<8x256xf32>
    %5 = arith.mulf %2, %4 : vector<8x256xf32>
    %c0_4 = arith.constant 0 : index
    %c0_5 = arith.constant 0 : index
    %6 = vector.load %arg4[%c0_4, %c0_5] : memref<8x1xf32, #tpu.memory_space<vmem>>, vector<8x1xf32>
    %7 = vector.broadcast %6 : vector<8x1xf32> to vector<8x256xf32>
    %8 = arith.addf %5, %7 : vector<8x256xf32>
    %cst = arith.constant 0.000000e+00 : f32
    %9 = vector.broadcast %cst : f32 to vector<8x256xf32>
    %10 = arith.maximumf %8, %9 : vector<8x256xf32>
    %cst_6 = arith.constant 0.000000e+00 : bf16
    %11 = vector.broadcast %cst_6 : bf16 to vector<8x17xbf16>
    %c0_7 = arith.constant 0 : index
    %c0_8 = arith.constant 0 : index
    %12 = vector.load %arg8[%c0_7, %c0_8] : memref<8x290xbf16, #tpu.memory_space<vmem>>, vector<8x17xbf16>
    tpu.vector_store %arg8[%c0_7, %c0_8], %11 {strides = array<i32>} : memref<8x290xbf16, #tpu.memory_space<vmem>>, vector<8x17xbf16>,
    %cst_9 = arith.constant 0.000000e+00 : bf16
    %13 = vector.broadcast %cst_9 : bf16 to vector<8x17xbf16>
    %c0_10 = arith.constant 0 : index
    %c273 = arith.constant 273 : index
    %14 = vector.load %arg8[%c0_10, %c273] : memref<8x290xbf16, #tpu.memory_space<vmem>>, vector<8x17xbf16>
    tpu.vector_store %arg8[%c0_10, %c273], %13 {strides = array<i32>} : memref<8x290xbf16, #tpu.memory_space<vmem>>, vector<8x17xbf16>,
    %15 = arith.truncf %10 : vector<8x256xf32> to vector<8x256xbf16>
    %c0_11 = arith.constant 0 : index
    %c17 = arith.constant 17 : index
    %16 = vector.load %arg8[%c0_11, %c17] : memref<8x290xbf16, #tpu.memory_space<vmem>>, vector<8x256xbf16>
    tpu.vector_store %arg8[%c0_11, %c17], %15 {strides = array<i32>} : memref<8x290xbf16, #tpu.memory_space<vmem>>, vector<8x256xbf16>,
    %17 = tpu.iota {dimensions = array<i32: 1>} : vector<1x256xi32>
    %c16_i32 = arith.constant 16 : i32
    %c0_i32 = arith.constant 0 : i32
    %18 = arith.cmpi eq, %c16_i32, %c0_i32 : i32
    %c1_i32 = arith.constant 1 : i32
    %19 = arith.select %18, %c1_i32, %c16_i32 : i32
    %20 = vector.broadcast %19 : i32 to vector<1x256xi32>
    %21 = arith.remsi %17, %20 : vector<1x256xi32>
    %c0_i32_12 = arith.constant 0 : i32
    %22 = vector.broadcast %c0_i32_12 : i32 to vector<1x256xi32>
    %23 = arith.cmpi ne, %21, %22 : vector<1x256xi32>
    %c0_i32_13 = arith.constant 0 : i32
    %24 = vector.broadcast %c0_i32_13 : i32 to vector<1x256xi32>
    %25 = arith.cmpi slt, %21, %24 : vector<1x256xi32>
    %c0_i32_14 = arith.constant 0 : i32
    %26 = arith.cmpi slt, %19, %c0_i32_14 : i32
    %27 = vector.broadcast %26 : i1 to vector<1x256xi1>
    %28 = vector.broadcast %27 : vector<1x256xi1> to vector<1x256xi1>
    %29 = arith.xori %25, %28 : vector<1x256xi1>
    %30 = arith.andi %29, %23 : vector<1x256xi1>
    %31 = vector.broadcast %19 : i32 to vector<1x256xi32>
    %32 = arith.addi %21, %31 : vector<1x256xi32>
    %33 = arith.select %30, %32, %21 : vector<1x256xi1>, vector<1x256xi32>
    %cst_15 = arith.constant 0.000000e+00 : f32
    %34 = vector.broadcast %cst_15 : f32 to vector<8x256xf32>
    %cst_16 = arith.constant 0.000000e+00 : f32
    %35 = vector.broadcast %cst_16 : f32 to vector<8x256xf32>
    %c0_17 = arith.constant 0 : index
    %c0_18 = arith.constant 0 : index
    %c0_19 = arith.constant 0 : index
    %36 = vector.load %arg2[%c0_17, %c0_18, %c0_19] : memref<9x8x8xbf16, #tpu.memory_space<vmem>>, vector<1x8x8xbf16>
    %37 = vector.shape_cast %36 : vector<1x8x8xbf16> to vector<8x8xbf16>
    %c0_20 = arith.constant 0 : index
    %c0_21 = arith.constant 0 : index
    %38 = vector.load %arg8[%c0_20, %c0_21] : memref<8x290xbf16, #tpu.memory_space<vmem>>, vector<8x256xbf16>
    %cst_22 = arith.constant dense<0.000000e+00> : vector<8x256xf32>
    %39 = tpu.matmul %37, %38, %cst_22 {dimension_numbers = #tpu.dot_dimension_numbers<[1], [0], [0], [1], [0, 0, 1, 1], [], []>} : vector<8x8xbf16>, vector<8x256xbf16>, vector<8x256xf32> -> vector<8x256xf32>
    %40 = arith.addf %35, %39 : vector<8x256xf32>
    %c3 = arith.constant 3 : index
    %c0_23 = arith.constant 0 : index
    %c0_24 = arith.constant 0 : index
    %41 = vector.load %arg2[%c3, %c0_23, %c0_24] : memref<9x8x8xbf16, #tpu.memory_space<vmem>>, vector<1x8x8xbf16>
    %42 = vector.shape_cast %41 : vector<1x8x8xbf16> to vector<8x8xbf16>
    %c0_25 = arith.constant 0 : index
    %c16 = arith.constant 16 : index
    %43 = vector.load %arg8[%c0_25, %c16] : memref<8x290xbf16, #tpu.memory_space<vmem>>, vector<8x256xbf16>
    %cst_26 = arith.constant dense<0.000000e+00> : vector<8x256xf32>
    %44 = tpu.matmul %42, %43, %cst_26 {dimension_numbers = #tpu.dot_dimension_numbers<[1], [0], [0], [1], [0, 0, 1, 1], [], []>} : vector<8x8xbf16>, vector<8x256xbf16>, vector<8x256xf32> -> vector<8x256xf32>
    %45 = arith.addf %40, %44 : vector<8x256xf32>
    %c6 = arith.constant 6 : index
    %c0_27 = arith.constant 0 : index
    %c0_28 = arith.constant 0 : index
    %46 = vector.load %arg2[%c6, %c0_27, %c0_28] : memref<9x8x8xbf16, #tpu.memory_space<vmem>>, vector<1x8x8xbf16>
    %47 = vector.shape_cast %46 : vector<1x8x8xbf16> to vector<8x8xbf16>
    %c0_29 = arith.constant 0 : index
    %c32 = arith.constant 32 : index
    %48 = vector.load %arg8[%c0_29, %c32] : memref<8x290xbf16, #tpu.memory_space<vmem>>, vector<8x256xbf16>
    %cst_30 = arith.constant dense<0.000000e+00> : vector<8x256xf32>
    %49 = tpu.matmul %47, %48, %cst_30 {dimension_numbers = #tpu.dot_dimension_numbers<[1], [0], [0], [1], [0, 0, 1, 1], [], []>} : vector<8x8xbf16>, vector<8x256xbf16>, vector<8x256xf32> -> vector<8x256xf32>
    %50 = arith.addf %45, %49 : vector<8x256xf32>
    %c1_i32_31 = arith.constant 1 : i32
    %51 = vector.broadcast %c1_i32_31 : i32 to vector<1x256xi32>
    %52 = arith.cmpi sge, %33, %51 : vector<1x256xi32>
    %cst_32 = arith.constant 0.000000e+00 : f32
    %53 = vector.shape_cast %52 : vector<1x256xi1> to vector<1x256xi1>
    %54 = vector.broadcast %53 : vector<1x256xi1> to vector<8x256xi1>
    %55 = vector.broadcast %cst_32 : f32 to vector<8x256xf32>
    %56 = arith.select %54, %50, %55 : vector<8x256xi1>, vector<8x256xf32>
    %57 = arith.addf %34, %56 : vector<8x256xf32>
    %cst_33 = arith.constant 0.000000e+00 : f32
    %58 = vector.broadcast %cst_33 : f32 to vector<8x256xf32>
    %c1 = arith.constant 1 : index
    %c0_34 = arith.constant 0 : index
    %c0_35 = arith.constant 0 : index
    %59 = vector.load %arg2[%c1, %c0_34, %c0_35] : memref<9x8x8xbf16, #tpu.memory_space<vmem>>, vector<1x8x8xbf16>
    %60 = vector.shape_cast %59 : vector<1x8x8xbf16> to vector<8x8xbf16>
    %c0_36 = arith.constant 0 : index
    %c1_37 = arith.constant 1 : index
    %61 = vector.load %arg8[%c0_36, %c1_37] : memref<8x290xbf16, #tpu.memory_space<vmem>>, vector<8x256xbf16>
    %cst_38 = arith.constant dense<0.000000e+00> : vector<8x256xf32>
    %62 = tpu.matmul %60, %61, %cst_38 {dimension_numbers = #tpu.dot_dimension_numbers<[1], [0], [0], [1], [0, 0, 1, 1], [], []>} : vector<8x8xbf16>, vector<8x256xbf16>, vector<8x256xf32> -> vector<8x256xf32>
    %63 = arith.addf %58, %62 : vector<8x256xf32>
    %c4 = arith.constant 4 : index
    %c0_39 = arith.constant 0 : index
    %c0_40 = arith.constant 0 : index
    %64 = vector.load %arg2[%c4, %c0_39, %c0_40] : memref<9x8x8xbf16, #tpu.memory_space<vmem>>, vector<1x8x8xbf16>
    %65 = vector.shape_cast %64 : vector<1x8x8xbf16> to vector<8x8xbf16>
    %c0_41 = arith.constant 0 : index
    %c17_42 = arith.constant 17 : index
    %66 = vector.load %arg8[%c0_41, %c17_42] : memref<8x290xbf16, #tpu.memory_space<vmem>>, vector<8x256xbf16>
    %cst_43 = arith.constant dense<0.000000e+00> : vector<8x256xf32>
    %67 = tpu.matmul %65, %66, %cst_43 {dimension_numbers = #tpu.dot_dimension_numbers<[1], [0], [0], [1], [0, 0, 1, 1], [], []>} : vector<8x8xbf16>, vector<8x256xbf16>, vector<8x256xf32> -> vector<8x256xf32>
    %68 = arith.addf %63, %67 : vector<8x256xf32>
    %c7 = arith.constant 7 : index
    %c0_44 = arith.constant 0 : index
    %c0_45 = arith.constant 0 : index
    %69 = vector.load %arg2[%c7, %c0_44, %c0_45] : memref<9x8x8xbf16, #tpu.memory_space<vmem>>, vector<1x8x8xbf16>
    %70 = vector.shape_cast %69 : vector<1x8x8xbf16> to vector<8x8xbf16>
    %c0_46 = arith.constant 0 : index
    %c33 = arith.constant 33 : index
    %71 = vector.load %arg8[%c0_46, %c33] : memref<8x290xbf16, #tpu.memory_space<vmem>>, vector<8x256xbf16>
    %cst_47 = arith.constant dense<0.000000e+00> : vector<8x256xf32>
    %72 = tpu.matmul %70, %71, %cst_47 {dimension_numbers = #tpu.dot_dimension_numbers<[1], [0], [0], [1], [0, 0, 1, 1], [], []>} : vector<8x8xbf16>, vector<8x256xbf16>, vector<8x256xf32> -> vector<8x256xf32>
    %73 = arith.addf %68, %72 : vector<8x256xf32>
    %74 = arith.addf %57, %73 : vector<8x256xf32>
    %cst_48 = arith.constant 0.000000e+00 : f32
    %75 = vector.broadcast %cst_48 : f32 to vector<8x256xf32>
    %c2 = arith.constant 2 : index
    %c0_49 = arith.constant 0 : index
    %c0_50 = arith.constant 0 : index
    %76 = vector.load %arg2[%c2, %c0_49, %c0_50] : memref<9x8x8xbf16, #tpu.memory_space<vmem>>, vector<1x8x8xbf16>
    %77 = vector.shape_cast %76 : vector<1x8x8xbf16> to vector<8x8xbf16>
    %c0_51 = arith.constant 0 : index
    %c2_52 = arith.constant 2 : index
    %78 = vector.load %arg8[%c0_51, %c2_52] : memref<8x290xbf16, #tpu.memory_space<vmem>>, vector<8x256xbf16>
    %cst_53 = arith.constant dense<0.000000e+00> : vector<8x256xf32>
    %79 = tpu.matmul %77, %78, %cst_53 {dimension_numbers = #tpu.dot_dimension_numbers<[1], [0], [0], [1], [0, 0, 1, 1], [], []>} : vector<8x8xbf16>, vector<8x256xbf16>, vector<8x256xf32> -> vector<8x256xf32>
    %80 = arith.addf %75, %79 : vector<8x256xf32>
    %c5 = arith.constant 5 : index
    %c0_54 = arith.constant 0 : index
    %c0_55 = arith.constant 0 : index
    %81 = vector.load %arg2[%c5, %c0_54, %c0_55] : memref<9x8x8xbf16, #tpu.memory_space<vmem>>, vector<1x8x8xbf16>
    %82 = vector.shape_cast %81 : vector<1x8x8xbf16> to vector<8x8xbf16>
    %c0_56 = arith.constant 0 : index
    %c18 = arith.constant 18 : index
    %83 = vector.load %arg8[%c0_56, %c18] : memref<8x290xbf16, #tpu.memory_space<vmem>>, vector<8x256xbf16>
    %cst_57 = arith.constant dense<0.000000e+00> : vector<8x256xf32>
    %84 = tpu.matmul %82, %83, %cst_57 {dimension_numbers = #tpu.dot_dimension_numbers<[1], [0], [0], [1], [0, 0, 1, 1], [], []>} : vector<8x8xbf16>, vector<8x256xbf16>, vector<8x256xf32> -> vector<8x256xf32>
    %85 = arith.addf %80, %84 : vector<8x256xf32>
    %c8 = arith.constant 8 : index
    %c0_58 = arith.constant 0 : index
    %c0_59 = arith.constant 0 : index
    %86 = vector.load %arg2[%c8, %c0_58, %c0_59] : memref<9x8x8xbf16, #tpu.memory_space<vmem>>, vector<1x8x8xbf16>
    %87 = vector.shape_cast %86 : vector<1x8x8xbf16> to vector<8x8xbf16>
    %c0_60 = arith.constant 0 : index
    %c34 = arith.constant 34 : index
    %88 = vector.load %arg8[%c0_60, %c34] : memref<8x290xbf16, #tpu.memory_space<vmem>>, vector<8x256xbf16>
    %cst_61 = arith.constant dense<0.000000e+00> : vector<8x256xf32>
    %89 = tpu.matmul %87, %88, %cst_61 {dimension_numbers = #tpu.dot_dimension_numbers<[1], [0], [0], [1], [0, 0, 1, 1], [], []>} : vector<8x8xbf16>, vector<8x256xbf16>, vector<8x256xf32> -> vector<8x256xf32>
    %90 = arith.addf %85, %89 : vector<8x256xf32>
    %c14_i32 = arith.constant 14 : i32
    %91 = vector.broadcast %c14_i32 : i32 to vector<1x256xi32>
    %92 = arith.cmpi sle, %33, %91 : vector<1x256xi32>
    %cst_62 = arith.constant 0.000000e+00 : f32
    %93 = vector.shape_cast %92 : vector<1x256xi1> to vector<1x256xi1>
    %94 = vector.broadcast %93 : vector<1x256xi1> to vector<8x256xi1>
    %95 = vector.broadcast %cst_62 : f32 to vector<8x256xf32>
    %96 = arith.select %94, %90, %95 : vector<8x256xi1>, vector<8x256xf32>
    %97 = arith.addf %74, %96 : vector<8x256xf32>
    %98 = arith.truncf %97 : vector<8x256xf32> to vector<8x256xbf16>
    %c0_63 = arith.constant 0 : index
    %c0_64 = arith.constant 0 : index
    %c0_65 = arith.constant 0 : index
    %99 = vector.load %arg5[%c0_63, %c0_64, %c0_65] : memref<1x8x256xbf16, #tpu.memory_space<vmem>>, vector<1x8x256xbf16>
    %100 = vector.shape_cast %99 : vector<1x8x256xbf16> to vector<8x256xbf16>
    %101 = vector.shape_cast %98 : vector<8x256xbf16> to vector<1x8x256xbf16>
    tpu.vector_store %arg5[%c0_63, %c0_64, %c0_65], %101 {strides = array<i32>} : memref<1x8x256xbf16, #tpu.memory_space<vmem>>, vector<1x8x256xbf16>,
    %cst_66 = arith.constant dense<0.000000e+00> : vector<8xf32>
    %102 = vector.multi_reduction <add>, %97, %cst_66 [1] : vector<8x256xf32> to vector<8xf32>
    %103 = vector.shape_cast %102 : vector<8xf32> to vector<8x1xf32>
    %c0_67 = arith.constant 0 : index
    %c0_68 = arith.constant 0 : index
    %c0_69 = arith.constant 0 : index
    %104 = vector.load %arg6[%c0_67, %c0_68, %c0_69] : memref<1x8x1xf32, #tpu.memory_space<vmem>>, vector<1x8x1xf32>
    %105 = vector.shape_cast %104 : vector<1x8x1xf32> to vector<8x1xf32>
    %106 = vector.shape_cast %103 : vector<8x1xf32> to vector<1x8x1xf32>
    tpu.vector_store %arg6[%c0_67, %c0_68, %c0_69], %106 {strides = array<i32>} : memref<1x8x1xf32, #tpu.memory_space<vmem>>, vector<1x8x1xf32>,
    %107 = arith.mulf %97, %97 : vector<8x256xf32>
    %cst_70 = arith.constant dense<0.000000e+00> : vector<8xf32>
    %108 = vector.multi_reduction <add>, %107, %cst_70 [1] : vector<8x256xf32> to vector<8xf32>
    %109 = vector.shape_cast %108 : vector<8xf32> to vector<8x1xf32>
    %c0_71 = arith.constant 0 : index
    %c0_72 = arith.constant 0 : index
    %c0_73 = arith.constant 0 : index
    %110 = vector.load %arg7[%c0_71, %c0_72, %c0_73] : memref<1x8x1xf32, #tpu.memory_space<vmem>>, vector<1x8x1xf32>
    %111 = vector.shape_cast %110 : vector<1x8x1xf32> to vector<8x1xf32>
    %112 = vector.shape_cast %109 : vector<8x1xf32> to vector<1x8x1xf32>
    tpu.vector_store %arg7[%c0_71, %c0_72, %c0_73], %112 {strides = array<i32>} : memref<1x8x1xf32, #tpu.memory_space<vmem>>, vector<1x8x1xf32>,
    return
  }
  func.func @transform_0(%arg0: i32) -> (i32, i32, i32) {
    %c0_i32 = arith.constant 0 : i32
    %c0_i32_0 = arith.constant 0 : i32
    %c0_i32_1 = arith.constant 0 : i32
    return %arg0, %c0_i32, %c0_i32_0 : i32, i32, i32
  }
  func.func @transform_1(%arg0: i32) -> (i32, i32, i32) {
    %c0_i32 = arith.constant 0 : i32
    %c0_i32_0 = arith.constant 0 : i32
    %c0_i32_1 = arith.constant 0 : i32
    %c0_i32_2 = arith.constant 0 : i32
    return %c0_i32, %c0_i32_0, %c0_i32_1 : i32, i32, i32
  }
  func.func @transform_2(%arg0: i32) -> (i32, i32) {
    %c0_i32 = arith.constant 0 : i32
    %c0_i32_0 = arith.constant 0 : i32
    %c0_i32_1 = arith.constant 0 : i32
    return %c0_i32, %c0_i32_0 : i32, i32
  }
  func.func @transform_3(%arg0: i32) -> (i32, i32) {
    %c0_i32 = arith.constant 0 : i32
    %c0_i32_0 = arith.constant 0 : i32
    %c0_i32_1 = arith.constant 0 : i32
    return %c0_i32, %c0_i32_0 : i32, i32
  }
  func.func @transform_4(%arg0: i32) -> (i32, i32, i32) {
    %c0_i32 = arith.constant 0 : i32
    %c0_i32_0 = arith.constant 0 : i32
    %c0_i32_1 = arith.constant 0 : i32
    return %arg0, %c0_i32, %c0_i32_0 : i32, i32, i32
  }
  func.func @transform_5(%arg0: i32) -> (i32, i32, i32) {
    %c0_i32 = arith.constant 0 : i32
    %c0_i32_0 = arith.constant 0 : i32
    %c0_i32_1 = arith.constant 0 : i32
    return %arg0, %c0_i32, %c0_i32_0 : i32, i32, i32
  }
  func.func @transform_6(%arg0: i32) -> (i32, i32, i32) {
    %c0_i32 = arith.constant 0 : i32
    %c0_i32_0 = arith.constant 0 : i32
    %c0_i32_1 = arith.constant 0 : i32
    return %arg0, %c0_i32, %c0_i32_0 : i32, i32, i32
  }
}

module attributes {stable_mosaic.version = 11 : i64} {
  func.func @_final_kernel(%arg0: i32, %arg1: memref<1x8x256xbf16, #tpu.memory_space<vmem>>, %arg2: memref<1x32x256xf32, #tpu.memory_space<vmem>>, %arg3: memref<32x8xbf16, #tpu.memory_space<vmem>>, %arg4: memref<8x1xf32, #tpu.memory_space<vmem>>, %arg5: memref<8x1xf32, #tpu.memory_space<vmem>>, %arg6: memref<32x1xf32, #tpu.memory_space<vmem>>, %arg7: memref<32x1xf32, #tpu.memory_space<vmem>>, %arg8: memref<1x32x256xf32, #tpu.memory_space<vmem>>) attributes {dimension_semantics = [#tpu.dimension_semantics<parallel>], iteration_bounds = array<i64: 2>, scalar_prefetch = 0 : i64, scratch_operands = 0 : i64, tpu.core_type = #tpu.core_type<tc>, window_params = [{transform_indices = @transform_0, window_bounds = array<i64: 1, 8, 256>}, {transform_indices = @transform_1, window_bounds = array<i64: 1, 32, 256>}, {pipeline_mode = #tpu.pipeline_mode<synchronous>, transform_indices = @transform_2, window_bounds = array<i64: 32, 8>}, {pipeline_mode = #tpu.pipeline_mode<synchronous>, transform_indices = @transform_3, window_bounds = array<i64: 8, 1>}, {pipeline_mode = #tpu.pipeline_mode<synchronous>, transform_indices = @transform_4, window_bounds = array<i64: 8, 1>}, {pipeline_mode = #tpu.pipeline_mode<synchronous>, transform_indices = @transform_5, window_bounds = array<i64: 32, 1>}, {pipeline_mode = #tpu.pipeline_mode<synchronous>, transform_indices = @transform_6, window_bounds = array<i64: 32, 1>}, {transform_indices = @transform_7, window_bounds = array<i64: 1, 32, 256>}]} {
    %c0 = arith.constant 0 : index
    %c0_0 = arith.constant 0 : index
    %c0_1 = arith.constant 0 : index
    %0 = vector.load %arg1[%c0, %c0_0, %c0_1] : memref<1x8x256xbf16, #tpu.memory_space<vmem>>, vector<1x8x256xbf16>
    %1 = vector.shape_cast %0 : vector<1x8x256xbf16> to vector<8x256xbf16>
    %2 = arith.extf %1 : vector<8x256xbf16> to vector<8x256xf32>
    %c0_2 = arith.constant 0 : index
    %c0_3 = arith.constant 0 : index
    %3 = vector.load %arg4[%c0_2, %c0_3] : memref<8x1xf32, #tpu.memory_space<vmem>>, vector<8x1xf32>
    %4 = vector.broadcast %3 : vector<8x1xf32> to vector<8x256xf32>
    %5 = arith.mulf %2, %4 : vector<8x256xf32>
    %c0_4 = arith.constant 0 : index
    %c0_5 = arith.constant 0 : index
    %6 = vector.load %arg5[%c0_4, %c0_5] : memref<8x1xf32, #tpu.memory_space<vmem>>, vector<8x1xf32>
    %7 = vector.broadcast %6 : vector<8x1xf32> to vector<8x256xf32>
    %8 = arith.addf %5, %7 : vector<8x256xf32>
    %cst = arith.constant 0.000000e+00 : f32
    %9 = vector.broadcast %cst : f32 to vector<8x256xf32>
    %10 = arith.maximumf %8, %9 : vector<8x256xf32>
    %c0_6 = arith.constant 0 : index
    %c0_7 = arith.constant 0 : index
    %11 = vector.load %arg3[%c0_6, %c0_7] : memref<32x8xbf16, #tpu.memory_space<vmem>>, vector<32x8xbf16>
    %12 = arith.truncf %10 : vector<8x256xf32> to vector<8x256xbf16>
    %cst_8 = arith.constant dense<0.000000e+00> : vector<32x256xf32>
    %13 = tpu.matmul %11, %12, %cst_8 {dimension_numbers = #tpu.dot_dimension_numbers<[1], [0], [0], [1], [0, 0, 1, 1], [], []>} : vector<32x8xbf16>, vector<8x256xbf16>, vector<32x256xf32> -> vector<32x256xf32>
    %c0_9 = arith.constant 0 : index
    %c0_10 = arith.constant 0 : index
    %14 = vector.load %arg6[%c0_9, %c0_10] : memref<32x1xf32, #tpu.memory_space<vmem>>, vector<32x1xf32>
    %15 = vector.broadcast %14 : vector<32x1xf32> to vector<32x256xf32>
    %16 = arith.mulf %13, %15 : vector<32x256xf32>
    %c0_11 = arith.constant 0 : index
    %c0_12 = arith.constant 0 : index
    %17 = vector.load %arg7[%c0_11, %c0_12] : memref<32x1xf32, #tpu.memory_space<vmem>>, vector<32x1xf32>
    %18 = vector.broadcast %17 : vector<32x1xf32> to vector<32x256xf32>
    %19 = arith.addf %16, %18 : vector<32x256xf32>
    %c0_13 = arith.constant 0 : index
    %c0_14 = arith.constant 0 : index
    %c0_15 = arith.constant 0 : index
    %20 = vector.load %arg2[%c0_13, %c0_14, %c0_15] : memref<1x32x256xf32, #tpu.memory_space<vmem>>, vector<1x32x256xf32>
    %21 = vector.shape_cast %20 : vector<1x32x256xf32> to vector<32x256xf32>
    %22 = arith.addf %19, %21 : vector<32x256xf32>
    %cst_16 = arith.constant 0.000000e+00 : f32
    %23 = vector.broadcast %cst_16 : f32 to vector<32x256xf32>
    %24 = arith.maximumf %22, %23 : vector<32x256xf32>
    %c0_17 = arith.constant 0 : index
    %c0_18 = arith.constant 0 : index
    %c0_19 = arith.constant 0 : index
    %25 = vector.load %arg8[%c0_17, %c0_18, %c0_19] : memref<1x32x256xf32, #tpu.memory_space<vmem>>, vector<1x32x256xf32>
    %26 = vector.shape_cast %25 : vector<1x32x256xf32> to vector<32x256xf32>
    %27 = vector.shape_cast %24 : vector<32x256xf32> to vector<1x32x256xf32>
    tpu.vector_store %arg8[%c0_17, %c0_18, %c0_19], %27 {strides = array<i32>} : memref<1x32x256xf32, #tpu.memory_space<vmem>>, vector<1x32x256xf32>,
    return
  }
  func.func @transform_0(%arg0: i32) -> (i32, i32, i32) {
    %c0_i32 = arith.constant 0 : i32
    %c0_i32_0 = arith.constant 0 : i32
    %c0_i32_1 = arith.constant 0 : i32
    return %arg0, %c0_i32, %c0_i32_0 : i32, i32, i32
  }
  func.func @transform_1(%arg0: i32) -> (i32, i32, i32) {
    %c0_i32 = arith.constant 0 : i32
    %c0_i32_0 = arith.constant 0 : i32
    %c0_i32_1 = arith.constant 0 : i32
    return %arg0, %c0_i32, %c0_i32_0 : i32, i32, i32
  }
  func.func @transform_2(%arg0: i32) -> (i32, i32) {
    %c0_i32 = arith.constant 0 : i32
    %c0_i32_0 = arith.constant 0 : i32
    %c0_i32_1 = arith.constant 0 : i32
    return %c0_i32, %c0_i32_0 : i32, i32
  }
  func.func @transform_3(%arg0: i32) -> (i32, i32) {
    %c0_i32 = arith.constant 0 : i32
    %c0_i32_0 = arith.constant 0 : i32
    %c0_i32_1 = arith.constant 0 : i32
    return %c0_i32, %c0_i32_0 : i32, i32
  }
  func.func @transform_4(%arg0: i32) -> (i32, i32) {
    %c0_i32 = arith.constant 0 : i32
    %c0_i32_0 = arith.constant 0 : i32
    %c0_i32_1 = arith.constant 0 : i32
    return %c0_i32, %c0_i32_0 : i32, i32
  }
  func.func @transform_5(%arg0: i32) -> (i32, i32) {
    %c0_i32 = arith.constant 0 : i32
    %c0_i32_0 = arith.constant 0 : i32
    %c0_i32_1 = arith.constant 0 : i32
    return %c0_i32, %c0_i32_0 : i32, i32
  }
  func.func @transform_6(%arg0: i32) -> (i32, i32) {
    %c0_i32 = arith.constant 0 : i32
    %c0_i32_0 = arith.constant 0 : i32
    %c0_i32_1 = arith.constant 0 : i32
    return %c0_i32, %c0_i32_0 : i32, i32
  }
  func.func @transform_7(%arg0: i32) -> (i32, i32, i32) {
    %c0_i32 = arith.constant 0 : i32
    %c0_i32_0 = arith.constant 0 : i32
    %c0_i32_1 = arith.constant 0 : i32
    return %arg0, %c0_i32, %c0_i32_0 : i32, i32, i32
  }
}

</mosaic_0001>

<llo_original>
// kernel: bottleneck_forward.6
$region0: #{bottleneck_forward.6}
  #allocation0 [shape = 'u32[]', space=smem, size = 0x4, offset = 0x4, fixed_abs, tag = 'smem constant byte address 0x4 - core index']
  #allocation1 [shape = 'u32[144,128]{1,0:T(1,128)}', space=vmem, size = 0x12000, scoped, tag = 'internal scratch']
  %s0 = inlined_call_operand.hbm [shape: bf16[2,8,256], index: 0, kind: input, shape index: {}]
  %s1 = inlined_call_operand.hbm [shape: bf16[32,8], index: 1, kind: input, shape index: {}]
  %s2 = inlined_call_operand.hbm [shape: f32[8,1], index: 2, kind: input, shape index: {}]
  %s3 = inlined_call_operand.hbm [shape: f32[8,1], index: 3, kind: input, shape index: {}]
  %s4 = inlined_call_operand.hbm [shape: f32[2,32,1], index: 4, kind: output, shape index: {0}]
  %s5 = inlined_call_operand.hbm [shape: f32[2,32,1], index: 5, kind: output, shape index: {1}]
  %6 = xla_tuple %s4, %s5
  %s7 = sld [smem:[#allocation0]]
  $region73: #{bottleneck_forward.6} parent=0
    _
  %s9 = ssub.s32 1, %s7
  %s10 = scalar_select 0, %s9, %s7
  $region1: #{bottleneck_forward.6} parent=0
    #allocation2 [shape = 'u8[8192]{0}', space=vmem, size = 0x2000, scoped, tag = 'input window, operand 0']
    #allocation3 [shape = 's32[2]{0}', space=sflag, size = 0x8, scoped, tag = 'scoped memory for bottleneck_forward.6']
    #allocation4 [shape = 's32[2]{0}', space=sflag, size = 0x8, scoped, tag = 'scoped memory for bottleneck_forward.6']
    #allocation5 [shape = 'u8[8192]{0}', space=vmem, size = 0x2000, scoped, tag = 'input window, operand 1, single buffered']
    #allocation6 [shape = 's32[1]{0}', space=sflag, size = 0x4, scoped, tag = 'scoped memory for bottleneck_forward.6']
    #allocation7 [shape = 'u8[4096]{0}', space=vmem, size = 0x1000, scoped, tag = 'input window, operand 2, single buffered']
    #allocation8 [shape = 'u8[4096]{0}', space=vmem, size = 0x1000, scoped, tag = 'input window, operand 3, single buffered']
    #allocation9 [shape = 's32[1]{0}', space=sflag, size = 0x4, scoped, tag = 'scoped memory for bottleneck_forward.6']
    #allocation10 [shape = 'u8[32768]{0}', space=vmem, size = 0x8000, scoped, tag = 'output window, operand 0']
    #allocation11 [shape = 'u8[32768]{0}', space=vmem, size = 0x8000, scoped, tag = 'output window, operand 1']
    #allocation12 [shape = 's32[2]{0}', space=sflag, size = 0x8, scoped, tag = 'scoped memory for bottleneck_forward.6']
    %11 = vsyncpa [#allocation3], 0
    %s12 = scalar_lea.sflag [#allocation3], 1
    %13 = vsyncpa %s12, 0
    %14 = vsyncpa [#allocation6], 0
    %15 = vsyncpa [#allocation9], 0
    %16 = vsyncpa [#allocation4], 0
    %s17 = scalar_lea.sflag [#allocation4], 1
    %18 = vsyncpa %s17, 0
    %19 = vsyncpa [#allocation12], 0
    %s20 = scalar_lea.sflag [#allocation12], 1
    %21 = vsyncpa %s20, 0
    loop: start=0, step=1, limit=4
    $region2: #{bottleneck_forward.6} parent=1 // loop_pre_header
      _
    $region3: #{bottleneck_forward.6} parent=1 // loop_header
      %s23 = sphi 0, %s27
      %p24 = scmp.ge.s32.totalorder %s23, 4
      %s33 = sphi 0, %s35
      %s36 = sphi 0, %s33
      %s37 = sphi 0, %s36
      %s53 = sphi 0, %s37
      %s57 = sphi 0, %s57
      %s59 = sphi 0, %s57
      %s60 = sphi 0, %s59
      %s74 = sphi 0, %s60
      %s78 = sphi 0, %s78
      %s80 = sphi 0, %s78
      %s81 = sphi 0, %s80
      %s95 = sphi 0, %s81
      %s99 = sphi 0, %s99
      %s101 = sphi 0, %s99
      %s102 = sphi 0, %s101
      %s116 = sphi 0, %s102
      %s122 = sphi 0, %s124
      %s125 = sphi 0, %s122
      %s126 = sphi 0, %s125
      %s142 = sphi 0, %s126
      %s148 = sphi 0, %s150
      %s151 = sphi 0, %s148
      %s152 = sphi 0, %s151
      %s168 = sphi 0, %s152
    $region4: #{bottleneck_forward.6} parent=1 // loop_header_branch
      %26 = sbr.rel (%p24) target = $region8
    $region5: #{bottleneck_forward.6} parent=1 // loop_body
      %s28 = ssub.s32 %s23, 1
      %s29 = ssub.s32 %s23, 2
      %s30 = sadd.s32 %s23, 1
      %s31 = ssub.s32 %s23, %s30
      %p32 = scmp.eq.s32.totalorder %s31, 0
      %s34 = sadd.s32 %s33, 1
      %s35 = scalar_select %p32, %s33, %s34
      %p38 = pneg %p32
      %p39 = scmp.eq.s32.totalorder %s23, 1
      %p40 = por %p38, %p39
      %p41 = scmp.ne.s32.totalorder %s33, %s36
      %p42 = scmp.eq.s32.totalorder %s23, 0
      %p43 = por %p41, %p42
      %p44 = scmp.ne.s32.totalorder %s33, %s36
      %p45 = scmp.eq.s32.totalorder %s28, 1
      %p46 = por %p44, %p45
      %p47 = scmp.ne.s32.totalorder %s36, %s37
      %p48 = scmp.eq.s32.totalorder %s28, 0
      %p49 = por %p47, %p48
      %p50 = scmp.ne.s32.totalorder %s36, %s37
      %p51 = scmp.eq.s32.totalorder %s29, 1
      %p52 = por %p50, %p51
      %p54 = scmp.ne.s32.totalorder %s37, %s53
      %p55 = scmp.eq.s32.totalorder %s29, 0
      %p56 = por %p54, %p55
      %s58 = sadd.s32 %s57, 1
      %p61 = scmp.eq.s32.totalorder %s23, 1
      %p62 = scmp.ne.s32.totalorder %s57, %s59
      %p63 = scmp.eq.s32.totalorder %s23, 0
      %p64 = por %p62, %p63
      %p65 = scmp.ne.s32.totalorder %s57, %s59
      %p66 = scmp.eq.s32.totalorder %s28, 1
      %p67 = por %p65, %p66
      %p68 = scmp.ne.s32.totalorder %s59, %s60
      %p69 = scmp.eq.s32.totalorder %s28, 0
      %p70 = por %p68, %p69
      %p71 = scmp.ne.s32.totalorder %s59, %s60
      %p72 = scmp.eq.s32.totalorder %s29, 1
      %p73 = por %p71, %p72
      %p75 = scmp.ne.s32.totalorder %s60, %s74
      %p76 = scmp.eq.s32.totalorder %s29, 0
      %p77 = por %p75, %p76
      %s79 = sadd.s32 %s78, 1
      %p82 = scmp.eq.s32.totalorder %s23, 1
      %p83 = scmp.ne.s32.totalorder %s78, %s80
      %p84 = scmp.eq.s32.totalorder %s23, 0
      %p85 = por %p83, %p84
      %p86 = scmp.ne.s32.totalorder %s78, %s80
      %p87 = scmp.eq.s32.totalorder %s28, 1
      %p88 = por %p86, %p87
      %p89 = scmp.ne.s32.totalorder %s80, %s81
      %p90 = scmp.eq.s32.totalorder %s28, 0
      %p91 = por %p89, %p90
      %p92 = scmp.ne.s32.totalorder %s80, %s81
      %p93 = scmp.eq.s32.totalorder %s29, 1
      %p94 = por %p92, %p93
      %p96 = scmp.ne.s32.totalorder %s81, %s95
      %p97 = scmp.eq.s32.totalorder %s29, 0
      %p98 = por %p96, %p97
      %s100 = sadd.s32 %s99, 1
      %p103 = scmp.eq.s32.totalorder %s23, 1
      %p104 = scmp.ne.s32.totalorder %s99, %s101
      %p105 = scmp.eq.s32.totalorder %s23, 0
      %p106 = por %p104, %p105
      %p107 = scmp.ne.s32.totalorder %s99, %s101
      %p108 = scmp.eq.s32.totalorder %s28, 1
      %p109 = por %p107, %p108
      %p110 = scmp.ne.s32.totalorder %s101, %s102
      %p111 = scmp.eq.s32.totalorder %s28, 0
      %p112 = por %p110, %p111
      %p113 = scmp.ne.s32.totalorder %s101, %s102
      %p114 = scmp.eq.s32.totalorder %s29, 1
      %p115 = por %p113, %p114
      %p117 = scmp.ne.s32.totalorder %s102, %s116
      %p118 = scmp.eq.s32.totalorder %s29, 0
      %p119 = por %p117, %p118
      %s120 = ssub.s32 %s23, %s30
      %p121 = scmp.eq.s32.totalorder %s120, 0
      %s123 = sadd.s32 %s122, 1
      %s124 = scalar_select %p121, %s122, %s123
      %p127 = pneg %p121
      %p128 = scmp.eq.s32.totalorder %s23, 1
      %p129 = por %p127, %p128
      %p130 = scmp.ne.s32.totalorder %s122, %s125
      %p131 = scmp.eq.s32.totalorder %s23, 0
      %p132 = por %p130, %p131
      %p133 = scmp.ne.s32.totalorder %s122, %s125
      %p134 = scmp.eq.s32.totalorder %s28, 1
      %p135 = por %p133, %p134
      %p136 = scmp.ne.s32.totalorder %s125, %s126
      %p137 = scmp.eq.s32.totalorder %s28, 0
      %p138 = por %p136, %p137
      %p139 = scmp.ne.s32.totalorder %s125, %s126
      %p140 = scmp.eq.s32.totalorder %s29, 1
      %p141 = por %p139, %p140
      %p143 = scmp.ne.s32.totalorder %s126, %s142
      %p144 = scmp.eq.s32.totalorder %s29, 0
      %p145 = por %p143, %p144
      %s146 = ssub.s32 %s23, %s30
      %p147 = scmp.eq.s32.totalorder %s146, 0
      %s149 = sadd.s32 %s148, 1
      %s150 = scalar_select %p147, %s148, %s149
      %p153 = pneg %p147
      %p154 = scmp.eq.s32.totalorder %s23, 1
      %p155 = por %p153, %p154
      %p156 = scmp.ne.s32.totalorder %s148, %s151
      %p157 = scmp.eq.s32.totalorder %s23, 0
      %p158 = por %p156, %p157
      %p159 = scmp.ne.s32.totalorder %s148, %s151
      %p160 = scmp.eq.s32.totalorder %s28, 1
      %p161 = por %p159, %p160
      %p162 = scmp.ne.s32.totalorder %s151, %s152
      %p163 = scmp.eq.s32.totalorder %s28, 0
      %p164 = por %p162, %p163
      %p165 = scmp.ne.s32.totalorder %s151, %s152
      %p166 = scmp.eq.s32.totalorder %s29, 1
      %p167 = por %p165, %p166
      %p169 = scmp.ne.s32.totalorder %s152, %s168
      %p170 = scmp.eq.s32.totalorder %s29, 0
      %p171 = por %p169, %p170
      %p172 = scmp.le.s32.totalorder 1, %s23
      %p173 = scmp.lt.s32.totalorder %s23, 3
      %p174 = pnand %p172, %p173
      %p175 = pneg %p174
      // Predicated region
      $region9: #{bottleneck_forward.6} parent=5 // pred_check
        _
      $region10: #{bottleneck_forward.6} parent=5 // pred_check_branch
        %177 = sbr.rel (%p174) target = $region12
      $region11: #{bottleneck_forward.6} parent=5 // pred_region
        %s178 = ssub.s32 %s23, 1
        // Predicated region
        $region13: #{bottleneck_forward.6} parent=11 // pred_check
          %p179 = pneg %p70
        $region14: #{bottleneck_forward.6} parent=11 // pred_check_branch
          %181 = sbr.rel (%p179) target = $region16
        $region15: #{bottleneck_forward.6} parent=11 // pred_region
          %s183 = ssub.s32 256, 256
          %184 = vsyncadd [#allocation6], %s183
          %s185 = sshll.u32 [#allocation5], 4
          %s186 = int_to_ptr.vmem [resolvable:$true] %s185
          %191 = dma.hbm_to_vmem [thread:$0]  %s1, 256, %s186, [#allocation6], 64, 64, 4
        $region16: #{bottleneck_forward.6} parent=11 // pred_fallthru
          _
        // Predicated region
        $region17: #{bottleneck_forward.6} parent=11 // pred_check
          %p192 = pneg %p91
        $region18: #{bottleneck_forward.6} parent=11 // pred_check_branch
          %194 = sbr.rel (%p192) target = $region20
        $region19: #{bottleneck_forward.6} parent=11 // pred_region
          %s196 = ssub.s32 128, 128
          %197 = vsyncadd [#allocation6], %s196
          %s199 = sshll.u32 [#allocation7], 4
          %s200 = int_to_ptr.vmem [resolvable:$true] %s199
          %202 = dma.hbm_to_vmem [thread:$0]  %s2, 128, %s200, [#allocation6]
        $region20: #{bottleneck_forward.6} parent=11 // pred_fallthru
          _
        // Predicated region
        $region21: #{bottleneck_forward.6} parent=11 // pred_check
          %p203 = pneg %p112
        $region22: #{bottleneck_forward.6} parent=11 // pred_check_branch
          %205 = sbr.rel (%p203) target = $region24
        $region23: #{bottleneck_forward.6} parent=11 // pred_region
          %s207 = ssub.s32 128, 128
          %208 = vsyncadd [#allocation9], %s207
          %s210 = sshll.u32 [#allocation8], 4
          %s211 = int_to_ptr.vmem [resolvable:$true] %s210
          %213 = dma.hbm_to_vmem [thread:$0]  %s3, 128, %s211, [#allocation9]
        $region24: #{bottleneck_forward.6} parent=11 // pred_fallthru
          _
      $region12: #{bottleneck_forward.6} parent=5 // pred_fallthru
        _
      %p214 = scmp.lt.s32.totalorder %s23, 2
      // Predicated region
      $region25: #{bottleneck_forward.6} parent=5 // pred_check
        %p215 = pneg %p214
      $region26: #{bottleneck_forward.6} parent=5 // pred_check_branch
        %217 = sbr.rel (%p215) target = $region28
      $region27: #{bottleneck_forward.6} parent=5 // pred_region
        // Predicated region
        $region29: #{bottleneck_forward.6} parent=27 // pred_check
          %p218 = pneg %p43
        $region30: #{bottleneck_forward.6} parent=27 // pred_check_branch
          %220 = sbr.rel (%p218) target = $region32
        $region31: #{bottleneck_forward.6} parent=27 // pred_region
          %s221 = sand.u32 %s33, 1
          %s222 = scalar_lea.sflag [#allocation3], %s221
          %s223 = sand.u32 %s33, 1
          %s224 = smul.addr %s223, 8
          %s225 = scalar_lea.vmem [#allocation2], %s224
          %s227 = ssub.s32 128, 128
          %228 = vsyncadd %s222, %s227
          %s229 = smul.addr %s23, 2
          %s230 = smul.addr %s229, 64
          %s231 = scalar_lea.hbm %s0, %s230
          %s233 = sshll.u32 %s225, 4
          %s234 = int_to_ptr.vmem [resolvable:$true] %s233
          %236 = dma.hbm_to_vmem [thread:$0]  %s231, 128, %s234, %s222
        $region32: #{bottleneck_forward.6} parent=27 // pred_fallthru
          _
      $region28: #{bottleneck_forward.6} parent=5 // pred_fallthru
        _
      %p237 = scmp.le.s32.totalorder 1, %s23
      %p238 = scmp.lt.s32.totalorder %s23, 3
      %p239 = pnand %p237, %p238
      %p240 = pneg %p239
      // Predicated region
      $region33: #{bottleneck_forward.6} parent=5 // pred_check
        _
      $region34: #{bottleneck_forward.6} parent=5 // pred_check_branch
        %242 = sbr.rel (%p239) target = $region36
      $region35: #{bottleneck_forward.6} parent=5 // pred_region
        %s243 = ssub.s32 %s23, 1
        %s244 = sand.u32 %s36, 1
        %s245 = scalar_lea.sflag [#allocation3], %s244
        %s246 = sand.u32 %s36, 1
        %s247 = smul.addr %s246, 8
        %s248 = scalar_lea.vmem [#allocation2], %s247
        // Predicated region
        $region37: #{bottleneck_forward.6} parent=35 // pred_check
          %p249 = pneg %p49
        $region38: #{bottleneck_forward.6} parent=35 // pred_check_branch
          %251 = sbr.rel (%p249) target = $region40
        $region39: #{bottleneck_forward.6} parent=35 // pred_region
          %252 = dma.done %s245, 128
        $region40: #{bottleneck_forward.6} parent=35 // pred_fallthru
          _
        // Predicated region
        $region41: #{bottleneck_forward.6} parent=35 // pred_check
          %p253 = pneg %p70
        $region42: #{bottleneck_forward.6} parent=35 // pred_check_branch
          %255 = sbr.rel (%p253) target = $region44
        $region43: #{bottleneck_forward.6} parent=35 // pred_region
          %256 = dma.done [#allocation6], 256
        $region44: #{bottleneck_forward.6} parent=35 // pred_fallthru
          _
        // Predicated region
        $region45: #{bottleneck_forward.6} parent=35 // pred_check
          %p257 = pneg %p91
        $region46: #{bottleneck_forward.6} parent=35 // pred_check_branch
          %259 = sbr.rel (%p257) target = $region48
        $region47: #{bottleneck_forward.6} parent=35 // pred_region
          %260 = dma.done [#allocation6], 128
        $region48: #{bottleneck_forward.6} parent=35 // pred_fallthru
          _
        // Predicated region
        $region49: #{bottleneck_forward.6} parent=35 // pred_check
          %p261 = pneg %p112
        $region50: #{bottleneck_forward.6} parent=35 // pred_check_branch
          %263 = sbr.rel (%p261) target = $region52
        $region51: #{bottleneck_forward.6} parent=35 // pred_region
          %264 = dma.done [#allocation9], 128
        $region52: #{bottleneck_forward.6} parent=35 // pred_fallthru
          _
        %s265 = sand.u32 %s36, 1
        %s266 = scalar_lea.sflag [#allocation3], %s265
        %s267 = sand.u32 %s36, 1
        %s268 = smul.addr %s267, 8
        %s269 = scalar_lea.vmem [#allocation2], %s268
        %p270 = pneg %p49
        %p271 = pneg %p46
        %p272 = pneg %p70
        %p273 = pneg %p67
        %p274 = pneg %p91
        %p275 = pneg %p88
        %p276 = pneg %p112
        %p277 = pneg %p109
        %p278 = pneg %p138
        %p279 = pneg %p135
        %s280 = sand.u32 %s125, 1
        %s281 = scalar_lea.sflag [#allocation4], %s280
        %s282 = sand.u32 %s125, 1
        %s283 = smul.addr %s282, 32
        %s284 = scalar_lea.vmem [#allocation10], %s283
        %p285 = pneg %p164
        %p286 = pneg %p161
        %s287 = sand.u32 %s151, 1
        %s288 = scalar_lea.sflag [#allocation12], %s287
        %s289 = sand.u32 %s151, 1
        %s290 = smul.addr %s289, 32
        %s291 = scalar_lea.vmem [#allocation11], %s290
        %v293 = vld [vmem:[%s248] sm:$0xff]
        %v294 = vunpack.c.l.bf16 %v293
        %v295 = vunpack.c.h.bf16 %v293
        %v296 = vld [vmem:[#allocation7] sm:$0xff]
        %298 = vset.pattern.permute.xlu0 0
        %299 = vperm.xlu0 %298, %v296
        %v300 = vpop.permute.xlu0 %299
        %v302 = vmul.f32 %v294, %v300
        %v303 = vmul.f32 %v295, %v300
        %v304 = vld [vmem:[#allocation8] sm:$0xff]
        %306 = vset.pattern.permute.xlu0 0
        %307 = vperm.xlu0 %306, %v304
        %v308 = vpop.permute.xlu0 %307
        %v310 = vadd.f32 %v302, %v308
        %v311 = vadd.f32 %v303, %v308
        %v312 = vmax.f32 %v310, 0.0
        %v313 = vmax.f32 %v311, 0.0
        %v314 = vld [vmem:[#allocation5] sm:$0xf]
        %v315 = vld [vmem:[#allocation5 + $0x4] sm:$0xf]
        %v316 = vld [vmem:[#allocation5 + $0x8] sm:$0xf]
        %v317 = vld [vmem:[#allocation5 + $0xc] sm:$0xf]
        %v318 = vpack.c.bf16 %v312, %v312
        %v319 = vpack.c.bf16 %v313, %v313
        %v324 = vunpack.c.l.b16 %v314
        %v325 = vunpack.c.l.b16 %v315
        %v326 = vunpack.c.l.b16 %v316
        %v327 = vunpack.c.l.b16 %v317
        %v328 = vpack.c.b16 %v325, %v324
        %v329 = vpack.c.b16 %v327, %v326
        %vm330 = vcmask 64512
        %v332 = vsel %vm330, %v328, 0
        %v335 = vsel %vm330, %v329, 0
        %vm337 = vcmask 1043456
        %v339 = vsel %vm337, %v318, 0
        %v342 = vsel %vm337, %v319, 0
        %344 = vmatprep.subr.bf16.mxu0 %v342
        %345 = vmatpush1.bf16.msra.mxu0 %v339
        %346 = vmatprep.subr.bf16.mxu0 0
        %347 = vmatpush1.bf16.msra.mxu0 0
        %348 = vmatprep.subr.bf16.mxu0 0
        %349 = vmatpush1.bf16.msra.mxu0 0
        %350 = vmatprep.subr.bf16.mxu0 0
        %351 = vmatpush1.bf16.msra.mxu0 0
        %352 = vmatprep.subr.bf16.mxu0 0
        %353 = vmatpush1.bf16.msra.mxu0 0
        %354 = vmatprep.subr.bf16.mxu0 0
        %355 = vmatpush1.bf16.msra.mxu0 0
        %356 = vmatprep.subr.bf16.mxu0 0
        %357 = vmatpush1.bf16.msra.mxu0 0
        %358 = vmatprep.subr.bf16.mxu0 0
        %359 = vmatpush1.bf16.msra.mxu0 0
        %360 = vmatprep.subr.bf16.mxu0 0
        %361 = vmatpush1.bf16.msra.mxu0 0
        %362 = vmatprep.subr.bf16.mxu0 0
        %363 = vmatpush1.bf16.msra.mxu0 0
        %364 = vmatprep.subr.bf16.mxu0 0
        %365 = vmatpush1.bf16.msra.mxu0 0
        %366 = vmatprep.subr.bf16.mxu0 0
        %367 = vmatpush1.bf16.msra.mxu0 0
        %368 = vmatprep.subr.bf16.mxu0 0
        %369 = vmatpush1.bf16.msra.mxu0 0
        %370 = vmatprep.subr.bf16.mxu0 0
        %371 = vmatpush1.bf16.msra.mxu0 0
        %372 = vmatprep.subr.bf16.mxu0 0
        %373 = vmatpush1.bf16.msra.mxu0 0
        %374 = vmatprep.subr.bf16.mxu0 0
        %375 = vmatpush1.bf16.msra.mxu0 0
        %376 = vmatprep.mubr.bf16.mxu0 0
        %377 = vmatmul.mubr.bf16.gmra.mrb[0].mxu0 %v332
        %v378 = vpop.f32.mrb[0].mxu0
        %v379 = vadd.f32 0.0, %v378
        %v380 = vpop.f32.mrb[0].mxu0
        %v381 = vadd.f32 0.0, %v380
        %v382 = vpop.f32.mrb[0].mxu0
        %v383 = vadd.f32 0.0, %v382
        %v384 = vpop.f32.mrb[0].mxu0
        %v385 = vadd.f32 0.0, %v384
        %386 = vmatprep.mubr.bf16.mxu0 0
        %387 = vmatmul.mubr.bf16.gmra.mrb[0].mxu0 %v335
        %v388 = vpop.f32.mrb[0].mxu0
        %v389 = vadd.f32 0.0, %v388
        %v390 = vpop.f32.mrb[0].mxu0
        %v391 = vadd.f32 0.0, %v390
        %v392 = vpop.f32.mrb[0].mxu0
        %v393 = vadd.f32 0.0, %v392
        %v394 = vpop.f32.mrb[0].mxu0
        %v395 = vadd.f32 0.0, %v394
        %396 = vdwg.mxu0
        %v397 = vadd.f32 %v379, %v381
        %398 = vadd.xlane.f32.xlu0 %v397
        %v399 = vpop.xlane.xlu0 %398
        %v400 = vadd.f32 %v383, %v385
        %401 = vadd.xlane.f32.xlu0 %v400
        %v402 = vpop.xlane.xlu0 %401
        %v403 = vadd.f32 %v389, %v391
        %404 = vadd.xlane.f32.xlu0 %v403
        %v405 = vpop.xlane.xlu0 %404
        %v406 = vadd.f32 %v393, %v395
        %407 = vadd.xlane.f32.xlu0 %v406
        %v408 = vpop.xlane.xlu0 %407
        %vm409 = vcmask 7168
        %410 = vst.msk [vmem:[%s284] sm:$0xff] %vm409, %v399
        %411 = vst.msk [vmem:[%s284 + $0x8] sm:$0xff] %vm409, %v402
        %412 = vst.msk [vmem:[%s284 + $0x10] sm:$0xff] %vm409, %v405
        %413 = vst.msk [vmem:[%s284 + $0x18] sm:$0xff] %vm409, %v408
        %v414 = vmul.f32 %v379, %v379
        %v415 = vmul.f32 %v381, %v381
        %v416 = vmul.f32 %v383, %v383
        %v417 = vmul.f32 %v385, %v385
        %v418 = vmul.f32 %v389, %v389
        %v419 = vmul.f32 %v391, %v391
        %v420 = vmul.f32 %v393, %v393
        %v421 = vmul.f32 %v395, %v395
        %v422 = vadd.f32 %v414, %v415
        %423 = vadd.xlane.f32.xlu0 %v422
        %v424 = vpop.xlane.xlu0 %423
        %v425 = vadd.f32 %v416, %v417
        %426 = vadd.xlane.f32.xlu0 %v425
        %v427 = vpop.xlane.xlu0 %426
        %v428 = vadd.f32 %v418, %v419
        %429 = vadd.xlane.f32.xlu0 %v428
        %v430 = vpop.xlane.xlu0 %429
        %v431 = vadd.f32 %v420, %v421
        %432 = vadd.xlane.f32.xlu0 %v431
        %v433 = vpop.xlane.xlu0 %432
        %434 = vst.msk [vmem:[%s291] sm:$0xff] %vm409, %v424
        %435 = vst.msk [vmem:[%s291 + $0x8] sm:$0xff] %vm409, %v427
        %436 = vst.msk [vmem:[%s291 + $0x10] sm:$0xff] %vm409, %v430
        %437 = vst.msk [vmem:[%s291 + $0x18] sm:$0xff] %vm409, %v433
        %s438 = sand.u32 %s125, 1
        %s439 = scalar_lea.sflag [#allocation4], %s438
        %s440 = sand.u32 %s125, 1
        %s441 = smul.addr %s440, 32
        %s442 = scalar_lea.vmem [#allocation10], %s441
        %s443 = sand.u32 %s151, 1
        %s444 = scalar_lea.sflag [#allocation12], %s443
        %s445 = sand.u32 %s151, 1
        %s446 = smul.addr %s445, 32
        %s447 = scalar_lea.vmem [#allocation11], %s446
        // Predicated region
        $region53: #{bottleneck_forward.6} parent=35 // pred_check
          %p448 = pneg %p135
        $region54: #{bottleneck_forward.6} parent=35 // pred_check_branch
          %450 = sbr.rel (%p448) target = $region56
        $region55: #{bottleneck_forward.6} parent=35 // pred_region
          %s452 = ssub.s32 512, 512
          %453 = vsyncadd %s439, %s452
          %s454 = smul.addr %s28, 4
          %s455 = smul.addr %s454, 128
          %s456 = scalar_lea.hbm %s4, %s455
          %s457 = sshll.u32 %s442, 4
          %s458 = int_to_ptr.vmem [resolvable:$true] %s457
          %463 = dma.vmem_to_hbm [thread:$0]  %s458, 512, %s456, %s439, 128, 128, 8
        $region56: #{bottleneck_forward.6} parent=35 // pred_fallthru
          _
        // Predicated region
        $region57: #{bottleneck_forward.6} parent=35 // pred_check
          %p464 = pneg %p161
        $region58: #{bottleneck_forward.6} parent=35 // pred_check_branch
          %466 = sbr.rel (%p464) target = $region60
        $region59: #{bottleneck_forward.6} parent=35 // pred_region
          %s468 = ssub.s32 512, 512
          %469 = vsyncadd %s444, %s468
          %s470 = smul.addr %s28, 4
          %s471 = smul.addr %s470, 128
          %s472 = scalar_lea.hbm %s5, %s471
          %s473 = sshll.u32 %s447, 4
          %s474 = int_to_ptr.vmem [resolvable:$true] %s473
          %479 = dma.vmem_to_hbm [thread:$0]  %s474, 512, %s472, %s444, 128, 128, 8
        $region60: #{bottleneck_forward.6} parent=35 // pred_fallthru
          _
      $region36: #{bottleneck_forward.6} parent=5 // pred_fallthru
        _
      %p480 = scmp.le.s32.totalorder 2, %s23
      // Predicated region
      $region61: #{bottleneck_forward.6} parent=5 // pred_check
        %p481 = pneg %p480
      $region62: #{bottleneck_forward.6} parent=5 // pred_check_branch
        %483 = sbr.rel (%p481) target = $region64
      $region63: #{bottleneck_forward.6} parent=5 // pred_region
        %s484 = ssub.s32 %s23, 2
        // Predicated region
        $region65: #{bottleneck_forward.6} parent=63 // pred_check
          %p485 = pneg %p141
        $region66: #{bottleneck_forward.6} parent=63 // pred_check_branch
          %487 = sbr.rel (%p485) target = $region68
        $region67: #{bottleneck_forward.6} parent=63 // pred_region
          %s488 = sand.u32 %s126, 1
          %s489 = scalar_lea.sflag [#allocation4], %s488
          %s490 = sand.u32 %s126, 1
          %s491 = smul.addr %s490, 32
          %s492 = scalar_lea.vmem [#allocation10], %s491
          %493 = dma.done %s489, 512
        $region68: #{bottleneck_forward.6} parent=63 // pred_fallthru
          _
        // Predicated region
        $region69: #{bottleneck_forward.6} parent=63 // pred_check
          %p494 = pneg %p167
        $region70: #{bottleneck_forward.6} parent=63 // pred_check_branch
          %496 = sbr.rel (%p494) target = $region72
        $region71: #{bottleneck_forward.6} parent=63 // pred_region
          %s497 = sand.u32 %s152, 1
          %s498 = scalar_lea.sflag [#allocation12], %s497
          %s499 = sand.u32 %s152, 1
          %s500 = smul.addr %s499, 32
          %s501 = scalar_lea.vmem [#allocation11], %s500
          %502 = dma.done %s498, 512
        $region72: #{bottleneck_forward.6} parent=63 // pred_fallthru
          _
      $region64: #{bottleneck_forward.6} parent=5 // pred_fallthru
        _
    $region6: #{bottleneck_forward.6} parent=1 // loop_footer
      %s27 = sadd.s32 1, %s23
    $region7: #{bottleneck_forward.6} parent=1 // loop_footer_branch
      %22 = sbr.rel target = $region3
    $region8: #{bottleneck_forward.6} parent=1 // loop_exit
      _
    %503 = vsyncpa [#allocation3], 1
    %s504 = scalar_lea.sflag [#allocation3], 1
    %505 = vsyncpa %s504, 1
    %506 = vsyncpa [#allocation6], 1
    %507 = vsyncpa [#allocation9], 1
    %508 = vsyncpa [#allocation4], 1
    %s509 = scalar_lea.sflag [#allocation4], 1
    %510 = vsyncpa %s509, 1
    %511 = vsyncpa [#allocation12], 1
    %s512 = scalar_lea.sflag [#allocation12], 1
    %513 = vsyncpa %s512, 1

// kernel: bottleneck_forward.4
$region0: #{bottleneck_forward.4}
  #allocation0 [shape = 'u32[]', space=smem, size = 0x4, offset = 0x4, fixed_abs, tag = 'smem constant byte address 0x4 - core index']
  #allocation1 [shape = 'u32[144,128]{1,0:T(1,128)}', space=vmem, size = 0x12000, scoped, tag = 'internal scratch']
  %s0 = inlined_call_operand.hbm [shape: f32[2,32,256], index: 0, kind: input, shape index: {}]
  %s1 = inlined_call_operand.hbm [shape: bf16[8,32], index: 1, kind: input, shape index: {}]
  %s2 = inlined_call_operand.hbm [shape: bf16[2,8,256], index: 2, kind: output, shape index: {0}]
  %s3 = inlined_call_operand.hbm [shape: f32[2,8,1], index: 3, kind: output, shape index: {1}]
  %s4 = inlined_call_operand.hbm [shape: f32[2,8,1], index: 4, kind: output, shape index: {2}]
  %5 = xla_tuple %s2, %s3, %s4
  %s6 = sld [smem:[#allocation0]]
  $region65: #{bottleneck_forward.4} parent=0
    _
  %s8 = ssub.s32 1, %s6
  %s9 = scalar_select 0, %s8, %s6
  $region1: #{bottleneck_forward.4} parent=0
    #allocation2 [shape = 'u8[65536]{0}', space=vmem, size = 0x10000, scoped, tag = 'input window, operand 0']
    #allocation3 [shape = 's32[2]{0}', space=sflag, size = 0x8, scoped, tag = 'scoped memory for bottleneck_forward.4']
    #allocation4 [shape = 's32[2]{0}', space=sflag, size = 0x8, scoped, tag = 'scoped memory for bottleneck_forward.4']
    #allocation5 [shape = 'u8[2048]{0}', space=vmem, size = 0x800, scoped, tag = 'input window, operand 1, single buffered']
    #allocation6 [shape = 's32[1]{0}', space=sflag, size = 0x4, scoped, tag = 'scoped memory for bottleneck_forward.4']
    #allocation7 [shape = 'u8[8192]{0}', space=vmem, size = 0x2000, scoped, tag = 'output window, operand 0']
    #allocation8 [shape = 'u8[8192]{0}', space=vmem, size = 0x2000, scoped, tag = 'output window, operand 1']
    #allocation9 [shape = 's32[2]{0}', space=sflag, size = 0x8, scoped, tag = 'scoped memory for bottleneck_forward.4']
    #allocation10 [shape = 'u8[8192]{0}', space=vmem, size = 0x2000, scoped, tag = 'output window, operand 2']
    %10 = vsyncpa [#allocation3], 0
    %s11 = scalar_lea.sflag [#allocation3], 1
    %12 = vsyncpa %s11, 0
    %13 = vsyncpa [#allocation6], 0
    %14 = vsyncpa [#allocation4], 0
    %s15 = scalar_lea.sflag [#allocation4], 1
    %16 = vsyncpa %s15, 0
    %17 = vsyncpa [#allocation9], 0
    %s18 = scalar_lea.sflag [#allocation9], 1
    %19 = vsyncpa %s18, 0
    loop: start=0, step=1, limit=4
    $region2: #{bottleneck_forward.4} parent=1 // loop_pre_header
      _
    $region3: #{bottleneck_forward.4} parent=1 // loop_header
      %s21 = sphi 0, %s25
      %p22 = scmp.ge.s32.totalorder %s21, 4
      %s31 = sphi 0, %s33
      %s34 = sphi 0, %s31
      %s35 = sphi 0, %s34
      %s51 = sphi 0, %s35
      %s55 = sphi 0, %s55
      %s57 = sphi 0, %s55
      %s58 = sphi 0, %s57
      %s72 = sphi 0, %s58
      %s78 = sphi 0, %s80
      %s81 = sphi 0, %s78
      %s82 = sphi 0, %s81
      %s98 = sphi 0, %s82
      %s104 = sphi 0, %s106
      %s107 = sphi 0, %s104
      %s108 = sphi 0, %s107
      %s124 = sphi 0, %s108
      %s130 = sphi 0, %s132
      %s133 = sphi 0, %s130
      %s134 = sphi 0, %s133
      %s150 = sphi 0, %s134
    $region4: #{bottleneck_forward.4} parent=1 // loop_header_branch
      %24 = sbr.rel (%p22) target = $region8
    $region5: #{bottleneck_forward.4} parent=1 // loop_body
      %s26 = ssub.s32 %s21, 1
      %s27 = ssub.s32 %s21, 2
      %s28 = sadd.s32 %s21, 1
      %s29 = ssub.s32 %s21, %s28
      %p30 = scmp.eq.s32.totalorder %s29, 0
      %s32 = sadd.s32 %s31, 1
      %s33 = scalar_select %p30, %s31, %s32
      %p36 = pneg %p30
      %p37 = scmp.eq.s32.totalorder %s21, 1
      %p38 = por %p36, %p37
      %p39 = scmp.ne.s32.totalorder %s31, %s34
      %p40 = scmp.eq.s32.totalorder %s21, 0
      %p41 = por %p39, %p40
      %p42 = scmp.ne.s32.totalorder %s31, %s34
      %p43 = scmp.eq.s32.totalorder %s26, 1
      %p44 = por %p42, %p43
      %p45 = scmp.ne.s32.totalorder %s34, %s35
      %p46 = scmp.eq.s32.totalorder %s26, 0
      %p47 = por %p45, %p46
      %p48 = scmp.ne.s32.totalorder %s34, %s35
      %p49 = scmp.eq.s32.totalorder %s27, 1
      %p50 = por %p48, %p49
      %p52 = scmp.ne.s32.totalorder %s35, %s51
      %p53 = scmp.eq.s32.totalorder %s27, 0
      %p54 = por %p52, %p53
      %s56 = sadd.s32 %s55, 1
      %p59 = scmp.eq.s32.totalorder %s21, 1
      %p60 = scmp.ne.s32.totalorder %s55, %s57
      %p61 = scmp.eq.s32.totalorder %s21, 0
      %p62 = por %p60, %p61
      %p63 = scmp.ne.s32.totalorder %s55, %s57
      %p64 = scmp.eq.s32.totalorder %s26, 1
      %p65 = por %p63, %p64
      %p66 = scmp.ne.s32.totalorder %s57, %s58
      %p67 = scmp.eq.s32.totalorder %s26, 0
      %p68 = por %p66, %p67
      %p69 = scmp.ne.s32.totalorder %s57, %s58
      %p70 = scmp.eq.s32.totalorder %s27, 1
      %p71 = por %p69, %p70
      %p73 = scmp.ne.s32.totalorder %s58, %s72
      %p74 = scmp.eq.s32.totalorder %s27, 0
      %p75 = por %p73, %p74
      %s76 = ssub.s32 %s21, %s28
      %p77 = scmp.eq.s32.totalorder %s76, 0
      %s79 = sadd.s32 %s78, 1
      %s80 = scalar_select %p77, %s78, %s79
      %p83 = pneg %p77
      %p84 = scmp.eq.s32.totalorder %s21, 1
      %p85 = por %p83, %p84
      %p86 = scmp.ne.s32.totalorder %s78, %s81
      %p87 = scmp.eq.s32.totalorder %s21, 0
      %p88 = por %p86, %p87
      %p89 = scmp.ne.s32.totalorder %s78, %s81
      %p90 = scmp.eq.s32.totalorder %s26, 1
      %p91 = por %p89, %p90
      %p92 = scmp.ne.s32.totalorder %s81, %s82
      %p93 = scmp.eq.s32.totalorder %s26, 0
      %p94 = por %p92, %p93
      %p95 = scmp.ne.s32.totalorder %s81, %s82
      %p96 = scmp.eq.s32.totalorder %s27, 1
      %p97 = por %p95, %p96
      %p99 = scmp.ne.s32.totalorder %s82, %s98
      %p100 = scmp.eq.s32.totalorder %s27, 0
      %p101 = por %p99, %p100
      %s102 = ssub.s32 %s21, %s28
      %p103 = scmp.eq.s32.totalorder %s102, 0
      %s105 = sadd.s32 %s104, 1
      %s106 = scalar_select %p103, %s104, %s105
      %p109 = pneg %p103
      %p110 = scmp.eq.s32.totalorder %s21, 1
      %p111 = por %p109, %p110
      %p112 = scmp.ne.s32.totalorder %s104, %s107
      %p113 = scmp.eq.s32.totalorder %s21, 0
      %p114 = por %p112, %p113
      %p115 = scmp.ne.s32.totalorder %s104, %s107
      %p116 = scmp.eq.s32.totalorder %s26, 1
      %p117 = por %p115, %p116
      %p118 = scmp.ne.s32.totalorder %s107, %s108
      %p119 = scmp.eq.s32.totalorder %s26, 0
      %p120 = por %p118, %p119
      %p121 = scmp.ne.s32.totalorder %s107, %s108
      %p122 = scmp.eq.s32.totalorder %s27, 1
      %p123 = por %p121, %p122
      %p125 = scmp.ne.s32.totalorder %s108, %s124
      %p126 = scmp.eq.s32.totalorder %s27, 0
      %p127 = por %p125, %p126
      %s128 = ssub.s32 %s21, %s28
      %p129 = scmp.eq.s32.totalorder %s128, 0
      %s131 = sadd.s32 %s130, 1
      %s132 = scalar_select %p129, %s130, %s131
      %p135 = pneg %p129
      %p136 = scmp.eq.s32.totalorder %s21, 1
      %p137 = por %p135, %p136
      %p138 = scmp.ne.s32.totalorder %s130, %s133
      %p139 = scmp.eq.s32.totalorder %s21, 0
      %p140 = por %p138, %p139
      %p141 = scmp.ne.s32.totalorder %s130, %s133
      %p142 = scmp.eq.s32.totalorder %s26, 1
      %p143 = por %p141, %p142
      %p144 = scmp.ne.s32.totalorder %s133, %s134
      %p145 = scmp.eq.s32.totalorder %s26, 0
      %p146 = por %p144, %p145
      %p147 = scmp.ne.s32.totalorder %s133, %s134
      %p148 = scmp.eq.s32.totalorder %s27, 1
      %p149 = por %p147, %p148
      %p151 = scmp.ne.s32.totalorder %s134, %s150
      %p152 = scmp.eq.s32.totalorder %s27, 0
      %p153 = por %p151, %p152
      %p154 = scmp.le.s32.totalorder 1, %s21
      %p155 = scmp.lt.s32.totalorder %s21, 3
      %p156 = pnand %p154, %p155
      %p157 = pneg %p156
      // Predicated region
      $region9: #{bottleneck_forward.4} parent=5 // pred_check
        _
      $region10: #{bottleneck_forward.4} parent=5 // pred_check_branch
        %159 = sbr.rel (%p156) target = $region12
      $region11: #{bottleneck_forward.4} parent=5 // pred_region
        %s160 = ssub.s32 %s21, 1
        // Predicated region
        $region13: #{bottleneck_forward.4} parent=11 // pred_check
          %p161 = pneg %p68
        $region14: #{bottleneck_forward.4} parent=11 // pred_check_branch
          %163 = sbr.rel (%p161) target = $region16
        $region15: #{bottleneck_forward.4} parent=11 // pred_region
          %s165 = ssub.s32 64, 64
          %166 = vsyncadd [#allocation6], %s165
          %s168 = sshll.u32 [#allocation5], 4
          %s169 = int_to_ptr.vmem [resolvable:$true] %s168
          %171 = dma.hbm_to_vmem [thread:$0]  %s1, 64, %s169, [#allocation6]
        $region16: #{bottleneck_forward.4} parent=11 // pred_fallthru
          _
      $region12: #{bottleneck_forward.4} parent=5 // pred_fallthru
        _
      %p172 = scmp.lt.s32.totalorder %s21, 2
      // Predicated region
      $region17: #{bottleneck_forward.4} parent=5 // pred_check
        %p173 = pneg %p172
      $region18: #{bottleneck_forward.4} parent=5 // pred_check_branch
        %175 = sbr.rel (%p173) target = $region20
      $region19: #{bottleneck_forward.4} parent=5 // pred_region
        // Predicated region
        $region21: #{bottleneck_forward.4} parent=19 // pred_check
          %p176 = pneg %p41
        $region22: #{bottleneck_forward.4} parent=19 // pred_check_branch
          %178 = sbr.rel (%p176) target = $region24
        $region23: #{bottleneck_forward.4} parent=19 // pred_region
          %s179 = sand.u32 %s31, 1
          %s180 = scalar_lea.sflag [#allocation3], %s179
          %s181 = sand.u32 %s31, 1
          %s182 = smul.addr %s181, 64
          %s183 = scalar_lea.vmem [#allocation2], %s182
          %s185 = ssub.s32 1024, 1024
          %186 = vsyncadd %s180, %s185
          %s187 = smul.addr %s21, 8
          %s188 = smul.addr %s187, 128
          %s189 = scalar_lea.hbm %s0, %s188
          %s190 = sshll.u32 %s183, 4
          %s191 = int_to_ptr.vmem [resolvable:$true] %s190
          %196 = dma.hbm_to_vmem [thread:$0]  %s189, 1024, %s191, %s180, 256, 256, 16
        $region24: #{bottleneck_forward.4} parent=19 // pred_fallthru
          _
      $region20: #{bottleneck_forward.4} parent=5 // pred_fallthru
        _
      %p197 = scmp.le.s32.totalorder 1, %s21
      %p198 = scmp.lt.s32.totalorder %s21, 3
      %p199 = pnand %p197, %p198
      %p200 = pneg %p199
      // Predicated region
      $region25: #{bottleneck_forward.4} parent=5 // pred_check
        _
      $region26: #{bottleneck_forward.4} parent=5 // pred_check_branch
        %202 = sbr.rel (%p199) target = $region28
      $region27: #{bottleneck_forward.4} parent=5 // pred_region
        %s203 = ssub.s32 %s21, 1
        %s204 = sand.u32 %s34, 1
        %s205 = scalar_lea.sflag [#allocation3], %s204
        %s206 = sand.u32 %s34, 1
        %s207 = smul.addr %s206, 64
        %s208 = scalar_lea.vmem [#allocation2], %s207
        // Predicated region
        $region29: #{bottleneck_forward.4} parent=27 // pred_check
          %p209 = pneg %p47
        $region30: #{bottleneck_forward.4} parent=27 // pred_check_branch
          %211 = sbr.rel (%p209) target = $region32
        $region31: #{bottleneck_forward.4} parent=27 // pred_region
          %212 = dma.done %s205, 1024
        $region32: #{bottleneck_forward.4} parent=27 // pred_fallthru
          _
        // Predicated region
        $region33: #{bottleneck_forward.4} parent=27 // pred_check
          %p213 = pneg %p68
        $region34: #{bottleneck_forward.4} parent=27 // pred_check_branch
          %215 = sbr.rel (%p213) target = $region36
        $region35: #{bottleneck_forward.4} parent=27 // pred_region
          %216 = dma.done [#allocation6], 64
        $region36: #{bottleneck_forward.4} parent=27 // pred_fallthru
          _
        %s217 = sand.u32 %s34, 1
        %s218 = scalar_lea.sflag [#allocation3], %s217
        %s219 = sand.u32 %s34, 1
        %s220 = smul.addr %s219, 64
        %s221 = scalar_lea.vmem [#allocation2], %s220
        %p222 = pneg %p47
        %p223 = pneg %p44
        %p224 = pneg %p68
        %p225 = pneg %p65
        %p226 = pneg %p94
        %p227 = pneg %p91
        %s228 = sand.u32 %s81, 1
        %s229 = scalar_lea.sflag [#allocation4], %s228
        %s230 = sand.u32 %s81, 1
        %s231 = smul.addr %s230, 8
        %s232 = scalar_lea.vmem [#allocation7], %s231
        %p233 = pneg %p120
        %p234 = pneg %p117
        %s235 = sand.u32 %s26, 1
        %s236 = scalar_lea.sflag [#allocation9], %s235
        %s237 = sand.u32 %s107, 1
        %s238 = smul.addr %s237, 8
        %s239 = scalar_lea.vmem [#allocation8], %s238
        %p240 = pneg %p146
        %p241 = pneg %p143
        %s242 = sand.u32 %s26, 1
        %s243 = scalar_lea.sflag [#allocation9], %s242
        %s244 = sand.u32 %s133, 1
        %s245 = smul.addr %s244, 8
        %s246 = scalar_lea.vmem [#allocation10], %s245
        %v248 = vld [vmem:[#allocation5] sm:$0xf]
        %v249 = vld [vmem:[%s208] sm:$0xff]
        %v250 = vld [vmem:[%s208 + $0x8] sm:$0xff]
        %v251 = vld [vmem:[%s208 + $0x10] sm:$0xff]
        %v252 = vld [vmem:[%s208 + $0x18] sm:$0xff]
        %v253 = vld [vmem:[%s208 + $0x20] sm:$0xff]
        %v254 = vld [vmem:[%s208 + $0x28] sm:$0xff]
        %v255 = vld [vmem:[%s208 + $0x30] sm:$0xff]
        %v256 = vld [vmem:[%s208 + $0x38] sm:$0xff]
        %v257 = vpack.c.bf16 %v251, %v249
        %v258 = vpack.c.bf16 %v252, %v250
        %v259 = vpack.c.bf16 %v255, %v253
        %v260 = vpack.c.bf16 %v256, %v254
        %vm261 = vcmask 261120
        %v263 = vsel %vm261, %v248, 0
        %265 = vmatprep.subr.bf16.mxu0 %v258
        %266 = vmatpush1.bf16.msra.mxu0 %v257
        %267 = vmatprep.subr.bf16.mxu0 %v260
        %268 = vmatpush1.bf16.msra.mxu0 %v259
        %269 = vmatprep.subr.bf16.mxu0 0
        %270 = vmatpush1.bf16.msra.mxu0 0
        %271 = vmatprep.subr.bf16.mxu0 0
        %272 = vmatpush1.bf16.msra.mxu0 0
        %273 = vmatprep.subr.bf16.mxu0 0
        %274 = vmatpush1.bf16.msra.mxu0 0
        %275 = vmatprep.subr.bf16.mxu0 0
        %276 = vmatpush1.bf16.msra.mxu0 0
        %277 = vmatprep.subr.bf16.mxu0 0
        %278 = vmatpush1.bf16.msra.mxu0 0
        %279 = vmatprep.subr.bf16.mxu0 0
        %280 = vmatpush1.bf16.msra.mxu0 0
        %281 = vmatprep.subr.bf16.mxu0 0
        %282 = vmatpush1.bf16.msra.mxu0 0
        %283 = vmatprep.subr.bf16.mxu0 0
        %284 = vmatpush1.bf16.msra.mxu0 0
        %285 = vmatprep.subr.bf16.mxu0 0
        %286 = vmatpush1.bf16.msra.mxu0 0
        %287 = vmatprep.subr.bf16.mxu0 0
        %288 = vmatpush1.bf16.msra.mxu0 0
        %289 = vmatprep.subr.bf16.mxu0 0
        %290 = vmatpush1.bf16.msra.mxu0 0
        %291 = vmatprep.subr.bf16.mxu0 0
        %292 = vmatpush1.bf16.msra.mxu0 0
        %293 = vmatprep.subr.bf16.mxu0 0
        %294 = vmatpush1.bf16.msra.mxu0 0
        %295 = vmatprep.subr.bf16.mxu0 0
        %296 = vmatpush1.bf16.msra.mxu0 0
        %297 = vmatprep.mubr.bf16.mxu0 0
        %298 = vmatmul.mubr.bf16.gmra.mrb[0].mxu0 %v263
        %v299 = vpop.f32.mrb[0].mxu0
        %v300 = vadd.f32 0.0, %v299
        %v301 = vpop.f32.mrb[0].mxu0
        %v302 = vadd.f32 0.0, %v301
        %v303 = vpop.f32.mrb[0].mxu0
        %v304 = vpop.f32.mrb[0].mxu0
        %305 = vdwg.mxu0
        %v306 = vpack.c.bf16 %v300, %v300
        %v307 = vpack.c.bf16 %v302, %v302
        %v310 = vunpack.c.l.b16 %v306
        %v311 = vunpack.c.l.b16 %v307
        %v312 = vpack.c.b16 %v311, %v310
        %314 = vst [vmem:[%s232] sm:$0xff] %v312
        %v315 = vadd.f32 %v300, %v302
        %316 = vadd.xlane.f32.xlu0 %v315
        %v317 = vpop.xlane.xlu0 %316
        %vm318 = vcmask 7168
        %319 = vst.msk [vmem:[%s239] sm:$0xff] %vm318, %v317
        %v320 = vmul.f32 %v300, %v300
        %v321 = vmul.f32 %v302, %v302
        %v322 = vadd.f32 %v320, %v321
        %323 = vadd.xlane.f32.xlu0 %v322
        %v324 = vpop.xlane.xlu0 %323
        %325 = vst.msk [vmem:[%s246] sm:$0xff] %vm318, %v324
        %s326 = sand.u32 %s81, 1
        %s327 = scalar_lea.sflag [#allocation4], %s326
        %s328 = sand.u32 %s81, 1
        %s329 = smul.addr %s328, 8
        %s330 = scalar_lea.vmem [#allocation7], %s329
        %s331 = sand.u32 %s26, 1
        %s332 = scalar_lea.sflag [#allocation9], %s331
        %s333 = sand.u32 %s107, 1
        %s334 = smul.addr %s333, 8
        %s335 = scalar_lea.vmem [#allocation8], %s334
        %s336 = sand.u32 %s26, 1
        %s337 = scalar_lea.sflag [#allocation9], %s336
        %s338 = sand.u32 %s133, 1
        %s339 = smul.addr %s338, 8
        %s340 = scalar_lea.vmem [#allocation10], %s339
        // Predicated region
        $region37: #{bottleneck_forward.4} parent=27 // pred_check
          %p341 = pneg %p91
        $region38: #{bottleneck_forward.4} parent=27 // pred_check_branch
          %343 = sbr.rel (%p341) target = $region40
        $region39: #{bottleneck_forward.4} parent=27 // pred_region
          %s345 = ssub.s32 128, 128
          %346 = vsyncadd %s327, %s345
          %s347 = smul.addr %s26, 2
          %s348 = smul.addr %s347, 64
          %s349 = scalar_lea.hbm %s2, %s348
          %s351 = sshll.u32 %s330, 4
          %s352 = int_to_ptr.vmem [resolvable:$true] %s351
          %354 = dma.vmem_to_hbm [thread:$0]  %s352, 128, %s349, %s327
        $region40: #{bottleneck_forward.4} parent=27 // pred_fallthru
          _
        // Predicated region
        $region41: #{bottleneck_forward.4} parent=27 // pred_check
          %p355 = pneg %p117
        $region42: #{bottleneck_forward.4} parent=27 // pred_check_branch
          %357 = sbr.rel (%p355) target = $region44
        $region43: #{bottleneck_forward.4} parent=27 // pred_region
          %s359 = ssub.s32 128, 128
          %360 = vsyncadd %s332, %s359
          %s361 = smul.addr %s26, 128
          %s362 = scalar_lea.hbm %s3, %s361
          %s364 = sshll.u32 %s335, 4
          %s365 = int_to_ptr.vmem [resolvable:$true] %s364
          %367 = dma.vmem_to_hbm [thread:$0]  %s365, 128, %s362, %s332
        $region44: #{bottleneck_forward.4} parent=27 // pred_fallthru
          _
        // Predicated region
        $region45: #{bottleneck_forward.4} parent=27 // pred_check
          %p368 = pneg %p143
        $region46: #{bottleneck_forward.4} parent=27 // pred_check_branch
          %370 = sbr.rel (%p368) target = $region48
        $region47: #{bottleneck_forward.4} parent=27 // pred_region
          %s372 = ssub.s32 128, 128
          %373 = vsyncadd %s337, %s372
          %s374 = smul.addr %s26, 128
          %s375 = scalar_lea.hbm %s4, %s374
          %s377 = sshll.u32 %s340, 4
          %s378 = int_to_ptr.vmem [resolvable:$true] %s377
          %380 = dma.vmem_to_hbm [thread:$0]  %s378, 128, %s375, %s337
        $region48: #{bottleneck_forward.4} parent=27 // pred_fallthru
          _
      $region28: #{bottleneck_forward.4} parent=5 // pred_fallthru
        _
      %p381 = scmp.le.s32.totalorder 2, %s21
      // Predicated region
      $region49: #{bottleneck_forward.4} parent=5 // pred_check
        %p382 = pneg %p381
      $region50: #{bottleneck_forward.4} parent=5 // pred_check_branch
        %384 = sbr.rel (%p382) target = $region52
      $region51: #{bottleneck_forward.4} parent=5 // pred_region
        %s385 = ssub.s32 %s21, 2
        // Predicated region
        $region53: #{bottleneck_forward.4} parent=51 // pred_check
          %p386 = pneg %p97
        $region54: #{bottleneck_forward.4} parent=51 // pred_check_branch
          %388 = sbr.rel (%p386) target = $region56
        $region55: #{bottleneck_forward.4} parent=51 // pred_region
          %s389 = sand.u32 %s82, 1
          %s390 = scalar_lea.sflag [#allocation4], %s389
          %s391 = sand.u32 %s82, 1
          %s392 = smul.addr %s391, 8
          %s393 = scalar_lea.vmem [#allocation7], %s392
          %394 = dma.done %s390, 128
        $region56: #{bottleneck_forward.4} parent=51 // pred_fallthru
          _
        // Predicated region
        $region57: #{bottleneck_forward.4} parent=51 // pred_check
          %p395 = pneg %p123
        $region58: #{bottleneck_forward.4} parent=51 // pred_check_branch
          %397 = sbr.rel (%p395) target = $region60
        $region59: #{bottleneck_forward.4} parent=51 // pred_region
          %s398 = sand.u32 %s27, 1
          %s399 = scalar_lea.sflag [#allocation9], %s398
          %s400 = sand.u32 %s108, 1
          %s401 = smul.addr %s400, 8
          %s402 = scalar_lea.vmem [#allocation8], %s401
          %403 = dma.done %s399, 128
        $region60: #{bottleneck_forward.4} parent=51 // pred_fallthru
          _
        // Predicated region
        $region61: #{bottleneck_forward.4} parent=51 // pred_check
          %p404 = pneg %p149
        $region62: #{bottleneck_forward.4} parent=51 // pred_check_branch
          %406 = sbr.rel (%p404) target = $region64
        $region63: #{bottleneck_forward.4} parent=51 // pred_region
          %s407 = sand.u32 %s27, 1
          %s408 = scalar_lea.sflag [#allocation9], %s407
          %s409 = sand.u32 %s134, 1
          %s410 = smul.addr %s409, 8
          %s411 = scalar_lea.vmem [#allocation10], %s410
          %412 = dma.done %s408, 128
        $region64: #{bottleneck_forward.4} parent=51 // pred_fallthru
          _
      $region52: #{bottleneck_forward.4} parent=5 // pred_fallthru
        _
    $region6: #{bottleneck_forward.4} parent=1 // loop_footer
      %s25 = sadd.s32 1, %s21
    $region7: #{bottleneck_forward.4} parent=1 // loop_footer_branch
      %20 = sbr.rel target = $region3
    $region8: #{bottleneck_forward.4} parent=1 // loop_exit
      _
    %413 = vsyncpa [#allocation3], 1
    %s414 = scalar_lea.sflag [#allocation3], 1
    %415 = vsyncpa %s414, 1
    %416 = vsyncpa [#allocation6], 1
    %417 = vsyncpa [#allocation4], 1
    %s418 = scalar_lea.sflag [#allocation4], 1
    %419 = vsyncpa %s418, 1
    %420 = vsyncpa [#allocation9], 1
    %s421 = scalar_lea.sflag [#allocation9], 1
    %422 = vsyncpa %s421, 1

// kernel: bottleneck_forward.7
$region0: #{bottleneck_forward.7}
  #allocation0 [shape = 'u32[]', space=smem, size = 0x4, offset = 0x4, fixed_abs, tag = 'smem constant byte address 0x4 - core index']
  #allocation1 [shape = 'u32[144,128]{1,0:T(1,128)}', space=vmem, size = 0x12000, scoped, tag = 'internal scratch']
  %s0 = inlined_call_operand.hbm [shape: bf16[2,8,256], index: 0, kind: input, shape index: {}]
  %s1 = inlined_call_operand.hbm [shape: f32[2,32,256], index: 1, kind: input, shape index: {}]
  %s2 = inlined_call_operand.hbm [shape: bf16[32,8], index: 2, kind: input, shape index: {}]
  %s3 = inlined_call_operand.hbm [shape: f32[8,1], index: 3, kind: input, shape index: {}]
  %s4 = inlined_call_operand.hbm [shape: f32[8,1], index: 4, kind: input, shape index: {}]
  %s5 = inlined_call_operand.hbm [shape: f32[32,1], index: 5, kind: input, shape index: {}]
  %s6 = inlined_call_operand.hbm [shape: f32[32,1], index: 6, kind: input, shape index: {}]
  %s7 = inlined_call_operand.hbm [shape: f32[2,32,256], index: 7, kind: output, shape index: {}]
  %s8 = sld [smem:[#allocation0]]
  $region89: #{bottleneck_forward.7} parent=0
    _
  %s10 = ssub.s32 1, %s8
  %s11 = scalar_select 0, %s10, %s8
  $region1: #{bottleneck_forward.7} parent=0
    #allocation2 [shape = 'u8[8192]{0}', space=vmem, size = 0x2000, scoped, tag = 'input window, operand 0']
    #allocation3 [shape = 's32[2]{0}', space=sflag, size = 0x8, scoped, tag = 'scoped memory for bottleneck_forward.7']
    #allocation4 [shape = 's32[2]{0}', space=sflag, size = 0x8, scoped, tag = 'scoped memory for bottleneck_forward.7']
    #allocation5 [shape = 'u8[65536]{0}', space=vmem, size = 0x10000, scoped, tag = 'input window, operand 1']
    #allocation6 [shape = 's32[2]{0}', space=sflag, size = 0x8, scoped, tag = 'scoped memory for bottleneck_forward.7']
    #allocation7 [shape = 'u8[8192]{0}', space=vmem, size = 0x2000, scoped, tag = 'input window, operand 2, single buffered']
    #allocation8 [shape = 'u8[4096]{0}', space=vmem, size = 0x1000, scoped, tag = 'input window, operand 3, single buffered']
    #allocation9 [shape = 's32[1]{0}', space=sflag, size = 0x4, scoped, tag = 'scoped memory for bottleneck_forward.7']
    #allocation10 [shape = 'u8[4096]{0}', space=vmem, size = 0x1000, scoped, tag = 'input window, operand 4, single buffered']
    #allocation11 [shape = 'u8[16384]{0}', space=vmem, size = 0x4000, scoped, tag = 'input window, operand 5, single buffered']
    #allocation12 [shape = 's32[1]{0}', space=sflag, size = 0x4, scoped, tag = 'scoped memory for bottleneck_forward.7']
    #allocation13 [shape = 'u8[16384]{0}', space=vmem, size = 0x4000, scoped, tag = 'input window, operand 6, single buffered']
    #allocation14 [shape = 'u8[65536]{0}', space=vmem, size = 0x10000, scoped, tag = 'output window, operand 0']
    %12 = vsyncpa [#allocation3], 0
    %s13 = scalar_lea.sflag [#allocation3], 1
    %14 = vsyncpa %s13, 0
    %15 = vsyncpa [#allocation6], 0
    %s16 = scalar_lea.sflag [#allocation6], 1
    %17 = vsyncpa %s16, 0
    %18 = vsyncpa [#allocation9], 0
    %19 = vsyncpa [#allocation12], 0
    %20 = vsyncpa [#allocation4], 0
    %s21 = scalar_lea.sflag [#allocation4], 1
    %22 = vsyncpa %s21, 0
    loop: start=0, step=1, limit=4
    $region2: #{bottleneck_forward.7} parent=1 // loop_pre_header
      _
    $region3: #{bottleneck_forward.7} parent=1 // loop_header
      %s24 = sphi 0, %s28
      %p25 = scmp.ge.s32.totalorder %s24, 4
      %s34 = sphi 0, %s36
      %s37 = sphi 0, %s34
      %s38 = sphi 0, %s37
      %s54 = sphi 0, %s38
      %s60 = sphi 0, %s62
      %s63 = sphi 0, %s60
      %s64 = sphi 0, %s63
      %s80 = sphi 0, %s64
      %s84 = sphi 0, %s84
      %s86 = sphi 0, %s84
      %s87 = sphi 0, %s86
      %s101 = sphi 0, %s87
      %s105 = sphi 0, %s105
      %s107 = sphi 0, %s105
      %s108 = sphi 0, %s107
      %s122 = sphi 0, %s108
      %s126 = sphi 0, %s126
      %s128 = sphi 0, %s126
      %s129 = sphi 0, %s128
      %s143 = sphi 0, %s129
      %s147 = sphi 0, %s147
      %s149 = sphi 0, %s147
      %s150 = sphi 0, %s149
      %s164 = sphi 0, %s150
      %s168 = sphi 0, %s168
      %s170 = sphi 0, %s168
      %s171 = sphi 0, %s170
      %s185 = sphi 0, %s171
      %s191 = sphi 0, %s193
      %s194 = sphi 0, %s191
      %s195 = sphi 0, %s194
      %s211 = sphi 0, %s195
    $region4: #{bottleneck_forward.7} parent=1 // loop_header_branch
      %27 = sbr.rel (%p25) target = $region8
    $region5: #{bottleneck_forward.7} parent=1 // loop_body
      %s29 = ssub.s32 %s24, 1
      %s30 = ssub.s32 %s24, 2
      %s31 = sadd.s32 %s24, 1
      %s32 = ssub.s32 %s24, %s31
      %p33 = scmp.eq.s32.totalorder %s32, 0
      %s35 = sadd.s32 %s34, 1
      %s36 = scalar_select %p33, %s34, %s35
      %p39 = pneg %p33
      %p40 = scmp.eq.s32.totalorder %s24, 1
      %p41 = por %p39, %p40
      %p42 = scmp.ne.s32.totalorder %s34, %s37
      %p43 = scmp.eq.s32.totalorder %s24, 0
      %p44 = por %p42, %p43
      %p45 = scmp.ne.s32.totalorder %s34, %s37
      %p46 = scmp.eq.s32.totalorder %s29, 1
      %p47 = por %p45, %p46
      %p48 = scmp.ne.s32.totalorder %s37, %s38
      %p49 = scmp.eq.s32.totalorder %s29, 0
      %p50 = por %p48, %p49
      %p51 = scmp.ne.s32.totalorder %s37, %s38
      %p52 = scmp.eq.s32.totalorder %s30, 1
      %p53 = por %p51, %p52
      %p55 = scmp.ne.s32.totalorder %s38, %s54
      %p56 = scmp.eq.s32.totalorder %s30, 0
      %p57 = por %p55, %p56
      %s58 = ssub.s32 %s24, %s31
      %p59 = scmp.eq.s32.totalorder %s58, 0
      %s61 = sadd.s32 %s60, 1
      %s62 = scalar_select %p59, %s60, %s61
      %p65 = pneg %p59
      %p66 = scmp.eq.s32.totalorder %s24, 1
      %p67 = por %p65, %p66
      %p68 = scmp.ne.s32.totalorder %s60, %s63
      %p69 = scmp.eq.s32.totalorder %s24, 0
      %p70 = por %p68, %p69
      %p71 = scmp.ne.s32.totalorder %s60, %s63
      %p72 = scmp.eq.s32.totalorder %s29, 1
      %p73 = por %p71, %p72
      %p74 = scmp.ne.s32.totalorder %s63, %s64
      %p75 = scmp.eq.s32.totalorder %s29, 0
      %p76 = por %p74, %p75
      %p77 = scmp.ne.s32.totalorder %s63, %s64
      %p78 = scmp.eq.s32.totalorder %s30, 1
      %p79 = por %p77, %p78
      %p81 = scmp.ne.s32.totalorder %s64, %s80
      %p82 = scmp.eq.s32.totalorder %s30, 0
      %p83 = por %p81, %p82
      %s85 = sadd.s32 %s84, 1
      %p88 = scmp.eq.s32.totalorder %s24, 1
      %p89 = scmp.ne.s32.totalorder %s84, %s86
      %p90 = scmp.eq.s32.totalorder %s24, 0
      %p91 = por %p89, %p90
      %p92 = scmp.ne.s32.totalorder %s84, %s86
      %p93 = scmp.eq.s32.totalorder %s29, 1
      %p94 = por %p92, %p93
      %p95 = scmp.ne.s32.totalorder %s86, %s87
      %p96 = scmp.eq.s32.totalorder %s29, 0
      %p97 = por %p95, %p96
      %p98 = scmp.ne.s32.totalorder %s86, %s87
      %p99 = scmp.eq.s32.totalorder %s30, 1
      %p100 = por %p98, %p99
      %p102 = scmp.ne.s32.totalorder %s87, %s101
      %p103 = scmp.eq.s32.totalorder %s30, 0
      %p104 = por %p102, %p103
      %s106 = sadd.s32 %s105, 1
      %p109 = scmp.eq.s32.totalorder %s24, 1
      %p110 = scmp.ne.s32.totalorder %s105, %s107
      %p111 = scmp.eq.s32.totalorder %s24, 0
      %p112 = por %p110, %p111
      %p113 = scmp.ne.s32.totalorder %s105, %s107
      %p114 = scmp.eq.s32.totalorder %s29, 1
      %p115 = por %p113, %p114
      %p116 = scmp.ne.s32.totalorder %s107, %s108
      %p117 = scmp.eq.s32.totalorder %s29, 0
      %p118 = por %p116, %p117
      %p119 = scmp.ne.s32.totalorder %s107, %s108
      %p120 = scmp.eq.s32.totalorder %s30, 1
      %p121 = por %p119, %p120
      %p123 = scmp.ne.s32.totalorder %s108, %s122
      %p124 = scmp.eq.s32.totalorder %s30, 0
      %p125 = por %p123, %p124
      %s127 = sadd.s32 %s126, 1
      %p130 = scmp.eq.s32.totalorder %s24, 1
      %p131 = scmp.ne.s32.totalorder %s126, %s128
      %p132 = scmp.eq.s32.totalorder %s24, 0
      %p133 = por %p131, %p132
      %p134 = scmp.ne.s32.totalorder %s126, %s128
      %p135 = scmp.eq.s32.totalorder %s29, 1
      %p136 = por %p134, %p135
      %p137 = scmp.ne.s32.totalorder %s128, %s129
      %p138 = scmp.eq.s32.totalorder %s29, 0
      %p139 = por %p137, %p138
      %p140 = scmp.ne.s32.totalorder %s128, %s129
      %p141 = scmp.eq.s32.totalorder %s30, 1
      %p142 = por %p140, %p141
      %p144 = scmp.ne.s32.totalorder %s129, %s143
      %p145 = scmp.eq.s32.totalorder %s30, 0
      %p146 = por %p144, %p145
      %s148 = sadd.s32 %s147, 1
      %p151 = scmp.eq.s32.totalorder %s24, 1
      %p152 = scmp.ne.s32.totalorder %s147, %s149
      %p153 = scmp.eq.s32.totalorder %s24, 0
      %p154 = por %p152, %p153
      %p155 = scmp.ne.s32.totalorder %s147, %s149
      %p156 = scmp.eq.s32.totalorder %s29, 1
      %p157 = por %p155, %p156
      %p158 = scmp.ne.s32.totalorder %s149, %s150
      %p159 = scmp.eq.s32.totalorder %s29, 0
      %p160 = por %p158, %p159
      %p161 = scmp.ne.s32.totalorder %s149, %s150
      %p162 = scmp.eq.s32.totalorder %s30, 1
      %p163 = por %p161, %p162
      %p165 = scmp.ne.s32.totalorder %s150, %s164
      %p166 = scmp.eq.s32.totalorder %s30, 0
      %p167 = por %p165, %p166
      %s169 = sadd.s32 %s168, 1
      %p172 = scmp.eq.s32.totalorder %s24, 1
      %p173 = scmp.ne.s32.totalorder %s168, %s170
      %p174 = scmp.eq.s32.totalorder %s24, 0
      %p175 = por %p173, %p174
      %p176 = scmp.ne.s32.totalorder %s168, %s170
      %p177 = scmp.eq.s32.totalorder %s29, 1
      %p178 = por %p176, %p177
      %p179 = scmp.ne.s32.totalorder %s170, %s171
      %p180 = scmp.eq.s32.totalorder %s29, 0
      %p181 = por %p179, %p180
      %p182 = scmp.ne.s32.totalorder %s170, %s171
      %p183 = scmp.eq.s32.totalorder %s30, 1
      %p184 = por %p182, %p183
      %p186 = scmp.ne.s32.totalorder %s171, %s185
      %p187 = scmp.eq.s32.totalorder %s30, 0
      %p188 = por %p186, %p187
      %s189 = ssub.s32 %s24, %s31
      %p190 = scmp.eq.s32.totalorder %s189, 0
      %s192 = sadd.s32 %s191, 1
      %s193 = scalar_select %p190, %s191, %s192
      %p196 = pneg %p190
      %p197 = scmp.eq.s32.totalorder %s24, 1
      %p198 = por %p196, %p197
      %p199 = scmp.ne.s32.totalorder %s191, %s194
      %p200 = scmp.eq.s32.totalorder %s24, 0
      %p201 = por %p199, %p200
      %p202 = scmp.ne.s32.totalorder %s191, %s194
      %p203 = scmp.eq.s32.totalorder %s29, 1
      %p204 = por %p202, %p203
      %p205 = scmp.ne.s32.totalorder %s194, %s195
      %p206 = scmp.eq.s32.totalorder %s29, 0
      %p207 = por %p205, %p206
      %p208 = scmp.ne.s32.totalorder %s194, %s195
      %p209 = scmp.eq.s32.totalorder %s30, 1
      %p210 = por %p208, %p209
      %p212 = scmp.ne.s32.totalorder %s195, %s211
      %p213 = scmp.eq.s32.totalorder %s30, 0
      %p214 = por %p212, %p213
      %p215 = scmp.le.s32.totalorder 1, %s24
      %p216 = scmp.lt.s32.totalorder %s24, 3
      %p217 = pnand %p215, %p216
      %p218 = pneg %p217
      // Predicated region
      $region9: #{bottleneck_forward.7} parent=5 // pred_check
        _
      $region10: #{bottleneck_forward.7} parent=5 // pred_check_branch
        %220 = sbr.rel (%p217) target = $region12
      $region11: #{bottleneck_forward.7} parent=5 // pred_region
        %s221 = ssub.s32 %s24, 1
        // Predicated region
        $region13: #{bottleneck_forward.7} parent=11 // pred_check
          %p222 = pneg %p97
        $region14: #{bottleneck_forward.7} parent=11 // pred_check_branch
          %224 = sbr.rel (%p222) target = $region16
        $region15: #{bottleneck_forward.7} parent=11 // pred_region
          %s226 = ssub.s32 256, 256
          %227 = vsyncadd [#allocation6], %s226
          %s228 = sshll.u32 [#allocation7], 4
          %s229 = int_to_ptr.vmem [resolvable:$true] %s228
          %234 = dma.hbm_to_vmem [thread:$0]  %s2, 256, %s229, [#allocation6], 64, 64, 4
        $region16: #{bottleneck_forward.7} parent=11 // pred_fallthru
          _
        // Predicated region
        $region17: #{bottleneck_forward.7} parent=11 // pred_check
          %p235 = pneg %p118
        $region18: #{bottleneck_forward.7} parent=11 // pred_check_branch
          %237 = sbr.rel (%p235) target = $region20
        $region19: #{bottleneck_forward.7} parent=11 // pred_region
          %s239 = ssub.s32 128, 128
          %240 = vsyncadd [#allocation9], %s239
          %s242 = sshll.u32 [#allocation8], 4
          %s243 = int_to_ptr.vmem [resolvable:$true] %s242
          %245 = dma.hbm_to_vmem [thread:$0]  %s3, 128, %s243, [#allocation9]
        $region20: #{bottleneck_forward.7} parent=11 // pred_fallthru
          _
        // Predicated region
        $region21: #{bottleneck_forward.7} parent=11 // pred_check
          %p246 = pneg %p139
        $region22: #{bottleneck_forward.7} parent=11 // pred_check_branch
          %248 = sbr.rel (%p246) target = $region24
        $region23: #{bottleneck_forward.7} parent=11 // pred_region
          %s250 = ssub.s32 128, 128
          %251 = vsyncadd [#allocation9], %s250
          %s253 = sshll.u32 [#allocation10], 4
          %s254 = int_to_ptr.vmem [resolvable:$true] %s253
          %256 = dma.hbm_to_vmem [thread:$0]  %s4, 128, %s254, [#allocation9]
        $region24: #{bottleneck_forward.7} parent=11 // pred_fallthru
          _
        // Predicated region
        $region25: #{bottleneck_forward.7} parent=11 // pred_check
          %p257 = pneg %p160
        $region26: #{bottleneck_forward.7} parent=11 // pred_check_branch
          %259 = sbr.rel (%p257) target = $region28
        $region27: #{bottleneck_forward.7} parent=11 // pred_region
          %s261 = ssub.s32 512, 512
          %262 = vsyncadd [#allocation12], %s261
          %s263 = sshll.u32 [#allocation11], 4
          %s264 = int_to_ptr.vmem [resolvable:$true] %s263
          %269 = dma.hbm_to_vmem [thread:$0]  %s5, 512, %s264, [#allocation12], 128, 128, 8
        $region28: #{bottleneck_forward.7} parent=11 // pred_fallthru
          _
        // Predicated region
        $region29: #{bottleneck_forward.7} parent=11 // pred_check
          %p270 = pneg %p181
        $region30: #{bottleneck_forward.7} parent=11 // pred_check_branch
          %272 = sbr.rel (%p270) target = $region32
        $region31: #{bottleneck_forward.7} parent=11 // pred_region
          %s274 = ssub.s32 512, 512
          %275 = vsyncadd [#allocation12], %s274
          %s276 = sshll.u32 [#allocation13], 4
          %s277 = int_to_ptr.vmem [resolvable:$true] %s276
          %282 = dma.hbm_to_vmem [thread:$0]  %s6, 512, %s277, [#allocation12], 128, 128, 8
        $region32: #{bottleneck_forward.7} parent=11 // pred_fallthru
          _
      $region12: #{bottleneck_forward.7} parent=5 // pred_fallthru
        _
      %p283 = scmp.lt.s32.totalorder %s24, 2
      // Predicated region
      $region33: #{bottleneck_forward.7} parent=5 // pred_check
        %p284 = pneg %p283
      $region34: #{bottleneck_forward.7} parent=5 // pred_check_branch
        %286 = sbr.rel (%p284) target = $region36
      $region35: #{bottleneck_forward.7} parent=5 // pred_region
        // Predicated region
        $region37: #{bottleneck_forward.7} parent=35 // pred_check
          %p287 = pneg %p44
        $region38: #{bottleneck_forward.7} parent=35 // pred_check_branch
          %289 = sbr.rel (%p287) target = $region40
        $region39: #{bottleneck_forward.7} parent=35 // pred_region
          %s290 = sand.u32 %s34, 1
          %s291 = scalar_lea.sflag [#allocation3], %s290
          %s292 = sand.u32 %s34, 1
          %s293 = smul.addr %s292, 8
          %s294 = scalar_lea.vmem [#allocation2], %s293
          %s296 = ssub.s32 128, 128
          %297 = vsyncadd %s291, %s296
          %s298 = smul.addr %s24, 2
          %s299 = smul.addr %s298, 64
          %s300 = scalar_lea.hbm %s0, %s299
          %s302 = sshll.u32 %s294, 4
          %s303 = int_to_ptr.vmem [resolvable:$true] %s302
          %305 = dma.hbm_to_vmem [thread:$0]  %s300, 128, %s303, %s291
        $region40: #{bottleneck_forward.7} parent=35 // pred_fallthru
          _
        // Predicated region
        $region41: #{bottleneck_forward.7} parent=35 // pred_check
          %p306 = pneg %p70
        $region42: #{bottleneck_forward.7} parent=35 // pred_check_branch
          %308 = sbr.rel (%p306) target = $region44
        $region43: #{bottleneck_forward.7} parent=35 // pred_region
          %s309 = sand.u32 %s24, 1
          %s310 = scalar_lea.sflag [#allocation6], %s309
          %s311 = sand.u32 %s60, 1
          %s312 = smul.addr %s311, 64
          %s313 = scalar_lea.vmem [#allocation5], %s312
          %s315 = ssub.s32 1024, 1024
          %316 = vsyncadd %s310, %s315
          %s317 = smul.addr %s24, 8
          %s318 = smul.addr %s317, 128
          %s319 = scalar_lea.hbm %s1, %s318
          %s320 = sshll.u32 %s313, 4
          %s321 = int_to_ptr.vmem [resolvable:$true] %s320
          %326 = dma.hbm_to_vmem [thread:$0]  %s319, 1024, %s321, %s310, 256, 256, 16
        $region44: #{bottleneck_forward.7} parent=35 // pred_fallthru
          _
      $region36: #{bottleneck_forward.7} parent=5 // pred_fallthru
        _
      %p327 = scmp.le.s32.totalorder 1, %s24
      %p328 = scmp.lt.s32.totalorder %s24, 3
      %p329 = pnand %p327, %p328
      %p330 = pneg %p329
      // Predicated region
      $region45: #{bottleneck_forward.7} parent=5 // pred_check
        _
      $region46: #{bottleneck_forward.7} parent=5 // pred_check_branch
        %332 = sbr.rel (%p329) target = $region48
      $region47: #{bottleneck_forward.7} parent=5 // pred_region
        %s333 = ssub.s32 %s24, 1
        %s334 = sand.u32 %s37, 1
        %s335 = scalar_lea.sflag [#allocation3], %s334
        %s336 = sand.u32 %s37, 1
        %s337 = smul.addr %s336, 8
        %s338 = scalar_lea.vmem [#allocation2], %s337
        // Predicated region
        $region49: #{bottleneck_forward.7} parent=47 // pred_check
          %p339 = pneg %p50
        $region50: #{bottleneck_forward.7} parent=47 // pred_check_branch
          %341 = sbr.rel (%p339) target = $region52
        $region51: #{bottleneck_forward.7} parent=47 // pred_region
          %342 = dma.done %s335, 128
        $region52: #{bottleneck_forward.7} parent=47 // pred_fallthru
          _
        %s343 = sand.u32 %s29, 1
        %s344 = scalar_lea.sflag [#allocation6], %s343
        %s345 = sand.u32 %s63, 1
        %s346 = smul.addr %s345, 64
        %s347 = scalar_lea.vmem [#allocation5], %s346
        // Predicated region
        $region53: #{bottleneck_forward.7} parent=47 // pred_check
          %p348 = pneg %p76
        $region54: #{bottleneck_forward.7} parent=47 // pred_check_branch
          %350 = sbr.rel (%p348) target = $region56
        $region55: #{bottleneck_forward.7} parent=47 // pred_region
          %351 = dma.done %s344, 1024
        $region56: #{bottleneck_forward.7} parent=47 // pred_fallthru
          _
        // Predicated region
        $region57: #{bottleneck_forward.7} parent=47 // pred_check
          %p352 = pneg %p97
        $region58: #{bottleneck_forward.7} parent=47 // pred_check_branch
          %354 = sbr.rel (%p352) target = $region60
        $region59: #{bottleneck_forward.7} parent=47 // pred_region
          %355 = dma.done [#allocation6], 256
        $region60: #{bottleneck_forward.7} parent=47 // pred_fallthru
          _
        // Predicated region
        $region61: #{bottleneck_forward.7} parent=47 // pred_check
          %p356 = pneg %p118
        $region62: #{bottleneck_forward.7} parent=47 // pred_check_branch
          %358 = sbr.rel (%p356) target = $region64
        $region63: #{bottleneck_forward.7} parent=47 // pred_region
          %359 = dma.done [#allocation9], 128
        $region64: #{bottleneck_forward.7} parent=47 // pred_fallthru
          _
        // Predicated region
        $region65: #{bottleneck_forward.7} parent=47 // pred_check
          %p360 = pneg %p139
        $region66: #{bottleneck_forward.7} parent=47 // pred_check_branch
          %362 = sbr.rel (%p360) target = $region68
        $region67: #{bottleneck_forward.7} parent=47 // pred_region
          %363 = dma.done [#allocation9], 128
        $region68: #{bottleneck_forward.7} parent=47 // pred_fallthru
          _
        // Predicated region
        $region69: #{bottleneck_forward.7} parent=47 // pred_check
          %p364 = pneg %p160
        $region70: #{bottleneck_forward.7} parent=47 // pred_check_branch
          %366 = sbr.rel (%p364) target = $region72
        $region71: #{bottleneck_forward.7} parent=47 // pred_region
          %367 = dma.done [#allocation12], 512
        $region72: #{bottleneck_forward.7} parent=47 // pred_fallthru
          _
        // Predicated region
        $region73: #{bottleneck_forward.7} parent=47 // pred_check
          %p368 = pneg %p181
        $region74: #{bottleneck_forward.7} parent=47 // pred_check_branch
          %370 = sbr.rel (%p368) target = $region76
        $region75: #{bottleneck_forward.7} parent=47 // pred_region
          %371 = dma.done [#allocation12], 512
        $region76: #{bottleneck_forward.7} parent=47 // pred_fallthru
          _
        %s372 = sand.u32 %s37, 1
        %s373 = scalar_lea.sflag [#allocation3], %s372
        %s374 = sand.u32 %s37, 1
        %s375 = smul.addr %s374, 8
        %s376 = scalar_lea.vmem [#allocation2], %s375
        %p377 = pneg %p50
        %p378 = pneg %p47
        %s379 = sand.u32 %s29, 1
        %s380 = scalar_lea.sflag [#allocation6], %s379
        %s381 = sand.u32 %s63, 1
        %s382 = smul.addr %s381, 64
        %s383 = scalar_lea.vmem [#allocation5], %s382
        %p384 = pneg %p76
        %p385 = pneg %p73
        %p386 = pneg %p97
        %p387 = pneg %p94
        %p388 = pneg %p118
        %p389 = pneg %p115
        %p390 = pneg %p139
        %p391 = pneg %p136
        %p392 = pneg %p160
        %p393 = pneg %p157
        %p394 = pneg %p181
        %p395 = pneg %p178
        %p396 = pneg %p207
        %p397 = pneg %p204
        %s398 = sand.u32 %s194, 1
        %s399 = scalar_lea.sflag [#allocation4], %s398
        %s400 = sand.u32 %s194, 1
        %s401 = smul.addr %s400, 64
        %s402 = scalar_lea.vmem [#allocation14], %s401
        %v404 = vld [vmem:[%s338] sm:$0xff]
        %v405 = vunpack.c.l.bf16 %v404
        %v406 = vunpack.c.h.bf16 %v404
        %v407 = vld [vmem:[#allocation8] sm:$0xff]
        %409 = vset.pattern.permute.xlu0 0
        %410 = vperm.xlu0 %409, %v407
        %v411 = vpop.permute.xlu0 %410
        %v413 = vmul.f32 %v405, %v411
        %v414 = vmul.f32 %v406, %v411
        %v415 = vld [vmem:[#allocation10] sm:$0xff]
        %417 = vset.pattern.permute.xlu0 0
        %418 = vperm.xlu0 %417, %v415
        %v419 = vpop.permute.xlu0 %418
        %v421 = vadd.f32 %v413, %v419
        %v422 = vadd.f32 %v414, %v419
        %v423 = vmax.f32 %v421, 0.0
        %v424 = vmax.f32 %v422, 0.0
        %v425 = vld [vmem:[#allocation7] sm:$0xf]
        %v426 = vld [vmem:[#allocation7 + $0x4] sm:$0xf]
        %v427 = vld [vmem:[#allocation7 + $0x8] sm:$0xf]
        %v428 = vld [vmem:[#allocation7 + $0xc] sm:$0xf]
        %v429 = vpack.c.bf16 %v423, %v423
        %v430 = vpack.c.bf16 %v424, %v424
        %v435 = vunpack.c.l.b16 %v425
        %v436 = vunpack.c.l.b16 %v426
        %v437 = vunpack.c.l.b16 %v427
        %v438 = vunpack.c.l.b16 %v428
        %v439 = vpack.c.b16 %v436, %v435
        %v440 = vpack.c.b16 %v438, %v437
        %vm441 = vcmask 64512
        %v443 = vsel %vm441, %v439, 0
        %v446 = vsel %vm441, %v440, 0
        %vm448 = vcmask 1043456
        %v450 = vsel %vm448, %v429, 0
        %v453 = vsel %vm448, %v430, 0
        %455 = vmatprep.subr.bf16.mxu0 %v453
        %456 = vmatpush1.bf16.msra.mxu0 %v450
        %457 = vmatprep.subr.bf16.mxu0 0
        %458 = vmatpush1.bf16.msra.mxu0 0
        %459 = vmatprep.subr.bf16.mxu0 0
        %460 = vmatpush1.bf16.msra.mxu0 0
        %461 = vmatprep.subr.bf16.mxu0 0
        %462 = vmatpush1.bf16.msra.mxu0 0
        %463 = vmatprep.subr.bf16.mxu0 0
        %464 = vmatpush1.bf16.msra.mxu0 0
        %465 = vmatprep.subr.bf16.mxu0 0
        %466 = vmatpush1.bf16.msra.mxu0 0
        %467 = vmatprep.subr.bf16.mxu0 0
        %468 = vmatpush1.bf16.msra.mxu0 0
        %469 = vmatprep.subr.bf16.mxu0 0
        %470 = vmatpush1.bf16.msra.mxu0 0
        %471 = vmatprep.subr.bf16.mxu0 0
        %472 = vmatpush1.bf16.msra.mxu0 0
        %473 = vmatprep.subr.bf16.mxu0 0
        %474 = vmatpush1.bf16.msra.mxu0 0
        %475 = vmatprep.subr.bf16.mxu0 0
        %476 = vmatpush1.bf16.msra.mxu0 0
        %477 = vmatprep.subr.bf16.mxu0 0
        %478 = vmatpush1.bf16.msra.mxu0 0
        %479 = vmatprep.subr.bf16.mxu0 0
        %480 = vmatpush1.bf16.msra.mxu0 0
        %481 = vmatprep.subr.bf16.mxu0 0
        %482 = vmatpush1.bf16.msra.mxu0 0
        %483 = vmatprep.subr.bf16.mxu0 0
        %484 = vmatpush1.bf16.msra.mxu0 0
        %485 = vmatprep.subr.bf16.mxu0 0
        %486 = vmatpush1.bf16.msra.mxu0 0
        %487 = vmatprep.mubr.bf16.mxu0 0
        %488 = vmatmul.mubr.bf16.gmra.mrb[0].mxu0 %v443
        %v489 = vpop.f32.mrb[0].mxu0
        %v490 = vadd.f32 0.0, %v489
        %v491 = vpop.f32.mrb[0].mxu0
        %v492 = vadd.f32 0.0, %v491
        %v493 = vpop.f32.mrb[0].mxu0
        %v494 = vadd.f32 0.0, %v493
        %v495 = vpop.f32.mrb[0].mxu0
        %v496 = vadd.f32 0.0, %v495
        %497 = vmatprep.mubr.bf16.mxu0 0
        %498 = vmatmul.mubr.bf16.gmra.mrb[0].mxu0 %v446
        %v499 = vpop.f32.mrb[0].mxu0
        %v500 = vadd.f32 0.0, %v499
        %v501 = vpop.f32.mrb[0].mxu0
        %v502 = vadd.f32 0.0, %v501
        %v503 = vpop.f32.mrb[0].mxu0
        %v504 = vadd.f32 0.0, %v503
        %v505 = vpop.f32.mrb[0].mxu0
        %v506 = vadd.f32 0.0, %v505
        %507 = vdwg.mxu0
        %v508 = vld [vmem:[#allocation11] sm:$0xff]
        %v509 = vld [vmem:[#allocation11 + $0x8] sm:$0xff]
        %v510 = vld [vmem:[#allocation11 + $0x10] sm:$0xff]
        %v511 = vld [vmem:[#allocation11 + $0x18] sm:$0xff]
        %513 = vset.pattern.permute.xlu0 0
        %514 = vperm.xlu0 %513, %v508
        %v515 = vpop.permute.xlu0 %514
        %518 = vset.pattern.permute.xlu0 0
        %519 = vperm.xlu0 %518, %v509
        %v520 = vpop.permute.xlu0 %519
        %523 = vset.pattern.permute.xlu0 0
        %524 = vperm.xlu0 %523, %v510
        %v525 = vpop.permute.xlu0 %524
        %528 = vset.pattern.permute.xlu0 0
        %529 = vperm.xlu0 %528, %v511
        %v530 = vpop.permute.xlu0 %529
        %v532 = vmul.f32 %v490, %v515
        %v533 = vmul.f32 %v492, %v515
        %v534 = vmul.f32 %v494, %v520
        %v535 = vmul.f32 %v496, %v520
        %v536 = vmul.f32 %v500, %v525
        %v537 = vmul.f32 %v502, %v525
        %v538 = vmul.f32 %v504, %v530
        %v539 = vmul.f32 %v506, %v530
        %v540 = vld [vmem:[#allocation13] sm:$0xff]
        %v541 = vld [vmem:[#allocation13 + $0x8] sm:$0xff]
        %v542 = vld [vmem:[#allocation13 + $0x10] sm:$0xff]
        %v543 = vld [vmem:[#allocation13 + $0x18] sm:$0xff]
        %545 = vset.pattern.permute.xlu0 0
        %546 = vperm.xlu0 %545, %v540
        %v547 = vpop.permute.xlu0 %546
        %550 = vset.pattern.permute.xlu0 0
        %551 = vperm.xlu0 %550, %v541
        %v552 = vpop.permute.xlu0 %551
        %555 = vset.pattern.permute.xlu0 0
        %556 = vperm.xlu0 %555, %v542
        %v557 = vpop.permute.xlu0 %556
        %560 = vset.pattern.permute.xlu0 0
        %561 = vperm.xlu0 %560, %v543
        %v562 = vpop.permute.xlu0 %561
        %v564 = vadd.f32 %v532, %v547
        %v565 = vadd.f32 %v533, %v547
        %v566 = vadd.f32 %v534, %v552
        %v567 = vadd.f32 %v535, %v552
        %v568 = vadd.f32 %v536, %v557
        %v569 = vadd.f32 %v537, %v557
        %v570 = vadd.f32 %v538, %v562
        %v571 = vadd.f32 %v539, %v562
        %v572 = vld [vmem:[%s347] sm:$0xff]
        %v573 = vld [vmem:[%s347 + $0x8] sm:$0xff]
        %v574 = vld [vmem:[%s347 + $0x10] sm:$0xff]
        %v575 = vld [vmem:[%s347 + $0x18] sm:$0xff]
        %v576 = vld [vmem:[%s347 + $0x20] sm:$0xff]
        %v577 = vld [vmem:[%s347 + $0x28] sm:$0xff]
        %v578 = vld [vmem:[%s347 + $0x30] sm:$0xff]
        %v579 = vld [vmem:[%s347 + $0x38] sm:$0xff]
        %v580 = vadd.f32 %v564, %v572
        %v581 = vadd.f32 %v565, %v573
        %v582 = vadd.f32 %v566, %v574
        %v583 = vadd.f32 %v567, %v575
        %v584 = vadd.f32 %v568, %v576
        %v585 = vadd.f32 %v569, %v577
        %v586 = vadd.f32 %v570, %v578
        %v587 = vadd.f32 %v571, %v579
        %v588 = vmax.f32 %v580, 0.0
        %v589 = vmax.f32 %v581, 0.0
        %v590 = vmax.f32 %v582, 0.0
        %v591 = vmax.f32 %v583, 0.0
        %v592 = vmax.f32 %v584, 0.0
        %v593 = vmax.f32 %v585, 0.0
        %v594 = vmax.f32 %v586, 0.0
        %v595 = vmax.f32 %v587, 0.0
        %596 = vst [vmem:[%s402] sm:$0xff] %v588
        %597 = vst [vmem:[%s402 + $0x8] sm:$0xff] %v589
        %598 = vst [vmem:[%s402 + $0x10] sm:$0xff] %v590
        %599 = vst [vmem:[%s402 + $0x18] sm:$0xff] %v591
        %600 = vst [vmem:[%s402 + $0x20] sm:$0xff] %v592
        %601 = vst [vmem:[%s402 + $0x28] sm:$0xff] %v593
        %602 = vst [vmem:[%s402 + $0x30] sm:$0xff] %v594
        %603 = vst [vmem:[%s402 + $0x38] sm:$0xff] %v595
        %s604 = sand.u32 %s194, 1
        %s605 = scalar_lea.sflag [#allocation4], %s604
        %s606 = sand.u32 %s194, 1
        %s607 = smul.addr %s606, 64
        %s608 = scalar_lea.vmem [#allocation14], %s607
        // Predicated region
        $region77: #{bottleneck_forward.7} parent=47 // pred_check
          %p609 = pneg %p204
        $region78: #{bottleneck_forward.7} parent=47 // pred_check_branch
          %611 = sbr.rel (%p609) target = $region80
        $region79: #{bottleneck_forward.7} parent=47 // pred_region
          %s613 = ssub.s32 1024, 1024
          %614 = vsyncadd %s605, %s613
          %s615 = smul.addr %s29, 8
          %s616 = smul.addr %s615, 128
          %s617 = scalar_lea.hbm %s7, %s616
          %s618 = sshll.u32 %s608, 4
          %s619 = int_to_ptr.vmem [resolvable:$true] %s618
          %624 = dma.vmem_to_hbm [thread:$0]  %s619, 1024, %s617, %s605, 256, 256, 16
        $region80: #{bottleneck_forward.7} parent=47 // pred_fallthru
          _
      $region48: #{bottleneck_forward.7} parent=5 // pred_fallthru
        _
      %p625 = scmp.le.s32.totalorder 2, %s24
      // Predicated region
      $region81: #{bottleneck_forward.7} parent=5 // pred_check
        %p626 = pneg %p625
      $region82: #{bottleneck_forward.7} parent=5 // pred_check_branch
        %628 = sbr.rel (%p626) target = $region84
      $region83: #{bottleneck_forward.7} parent=5 // pred_region
        %s629 = ssub.s32 %s24, 2
        // Predicated region
        $region85: #{bottleneck_forward.7} parent=83 // pred_check
          %p630 = pneg %p210
        $region86: #{bottleneck_forward.7} parent=83 // pred_check_branch
          %632 = sbr.rel (%p630) target = $region88
        $region87: #{bottleneck_forward.7} parent=83 // pred_region
          %s633 = sand.u32 %s195, 1
          %s634 = scalar_lea.sflag [#allocation4], %s633
          %s635 = sand.u32 %s195, 1
          %s636 = smul.addr %s635, 64
          %s637 = scalar_lea.vmem [#allocation14], %s636
          %638 = dma.done %s634, 1024
        $region88: #{bottleneck_forward.7} parent=83 // pred_fallthru
          _
      $region84: #{bottleneck_forward.7} parent=5 // pred_fallthru
        _
    $region6: #{bottleneck_forward.7} parent=1 // loop_footer
      %s28 = sadd.s32 1, %s24
    $region7: #{bottleneck_forward.7} parent=1 // loop_footer_branch
      %23 = sbr.rel target = $region3
    $region8: #{bottleneck_forward.7} parent=1 // loop_exit
      _
    %639 = vsyncpa [#allocation3], 1
    %s640 = scalar_lea.sflag [#allocation3], 1
    %641 = vsyncpa %s640, 1
    %642 = vsyncpa [#allocation6], 1
    %s643 = scalar_lea.sflag [#allocation6], 1
    %644 = vsyncpa %s643, 1
    %645 = vsyncpa [#allocation9], 1
    %646 = vsyncpa [#allocation12], 1
    %647 = vsyncpa [#allocation4], 1
    %s648 = scalar_lea.sflag [#allocation4], 1
    %649 = vsyncpa %s648, 1

// kernel: bottleneck_forward.5
$region0: #{bottleneck_forward.5}
  #allocation0 [shape = 'u32[]', space=smem, size = 0x4, offset = 0x4, fixed_abs, tag = 'smem constant byte address 0x4 - core index']
  #allocation1 [shape = 'u32[144,128]{1,0:T(1,128)}', space=vmem, size = 0x12000, scoped, tag = 'internal scratch']
  #allocation2 [shape = 'bf16[8,290]{1,0:T(8,128)(2,1)}', space=vmem, size = 0x1800, scoped, tag = 'scratch operand']
  %s0 = inlined_call_operand.hbm [shape: bf16[2,8,256], index: 0, kind: input, shape index: {}]
  %s1 = inlined_call_operand.hbm [shape: bf16[9,8,8], index: 1, kind: input, shape index: {}]
  %s2 = inlined_call_operand.hbm [shape: f32[8,1], index: 2, kind: input, shape index: {}]
  %s3 = inlined_call_operand.hbm [shape: f32[8,1], index: 3, kind: input, shape index: {}]
  %s4 = inlined_call_operand.hbm [shape: bf16[2,8,256], index: 4, kind: output, shape index: {0}]
  %s5 = inlined_call_operand.hbm [shape: f32[2,8,1], index: 5, kind: output, shape index: {1}]
  %s6 = inlined_call_operand.hbm [shape: f32[2,8,1], index: 6, kind: output, shape index: {2}]
  %7 = xla_tuple %s4, %s5, %s6
  %s8 = sld [smem:[#allocation0]]
  $region81: #{bottleneck_forward.5} parent=0
    _
  %s10 = ssub.s32 1, %s8
  %s11 = scalar_select 0, %s10, %s8
  $region1: #{bottleneck_forward.5} parent=0
    #allocation3 [shape = 'u8[8192]{0}', space=vmem, size = 0x2000, scoped, tag = 'input window, operand 0']
    #allocation4 [shape = 's32[2]{0}', space=sflag, size = 0x8, scoped, tag = 'scoped memory for bottleneck_forward.5']
    #allocation5 [shape = 's32[2]{0}', space=sflag, size = 0x8, scoped, tag = 'scoped memory for bottleneck_forward.5']
    #allocation6 [shape = 'u8[18432]{0}', space=vmem, size = 0x4800, scoped, tag = 'input window, operand 1, single buffered']
    #allocation7 [shape = 's32[1]{0}', space=sflag, size = 0x4, scoped, tag = 'scoped memory for bottleneck_forward.5']
    #allocation8 [shape = 'u8[4096]{0}', space=vmem, size = 0x1000, scoped, tag = 'input window, operand 2, single buffered']
    #allocation9 [shape = 'u8[4096]{0}', space=vmem, size = 0x1000, scoped, tag = 'input window, operand 3, single buffered']
    #allocation10 [shape = 's32[1]{0}', space=sflag, size = 0x4, scoped, tag = 'scoped memory for bottleneck_forward.5']
    #allocation11 [shape = 'u8[8192]{0}', space=vmem, size = 0x2000, scoped, tag = 'output window, operand 0']
    #allocation12 [shape = 'u8[8192]{0}', space=vmem, size = 0x2000, scoped, tag = 'output window, operand 1']
    #allocation13 [shape = 's32[2]{0}', space=sflag, size = 0x8, scoped, tag = 'scoped memory for bottleneck_forward.5']
    #allocation14 [shape = 'u8[8192]{0}', space=vmem, size = 0x2000, scoped, tag = 'output window, operand 2']
    %12 = vsyncpa [#allocation4], 0
    %s13 = scalar_lea.sflag [#allocation4], 1
    %14 = vsyncpa %s13, 0
    %15 = vsyncpa [#allocation7], 0
    %16 = vsyncpa [#allocation10], 0
    %17 = vsyncpa [#allocation5], 0
    %s18 = scalar_lea.sflag [#allocation5], 1
    %19 = vsyncpa %s18, 0
    %20 = vsyncpa [#allocation13], 0
    %s21 = scalar_lea.sflag [#allocation13], 1
    %22 = vsyncpa %s21, 0
    loop: start=0, step=1, limit=4
    $region2: #{bottleneck_forward.5} parent=1 // loop_pre_header
      _
    $region3: #{bottleneck_forward.5} parent=1 // loop_header
      %s24 = sphi 0, %s28
      %p25 = scmp.ge.s32.totalorder %s24, 4
      %s34 = sphi 0, %s36
      %s37 = sphi 0, %s34
      %s38 = sphi 0, %s37
      %s54 = sphi 0, %s38
      %s58 = sphi 0, %s58
      %s60 = sphi 0, %s58
      %s61 = sphi 0, %s60
      %s75 = sphi 0, %s61
      %s79 = sphi 0, %s79
      %s81 = sphi 0, %s79
      %s82 = sphi 0, %s81
      %s96 = sphi 0, %s82
      %s100 = sphi 0, %s100
      %s102 = sphi 0, %s100
      %s103 = sphi 0, %s102
      %s117 = sphi 0, %s103
      %s123 = sphi 0, %s125
      %s126 = sphi 0, %s123
      %s127 = sphi 0, %s126
      %s143 = sphi 0, %s127
      %s149 = sphi 0, %s151
      %s152 = sphi 0, %s149
      %s153 = sphi 0, %s152
      %s169 = sphi 0, %s153
      %s175 = sphi 0, %s177
      %s178 = sphi 0, %s175
      %s179 = sphi 0, %s178
      %s195 = sphi 0, %s179
    $region4: #{bottleneck_forward.5} parent=1 // loop_header_branch
      %27 = sbr.rel (%p25) target = $region8
    $region5: #{bottleneck_forward.5} parent=1 // loop_body
      %s29 = ssub.s32 %s24, 1
      %s30 = ssub.s32 %s24, 2
      %s31 = sadd.s32 %s24, 1
      %s32 = ssub.s32 %s24, %s31
      %p33 = scmp.eq.s32.totalorder %s32, 0
      %s35 = sadd.s32 %s34, 1
      %s36 = scalar_select %p33, %s34, %s35
      %p39 = pneg %p33
      %p40 = scmp.eq.s32.totalorder %s24, 1
      %p41 = por %p39, %p40
      %p42 = scmp.ne.s32.totalorder %s34, %s37
      %p43 = scmp.eq.s32.totalorder %s24, 0
      %p44 = por %p42, %p43
      %p45 = scmp.ne.s32.totalorder %s34, %s37
      %p46 = scmp.eq.s32.totalorder %s29, 1
      %p47 = por %p45, %p46
      %p48 = scmp.ne.s32.totalorder %s37, %s38
      %p49 = scmp.eq.s32.totalorder %s29, 0
      %p50 = por %p48, %p49
      %p51 = scmp.ne.s32.totalorder %s37, %s38
      %p52 = scmp.eq.s32.totalorder %s30, 1
      %p53 = por %p51, %p52
      %p55 = scmp.ne.s32.totalorder %s38, %s54
      %p56 = scmp.eq.s32.totalorder %s30, 0
      %p57 = por %p55, %p56
      %s59 = sadd.s32 %s58, 1
      %p62 = scmp.eq.s32.totalorder %s24, 1
      %p63 = scmp.ne.s32.totalorder %s58, %s60
      %p64 = scmp.eq.s32.totalorder %s24, 0
      %p65 = por %p63, %p64
      %p66 = scmp.ne.s32.totalorder %s58, %s60
      %p67 = scmp.eq.s32.totalorder %s29, 1
      %p68 = por %p66, %p67
      %p69 = scmp.ne.s32.totalorder %s60, %s61
      %p70 = scmp.eq.s32.totalorder %s29, 0
      %p71 = por %p69, %p70
      %p72 = scmp.ne.s32.totalorder %s60, %s61
      %p73 = scmp.eq.s32.totalorder %s30, 1
      %p74 = por %p72, %p73
      %p76 = scmp.ne.s32.totalorder %s61, %s75
      %p77 = scmp.eq.s32.totalorder %s30, 0
      %p78 = por %p76, %p77
      %s80 = sadd.s32 %s79, 1
      %p83 = scmp.eq.s32.totalorder %s24, 1
      %p84 = scmp.ne.s32.totalorder %s79, %s81
      %p85 = scmp.eq.s32.totalorder %s24, 0
      %p86 = por %p84, %p85
      %p87 = scmp.ne.s32.totalorder %s79, %s81
      %p88 = scmp.eq.s32.totalorder %s29, 1
      %p89 = por %p87, %p88
      %p90 = scmp.ne.s32.totalorder %s81, %s82
      %p91 = scmp.eq.s32.totalorder %s29, 0
      %p92 = por %p90, %p91
      %p93 = scmp.ne.s32.totalorder %s81, %s82
      %p94 = scmp.eq.s32.totalorder %s30, 1
      %p95 = por %p93, %p94
      %p97 = scmp.ne.s32.totalorder %s82, %s96
      %p98 = scmp.eq.s32.totalorder %s30, 0
      %p99 = por %p97, %p98
      %s101 = sadd.s32 %s100, 1
      %p104 = scmp.eq.s32.totalorder %s24, 1
      %p105 = scmp.ne.s32.totalorder %s100, %s102
      %p106 = scmp.eq.s32.totalorder %s24, 0
      %p107 = por %p105, %p106
      %p108 = scmp.ne.s32.totalorder %s100, %s102
      %p109 = scmp.eq.s32.totalorder %s29, 1
      %p110 = por %p108, %p109
      %p111 = scmp.ne.s32.totalorder %s102, %s103
      %p112 = scmp.eq.s32.totalorder %s29, 0
      %p113 = por %p111, %p112
      %p114 = scmp.ne.s32.totalorder %s102, %s103
      %p115 = scmp.eq.s32.totalorder %s30, 1
      %p116 = por %p114, %p115
      %p118 = scmp.ne.s32.totalorder %s103, %s117
      %p119 = scmp.eq.s32.totalorder %s30, 0
      %p120 = por %p118, %p119
      %s121 = ssub.s32 %s24, %s31
      %p122 = scmp.eq.s32.totalorder %s121, 0
      %s124 = sadd.s32 %s123, 1
      %s125 = scalar_select %p122, %s123, %s124
      %p128 = pneg %p122
      %p129 = scmp.eq.s32.totalorder %s24, 1
      %p130 = por %p128, %p129
      %p131 = scmp.ne.s32.totalorder %s123, %s126
      %p132 = scmp.eq.s32.totalorder %s24, 0
      %p133 = por %p131, %p132
      %p134 = scmp.ne.s32.totalorder %s123, %s126
      %p135 = scmp.eq.s32.totalorder %s29, 1
      %p136 = por %p134, %p135
      %p137 = scmp.ne.s32.totalorder %s126, %s127
      %p138 = scmp.eq.s32.totalorder %s29, 0
      %p139 = por %p137, %p138
      %p140 = scmp.ne.s32.totalorder %s126, %s127
      %p141 = scmp.eq.s32.totalorder %s30, 1
      %p142 = por %p140, %p141
      %p144 = scmp.ne.s32.totalorder %s127, %s143
      %p145 = scmp.eq.s32.totalorder %s30, 0
      %p146 = por %p144, %p145
      %s147 = ssub.s32 %s24, %s31
      %p148 = scmp.eq.s32.totalorder %s147, 0
      %s150 = sadd.s32 %s149, 1
      %s151 = scalar_select %p148, %s149, %s150
      %p154 = pneg %p148
      %p155 = scmp.eq.s32.totalorder %s24, 1
      %p156 = por %p154, %p155
      %p157 = scmp.ne.s32.totalorder %s149, %s152
      %p158 = scmp.eq.s32.totalorder %s24, 0
      %p159 = por %p157, %p158
      %p160 = scmp.ne.s32.totalorder %s149, %s152
      %p161 = scmp.eq.s32.totalorder %s29, 1
      %p162 = por %p160, %p161
      %p163 = scmp.ne.s32.totalorder %s152, %s153
      %p164 = scmp.eq.s32.totalorder %s29, 0
      %p165 = por %p163, %p164
      %p166 = scmp.ne.s32.totalorder %s152, %s153
      %p167 = scmp.eq.s32.totalorder %s30, 1
      %p168 = por %p166, %p167
      %p170 = scmp.ne.s32.totalorder %s153, %s169
      %p171 = scmp.eq.s32.totalorder %s30, 0
      %p172 = por %p170, %p171
      %s173 = ssub.s32 %s24, %s31
      %p174 = scmp.eq.s32.totalorder %s173, 0
      %s176 = sadd.s32 %s175, 1
      %s177 = scalar_select %p174, %s175, %s176
      %p180 = pneg %p174
      %p181 = scmp.eq.s32.totalorder %s24, 1
      %p182 = por %p180, %p181
      %p183 = scmp.ne.s32.totalorder %s175, %s178
      %p184 = scmp.eq.s32.totalorder %s24, 0
      %p185 = por %p183, %p184
      %p186 = scmp.ne.s32.totalorder %s175, %s178
      %p187 = scmp.eq.s32.totalorder %s29, 1
      %p188 = por %p186, %p187
      %p189 = scmp.ne.s32.totalorder %s178, %s179
      %p190 = scmp.eq.s32.totalorder %s29, 0
      %p191 = por %p189, %p190
      %p192 = scmp.ne.s32.totalorder %s178, %s179
      %p193 = scmp.eq.s32.totalorder %s30, 1
      %p194 = por %p192, %p193
      %p196 = scmp.ne.s32.totalorder %s179, %s195
      %p197 = scmp.eq.s32.totalorder %s30, 0
      %p198 = por %p196, %p197
      %p199 = scmp.le.s32.totalorder 1, %s24
      %p200 = scmp.lt.s32.totalorder %s24, 3
      %p201 = pnand %p199, %p200
      %p202 = pneg %p201
      // Predicated region
      $region9: #{bottleneck_forward.5} parent=5 // pred_check
        _
      $region10: #{bottleneck_forward.5} parent=5 // pred_check_branch
        %204 = sbr.rel (%p201) target = $region12
      $region11: #{bottleneck_forward.5} parent=5 // pred_region
        %s205 = ssub.s32 %s24, 1
        // Predicated region
        $region13: #{bottleneck_forward.5} parent=11 // pred_check
          %p206 = pneg %p71
        $region14: #{bottleneck_forward.5} parent=11 // pred_check_branch
          %208 = sbr.rel (%p206) target = $region16
        $region15: #{bottleneck_forward.5} parent=11 // pred_region
          %s210 = ssub.s32 576, 576
          %211 = vsyncadd [#allocation7], %s210
          %s212 = sshll.u32 [#allocation6], 4
          %s213 = int_to_ptr.vmem [resolvable:$true] %s212
          %218 = dma.hbm_to_vmem [thread:$0]  %s1, 576, %s213, [#allocation7], 64, 64, 4
        $region16: #{bottleneck_forward.5} parent=11 // pred_fallthru
          _
        // Predicated region
        $region17: #{bottleneck_forward.5} parent=11 // pred_check
          %p219 = pneg %p92
        $region18: #{bottleneck_forward.5} parent=11 // pred_check_branch
          %221 = sbr.rel (%p219) target = $region20
        $region19: #{bottleneck_forward.5} parent=11 // pred_region
          %s223 = ssub.s32 128, 128
          %224 = vsyncadd [#allocation7], %s223
          %s226 = sshll.u32 [#allocation8], 4
          %s227 = int_to_ptr.vmem [resolvable:$true] %s226
          %229 = dma.hbm_to_vmem [thread:$0]  %s2, 128, %s227, [#allocation7]
        $region20: #{bottleneck_forward.5} parent=11 // pred_fallthru
          _
        // Predicated region
        $region21: #{bottleneck_forward.5} parent=11 // pred_check
          %p230 = pneg %p113
        $region22: #{bottleneck_forward.5} parent=11 // pred_check_branch
          %232 = sbr.rel (%p230) target = $region24
        $region23: #{bottleneck_forward.5} parent=11 // pred_region
          %s234 = ssub.s32 128, 128
          %235 = vsyncadd [#allocation10], %s234
          %s237 = sshll.u32 [#allocation9], 4
          %s238 = int_to_ptr.vmem [resolvable:$true] %s237
          %240 = dma.hbm_to_vmem [thread:$0]  %s3, 128, %s238, [#allocation10]
        $region24: #{bottleneck_forward.5} parent=11 // pred_fallthru
          _
      $region12: #{bottleneck_forward.5} parent=5 // pred_fallthru
        _
      %p241 = scmp.lt.s32.totalorder %s24, 2
      // Predicated region
      $region25: #{bottleneck_forward.5} parent=5 // pred_check
        %p242 = pneg %p241
      $region26: #{bottleneck_forward.5} parent=5 // pred_check_branch
        %244 = sbr.rel (%p242) target = $region28
      $region27: #{bottleneck_forward.5} parent=5 // pred_region
        // Predicated region
        $region29: #{bottleneck_forward.5} parent=27 // pred_check
          %p245 = pneg %p44
        $region30: #{bottleneck_forward.5} parent=27 // pred_check_branch
          %247 = sbr.rel (%p245) target = $region32
        $region31: #{bottleneck_forward.5} parent=27 // pred_region
          %s248 = sand.u32 %s34, 1
          %s249 = scalar_lea.sflag [#allocation4], %s248
          %s250 = sand.u32 %s34, 1
          %s251 = smul.addr %s250, 8
          %s252 = scalar_lea.vmem [#allocation3], %s251
          %s254 = ssub.s32 128, 128
          %255 = vsyncadd %s249, %s254
          %s256 = smul.addr %s24, 2
          %s257 = smul.addr %s256, 64
          %s258 = scalar_lea.hbm %s0, %s257
          %s260 = sshll.u32 %s252, 4
          %s261 = int_to_ptr.vmem [resolvable:$true] %s260
          %263 = dma.hbm_to_vmem [thread:$0]  %s258, 128, %s261, %s249
        $region32: #{bottleneck_forward.5} parent=27 // pred_fallthru
          _
      $region28: #{bottleneck_forward.5} parent=5 // pred_fallthru
        _
      %p264 = scmp.le.s32.totalorder 1, %s24
      %p265 = scmp.lt.s32.totalorder %s24, 3
      %p266 = pnand %p264, %p265
      %p267 = pneg %p266
      // Predicated region
      $region33: #{bottleneck_forward.5} parent=5 // pred_check
        _
      $region34: #{bottleneck_forward.5} parent=5 // pred_check_branch
        %269 = sbr.rel (%p266) target = $region36
      $region35: #{bottleneck_forward.5} parent=5 // pred_region
        %s270 = ssub.s32 %s24, 1
        %s271 = sand.u32 %s37, 1
        %s272 = scalar_lea.sflag [#allocation4], %s271
        %s273 = sand.u32 %s37, 1
        %s274 = smul.addr %s273, 8
        %s275 = scalar_lea.vmem [#allocation3], %s274
        // Predicated region
        $region37: #{bottleneck_forward.5} parent=35 // pred_check
          %p276 = pneg %p50
        $region38: #{bottleneck_forward.5} parent=35 // pred_check_branch
          %278 = sbr.rel (%p276) target = $region40
        $region39: #{bottleneck_forward.5} parent=35 // pred_region
          %279 = dma.done %s272, 128
        $region40: #{bottleneck_forward.5} parent=35 // pred_fallthru
          _
        // Predicated region
        $region41: #{bottleneck_forward.5} parent=35 // pred_check
          %p280 = pneg %p71
        $region42: #{bottleneck_forward.5} parent=35 // pred_check_branch
          %282 = sbr.rel (%p280) target = $region44
        $region43: #{bottleneck_forward.5} parent=35 // pred_region
          %283 = dma.done [#allocation7], 576
        $region44: #{bottleneck_forward.5} parent=35 // pred_fallthru
          _
        // Predicated region
        $region45: #{bottleneck_forward.5} parent=35 // pred_check
          %p284 = pneg %p92
        $region46: #{bottleneck_forward.5} parent=35 // pred_check_branch
          %286 = sbr.rel (%p284) target = $region48
        $region47: #{bottleneck_forward.5} parent=35 // pred_region
          %287 = dma.done [#allocation7], 128
        $region48: #{bottleneck_forward.5} parent=35 // pred_fallthru
          _
        // Predicated region
        $region49: #{bottleneck_forward.5} parent=35 // pred_check
          %p288 = pneg %p113
        $region50: #{bottleneck_forward.5} parent=35 // pred_check_branch
          %290 = sbr.rel (%p288) target = $region52
        $region51: #{bottleneck_forward.5} parent=35 // pred_region
          %291 = dma.done [#allocation10], 128
        $region52: #{bottleneck_forward.5} parent=35 // pred_fallthru
          _
        %s292 = sand.u32 %s37, 1
        %s293 = scalar_lea.sflag [#allocation4], %s292
        %s294 = sand.u32 %s37, 1
        %s295 = smul.addr %s294, 8
        %s296 = scalar_lea.vmem [#allocation3], %s295
        %p297 = pneg %p50
        %p298 = pneg %p47
        %p299 = pneg %p71
        %p300 = pneg %p68
        %p301 = pneg %p92
        %p302 = pneg %p89
        %p303 = pneg %p113
        %p304 = pneg %p110
        %p305 = pneg %p139
        %p306 = pneg %p136
        %s307 = sand.u32 %s126, 1
        %s308 = scalar_lea.sflag [#allocation5], %s307
        %s309 = sand.u32 %s126, 1
        %s310 = smul.addr %s309, 8
        %s311 = scalar_lea.vmem [#allocation11], %s310
        %p312 = pneg %p165
        %p313 = pneg %p162
        %s314 = sand.u32 %s29, 1
        %s315 = scalar_lea.sflag [#allocation13], %s314
        %s316 = sand.u32 %s152, 1
        %s317 = smul.addr %s316, 8
        %s318 = scalar_lea.vmem [#allocation12], %s317
        %p319 = pneg %p191
        %p320 = pneg %p188
        %s321 = sand.u32 %s29, 1
        %s322 = scalar_lea.sflag [#allocation13], %s321
        %s323 = sand.u32 %s178, 1
        %s324 = smul.addr %s323, 8
        %s325 = scalar_lea.vmem [#allocation14], %s324
        %v327 = vld [vmem:[%s275] sm:$0xff]
        %v328 = vunpack.c.l.bf16 %v327
        %v329 = vunpack.c.h.bf16 %v327
        %v330 = vld [vmem:[#allocation8] sm:$0xff]
        %332 = vset.pattern.permute.xlu0 0
        %333 = vperm.xlu0 %332, %v330
        %v334 = vpop.permute.xlu0 %333
        %v336 = vmul.f32 %v328, %v334
        %v337 = vmul.f32 %v329, %v334
        %v338 = vld [vmem:[#allocation9] sm:$0xff]
        %340 = vset.pattern.permute.xlu0 0
        %341 = vperm.xlu0 %340, %v338
        %v342 = vpop.permute.xlu0 %341
        %v344 = vadd.f32 %v336, %v342
        %v345 = vadd.f32 %v337, %v342
        %v346 = vmax.f32 %v344, 0.0
        %v347 = vmax.f32 %v345, 0.0
        %vm348 = vcmask 134144
        %349 = vst.msk [vmem:[#allocation2] sm:$0xf] %vm348, 0
        %vm350 = vcmask 273544
        %351 = vst.msk [vmem:[#allocation2 + $0x8] sm:$0xf] %vm350, 0
        %v352 = vpack.c.bf16 %v346, %v346
        %v353 = vpack.c.bf16 %v347, %v347
        %v356 = vunpack.c.l.b16 %v352
        %v357 = vunpack.c.l.b16 %v353
        %v358 = vpack.c.b16 %v357, %v356
        %359 = vrot.lane.b32.xlu0 %v358, 17
        %v360 = vpop.permute.xlu0 %359
        %v361 = vrot.slane %v360, 4
        %vm362 = vcmask 138240
        %v363 = vsel %vm362, %v361, %v360
        %vm366 = vcmask 1043592
        %vm367 = vcmask 1047556
        %vm368 = vmor %vm367, %vm366
        %369 = vst.msk [vmem:[#allocation2] sm:$0xff] %vm368, %v363
        %370 = vst.msk [vmem:[#allocation2 + $0x8] sm:$0xf] %vm348, %v361
        %v371 = vlaneseq
        %v372 = vand.u32 %v371, 127
        %v373 = vadd.s32 %v372, 128
        %vm374 = vcmp.lt.s32.totalorder %v372, 0
        %v375 = vsub.s32 0, %v372
        %v376 = vsel %vm374, %v375, %v372
        %v377 = vshrl.u32 %v376, 4
        %v378 = vand.u32 %v376, 15
        %v379 = vsub.s32 0, %v378
        %v380 = vsel %vm374, %v379, %v378
        %vm381 = vcmp.lt.s32.totalorder %v373, 0
        %v382 = vsub.s32 0, %v373
        %v383 = vsel %vm381, %v382, %v373
        %v384 = vshrl.u32 %v383, 4
        %v385 = vand.u32 %v383, 15
        %v386 = vsub.s32 0, %v385
        %v387 = vsel %vm381, %v386, %v385
        %vm388 = vcmp.ne.s32.totalorder %v380, 0
        %vm389 = vcmp.ne.s32.totalorder %v387, 0
        %vm390 = vcmp.lt.s32.totalorder %v380, 0
        %vm391 = vcmp.lt.s32.totalorder %v387, 0
        %vm392 = vmand %vm390, %vm388
        %vm393 = vmand %vm391, %vm389
        %v394 = vadd.s32 %v380, 16
        %v395 = vadd.s32 %v387, 16
        %v396 = vsel %vm392, %v394, %v380
        %v397 = vsel %vm393, %v395, %v387
        %v398 = vld [vmem:[#allocation6] sm:$0xf]
        %v399 = vld [vmem:[#allocation2] sm:$0xff]
        %s400 = scalar_lea.vmem [#allocation6], 12
        %v401 = vld [vmem:[%s400] sm:$0xf]
        %v402 = vld [vmem:[#allocation2 + $0x8] sm:$0xf]
        %v405 = vunpack.c.l.b16 %v399
        %v406 = vunpack.c.h.b16 %v399
        %v407 = vunpack.c.l.b16 %v402
        %v408 = vpack.c.b16 %v405, %v405
        %v409 = vpack.c.b16 %v406, %v406
        %v410 = vpack.c.b16 %v407, %v407
        %411 = vrot.lane.b32.xlu0 %v408, 112
        %v412 = vpop.permute.xlu0 %411
        %413 = vrot.lane.b32.xlu0 %v409, 112
        %v414 = vpop.permute.xlu0 %413
        %415 = vrot.lane.b32.xlu0 %v410, 112
        %v416 = vpop.permute.xlu0 %415
        %vm417 = vcmask 916480
        %v418 = vsel %vm417, %v412, %v414
        %v419 = vsel %vm417, %v414, %v416
        %vm420 = vcmask 64512
        %v422 = vsel %vm420, %v401, 0
        %vm424 = vcmask 1043456
        %v426 = vsel %vm424, %v418, 0
        %v429 = vsel %vm424, %v419, 0
        %431 = vmatprep.subr.bf16.mxu0 %v429
        %432 = vmatpush1.bf16.msra.mxu0 %v426
        %433 = vmatprep.subr.bf16.mxu0 0
        %434 = vmatpush1.bf16.msra.mxu0 0
        %435 = vmatprep.subr.bf16.mxu0 0
        %436 = vmatpush1.bf16.msra.mxu0 0
        %437 = vmatprep.subr.bf16.mxu0 0
        %438 = vmatpush1.bf16.msra.mxu0 0
        %439 = vmatprep.subr.bf16.mxu0 0
        %440 = vmatpush1.bf16.msra.mxu0 0
        %441 = vmatprep.subr.bf16.mxu0 0
        %442 = vmatpush1.bf16.msra.mxu0 0
        %443 = vmatprep.subr.bf16.mxu0 0
        %444 = vmatpush1.bf16.msra.mxu0 0
        %445 = vmatprep.subr.bf16.mxu0 0
        %446 = vmatpush1.bf16.msra.mxu0 0
        %447 = vmatprep.subr.bf16.mxu0 0
        %448 = vmatpush1.bf16.msra.mxu0 0
        %449 = vmatprep.subr.bf16.mxu0 0
        %450 = vmatpush1.bf16.msra.mxu0 0
        %451 = vmatprep.subr.bf16.mxu0 0
        %452 = vmatpush1.bf16.msra.mxu0 0
        %453 = vmatprep.subr.bf16.mxu0 0
        %454 = vmatpush1.bf16.msra.mxu0 0
        %455 = vmatprep.subr.bf16.mxu0 0
        %456 = vmatpush1.bf16.msra.mxu0 0
        %457 = vmatprep.subr.bf16.mxu0 0
        %458 = vmatpush1.bf16.msra.mxu0 0
        %459 = vmatprep.subr.bf16.mxu0 0
        %460 = vmatpush1.bf16.msra.mxu0 0
        %461 = vmatprep.subr.bf16.mxu0 0
        %462 = vmatpush1.bf16.msra.mxu0 0
        %463 = vmatprep.mubr.bf16.mxu0 0
        %464 = vmatmul.mubr.bf16.gmra.mrb[0].mxu0 %v422
        %v465 = vpop.f32.mrb[0].mxu0
        %v466 = vadd.f32 0.0, %v465
        %v467 = vpop.f32.mrb[0].mxu0
        %v468 = vadd.f32 0.0, %v467
        %v469 = vpop.f32.mrb[0].mxu0
        %v470 = vpop.f32.mrb[0].mxu0
        %471 = vdwg.mxu0
        %v473 = vsel %vm420, %v398, 0
        %v476 = vsel %vm424, %v408, 0
        %v479 = vsel %vm424, %v409, 0
        %481 = vmatprep.subr.bf16.mxu0 %v479
        %482 = vmatpush1.bf16.msra.mxu0 %v476
        %483 = vmatprep.subr.bf16.mxu0 0
        %484 = vmatpush1.bf16.msra.mxu0 0
        %485 = vmatprep.subr.bf16.mxu0 0
        %486 = vmatpush1.bf16.msra.mxu0 0
        %487 = vmatprep.subr.bf16.mxu0 0
        %488 = vmatpush1.bf16.msra.mxu0 0
        %489 = vmatprep.subr.bf16.mxu0 0
        %490 = vmatpush1.bf16.msra.mxu0 0
        %491 = vmatprep.subr.bf16.mxu0 0
        %492 = vmatpush1.bf16.msra.mxu0 0
        %493 = vmatprep.subr.bf16.mxu0 0
        %494 = vmatpush1.bf16.msra.mxu0 0
        %495 = vmatprep.subr.bf16.mxu0 0
        %496 = vmatpush1.bf16.msra.mxu0 0
        %497 = vmatprep.subr.bf16.mxu0 0
        %498 = vmatpush1.bf16.msra.mxu0 0
        %499 = vmatprep.subr.bf16.mxu0 0
        %500 = vmatpush1.bf16.msra.mxu0 0
        %501 = vmatprep.subr.bf16.mxu0 0
        %502 = vmatpush1.bf16.msra.mxu0 0
        %503 = vmatprep.subr.bf16.mxu0 0
        %504 = vmatpush1.bf16.msra.mxu0 0
        %505 = vmatprep.subr.bf16.mxu0 0
        %506 = vmatpush1.bf16.msra.mxu0 0
        %507 = vmatprep.subr.bf16.mxu0 0
        %508 = vmatpush1.bf16.msra.mxu0 0
        %509 = vmatprep.subr.bf16.mxu0 0
        %510 = vmatpush1.bf16.msra.mxu0 0
        %511 = vmatprep.subr.bf16.mxu0 0
        %512 = vmatpush1.bf16.msra.mxu0 0
        %513 = vmatprep.mubr.bf16.mxu0 0
        %514 = vmatmul.mubr.bf16.gmra.mrb[0].mxu0 %v473
        %v515 = vpop.f32.mrb[0].mxu0
        %v516 = vadd.f32 %v466, %v515
        %v517 = vpop.f32.mrb[0].mxu0
        %v518 = vadd.f32 %v468, %v517
        %v519 = vpop.f32.mrb[0].mxu0
        %v520 = vpop.f32.mrb[0].mxu0
        %521 = vdwg.mxu0
        %s522 = scalar_lea.vmem [#allocation6], 24
        %v523 = vld [vmem:[%s522] sm:$0xf]
        %524 = vrot.lane.b32.xlu0 %v408, 96
        %v525 = vpop.permute.xlu0 %524
        %526 = vrot.lane.b32.xlu0 %v409, 96
        %v527 = vpop.permute.xlu0 %526
        %528 = vrot.lane.b32.xlu0 %v410, 96
        %v529 = vpop.permute.xlu0 %528
        %vm530 = vcmask 785408
        %v531 = vsel %vm530, %v525, %v527
        %v532 = vsel %vm530, %v527, %v529
        %v534 = vsel %vm420, %v523, 0
        %v537 = vsel %vm424, %v531, 0
        %v540 = vsel %vm424, %v532, 0
        %542 = vmatprep.subr.bf16.mxu0 %v540
        %543 = vmatpush1.bf16.msra.mxu0 %v537
        %544 = vmatprep.subr.bf16.mxu0 0
        %545 = vmatpush1.bf16.msra.mxu0 0
        %546 = vmatprep.subr.bf16.mxu0 0
        %547 = vmatpush1.bf16.msra.mxu0 0
        %548 = vmatprep.subr.bf16.mxu0 0
        %549 = vmatpush1.bf16.msra.mxu0 0
        %550 = vmatprep.subr.bf16.mxu0 0
        %551 = vmatpush1.bf16.msra.mxu0 0
        %552 = vmatprep.subr.bf16.mxu0 0
        %553 = vmatpush1.bf16.msra.mxu0 0
        %554 = vmatprep.subr.bf16.mxu0 0
        %555 = vmatpush1.bf16.msra.mxu0 0
        %556 = vmatprep.subr.bf16.mxu0 0
        %557 = vmatpush1.bf16.msra.mxu0 0
        %558 = vmatprep.subr.bf16.mxu0 0
        %559 = vmatpush1.bf16.msra.mxu0 0
        %560 = vmatprep.subr.bf16.mxu0 0
        %561 = vmatpush1.bf16.msra.mxu0 0
        %562 = vmatprep.subr.bf16.mxu0 0
        %563 = vmatpush1.bf16.msra.mxu0 0
        %564 = vmatprep.subr.bf16.mxu0 0
        %565 = vmatpush1.bf16.msra.mxu0 0
        %566 = vmatprep.subr.bf16.mxu0 0
        %567 = vmatpush1.bf16.msra.mxu0 0
        %568 = vmatprep.subr.bf16.mxu0 0
        %569 = vmatpush1.bf16.msra.mxu0 0
        %570 = vmatprep.subr.bf16.mxu0 0
        %571 = vmatpush1.bf16.msra.mxu0 0
        %572 = vmatprep.subr.bf16.mxu0 0
        %573 = vmatpush1.bf16.msra.mxu0 0
        %574 = vmatprep.mubr.bf16.mxu0 0
        %575 = vmatmul.mubr.bf16.gmra.mrb[0].mxu0 %v534
        %v576 = vpop.f32.mrb[0].mxu0
        %v577 = vadd.f32 0.0, %v576
        %v578 = vpop.f32.mrb[0].mxu0
        %v579 = vadd.f32 0.0, %v578
        %v580 = vpop.f32.mrb[0].mxu0
        %v581 = vpop.f32.mrb[0].mxu0
        %582 = vdwg.mxu0
        %v583 = vadd.f32 %v516, %v577
        %v584 = vadd.f32 %v518, %v579
        %vm585 = vcmp.ge.s32.totalorder %v396, 1
        %vm586 = vcmp.ge.s32.totalorder %v397, 1
        %v587 = vsel %vm585, 1, 0
        %v588 = vsel %vm586, 1, 0
        %vm589 = vcmp.eq.s32.totalorder %v587, 1
        %vm590 = vcmp.eq.s32.totalorder %v588, 1
        %v591 = vsel %vm589, %v583, 0.0
        %v592 = vsel %vm590, %v584, 0.0
        %v593 = vadd.f32 %v591, 0.0
        %v594 = vadd.f32 %v592, 0.0
        %s595 = scalar_lea.vmem [#allocation6], 4
        %v596 = vld [vmem:[%s595] sm:$0xf]
        %s597 = scalar_lea.vmem [#allocation6], 16
        %v598 = vld [vmem:[%s597] sm:$0xf]
        %599 = vrot.lane.b32.xlu0 %v408, 111
        %v600 = vpop.permute.xlu0 %599
        %601 = vrot.lane.b32.xlu0 %v409, 111
        %v602 = vpop.permute.xlu0 %601
        %603 = vrot.lane.b32.xlu0 %v410, 111
        %v604 = vpop.permute.xlu0 %603
        %vm605 = vcmask 908288
        %v606 = vsel %vm605, %v600, %v602
        %v607 = vsel %vm605, %v602, %v604
        %v609 = vsel %vm420, %v598, 0
        %v612 = vsel %vm424, %v606, 0
        %v615 = vsel %vm424, %v607, 0
        %617 = vmatprep.subr.bf16.mxu0 %v615
        %618 = vmatpush1.bf16.msra.mxu0 %v612
        %619 = vmatprep.subr.bf16.mxu0 0
        %620 = vmatpush1.bf16.msra.mxu0 0
        %621 = vmatprep.subr.bf16.mxu0 0
        %622 = vmatpush1.bf16.msra.mxu0 0
        %623 = vmatprep.subr.bf16.mxu0 0
        %624 = vmatpush1.bf16.msra.mxu0 0
        %625 = vmatprep.subr.bf16.mxu0 0
        %626 = vmatpush1.bf16.msra.mxu0 0
        %627 = vmatprep.subr.bf16.mxu0 0
        %628 = vmatpush1.bf16.msra.mxu0 0
        %629 = vmatprep.subr.bf16.mxu0 0
        %630 = vmatpush1.bf16.msra.mxu0 0
        %631 = vmatprep.subr.bf16.mxu0 0
        %632 = vmatpush1.bf16.msra.mxu0 0
        %633 = vmatprep.subr.bf16.mxu0 0
        %634 = vmatpush1.bf16.msra.mxu0 0
        %635 = vmatprep.subr.bf16.mxu0 0
        %636 = vmatpush1.bf16.msra.mxu0 0
        %637 = vmatprep.subr.bf16.mxu0 0
        %638 = vmatpush1.bf16.msra.mxu0 0
        %639 = vmatprep.subr.bf16.mxu0 0
        %640 = vmatpush1.bf16.msra.mxu0 0
        %641 = vmatprep.subr.bf16.mxu0 0
        %642 = vmatpush1.bf16.msra.mxu0 0
        %643 = vmatprep.subr.bf16.mxu0 0
        %644 = vmatpush1.bf16.msra.mxu0 0
        %645 = vmatprep.subr.bf16.mxu0 0
        %646 = vmatpush1.bf16.msra.mxu0 0
        %647 = vmatprep.subr.bf16.mxu0 0
        %648 = vmatpush1.bf16.msra.mxu0 0
        %649 = vmatprep.mubr.bf16.mxu0 0
        %650 = vmatmul.mubr.bf16.gmra.mrb[0].mxu0 %v609
        %v651 = vpop.f32.mrb[0].mxu0
        %v652 = vadd.f32 0.0, %v651
        %v653 = vpop.f32.mrb[0].mxu0
        %v654 = vadd.f32 0.0, %v653
        %v655 = vpop.f32.mrb[0].mxu0
        %v656 = vpop.f32.mrb[0].mxu0
        %657 = vdwg.mxu0
        %658 = vrot.lane.b32.xlu0 %v408, 127
        %v659 = vpop.permute.xlu0 %658
        %660 = vrot.lane.b32.xlu0 %v409, 127
        %v661 = vpop.permute.xlu0 %660
        %662 = vrot.lane.b32.xlu0 %v410, 127
        %v663 = vpop.permute.xlu0 %662
        %vm664 = vcmask 1039360
        %v665 = vsel %vm664, %v659, %v661
        %v666 = vsel %vm664, %v661, %v663
        %v668 = vsel %vm420, %v596, 0
        %v671 = vsel %vm424, %v665, 0
        %v674 = vsel %vm424, %v666, 0
        %676 = vmatprep.subr.bf16.mxu0 %v674
        %677 = vmatpush1.bf16.msra.mxu0 %v671
        %678 = vmatprep.subr.bf16.mxu0 0
        %679 = vmatpush1.bf16.msra.mxu0 0
        %680 = vmatprep.subr.bf16.mxu0 0
        %681 = vmatpush1.bf16.msra.mxu0 0
        %682 = vmatprep.subr.bf16.mxu0 0
        %683 = vmatpush1.bf16.msra.mxu0 0
        %684 = vmatprep.subr.bf16.mxu0 0
        %685 = vmatpush1.bf16.msra.mxu0 0
        %686 = vmatprep.subr.bf16.mxu0 0
        %687 = vmatpush1.bf16.msra.mxu0 0
        %688 = vmatprep.subr.bf16.mxu0 0
        %689 = vmatpush1.bf16.msra.mxu0 0
        %690 = vmatprep.subr.bf16.mxu0 0
        %691 = vmatpush1.bf16.msra.mxu0 0
        %692 = vmatprep.subr.bf16.mxu0 0
        %693 = vmatpush1.bf16.msra.mxu0 0
        %694 = vmatprep.subr.bf16.mxu0 0
        %695 = vmatpush1.bf16.msra.mxu0 0
        %696 = vmatprep.subr.bf16.mxu0 0
        %697 = vmatpush1.bf16.msra.mxu0 0
        %698 = vmatprep.subr.bf16.mxu0 0
        %699 = vmatpush1.bf16.msra.mxu0 0
        %700 = vmatprep.subr.bf16.mxu0 0
        %701 = vmatpush1.bf16.msra.mxu0 0
        %702 = vmatprep.subr.bf16.mxu0 0
        %703 = vmatpush1.bf16.msra.mxu0 0
        %704 = vmatprep.subr.bf16.mxu0 0
        %705 = vmatpush1.bf16.msra.mxu0 0
        %706 = vmatprep.subr.bf16.mxu0 0
        %707 = vmatpush1.bf16.msra.mxu0 0
        %708 = vmatprep.mubr.bf16.mxu0 0
        %709 = vmatmul.mubr.bf16.gmra.mrb[0].mxu0 %v668
        %v710 = vpop.f32.mrb[0].mxu0
        %v711 = vadd.f32 %v652, %v710
        %v712 = vpop.f32.mrb[0].mxu0
        %v713 = vadd.f32 %v654, %v712
        %v714 = vpop.f32.mrb[0].mxu0
        %v715 = vpop.f32.mrb[0].mxu0
        %716 = vdwg.mxu0
        %s717 = scalar_lea.vmem [#allocation6], 28
        %v718 = vld [vmem:[%s717] sm:$0xf]
        %719 = vrot.lane.b32.xlu0 %v408, 95
        %v720 = vpop.permute.xlu0 %719
        %721 = vrot.lane.b32.xlu0 %v409, 95
        %v722 = vpop.permute.xlu0 %721
        %723 = vrot.lane.b32.xlu0 %v410, 95
        %v724 = vpop.permute.xlu0 %723
        %vm725 = vcmask 777216
        %v726 = vsel %vm725, %v720, %v722
        %v727 = vsel %vm725, %v722, %v724
        %v729 = vsel %vm420, %v718, 0
        %v732 = vsel %vm424, %v726, 0
        %v735 = vsel %vm424, %v727, 0
        %737 = vmatprep.subr.bf16.mxu0 %v735
        %738 = vmatpush1.bf16.msra.mxu0 %v732
        %739 = vmatprep.subr.bf16.mxu0 0
        %740 = vmatpush1.bf16.msra.mxu0 0
        %741 = vmatprep.subr.bf16.mxu0 0
        %742 = vmatpush1.bf16.msra.mxu0 0
        %743 = vmatprep.subr.bf16.mxu0 0
        %744 = vmatpush1.bf16.msra.mxu0 0
        %745 = vmatprep.subr.bf16.mxu0 0
        %746 = vmatpush1.bf16.msra.mxu0 0
        %747 = vmatprep.subr.bf16.mxu0 0
        %748 = vmatpush1.bf16.msra.mxu0 0
        %749 = vmatprep.subr.bf16.mxu0 0
        %750 = vmatpush1.bf16.msra.mxu0 0
        %751 = vmatprep.subr.bf16.mxu0 0
        %752 = vmatpush1.bf16.msra.mxu0 0
        %753 = vmatprep.subr.bf16.mxu0 0
        %754 = vmatpush1.bf16.msra.mxu0 0
        %755 = vmatprep.subr.bf16.mxu0 0
        %756 = vmatpush1.bf16.msra.mxu0 0
        %757 = vmatprep.subr.bf16.mxu0 0
        %758 = vmatpush1.bf16.msra.mxu0 0
        %759 = vmatprep.subr.bf16.mxu0 0
        %760 = vmatpush1.bf16.msra.mxu0 0
        %761 = vmatprep.subr.bf16.mxu0 0
        %762 = vmatpush1.bf16.msra.mxu0 0
        %763 = vmatprep.subr.bf16.mxu0 0
        %764 = vmatpush1.bf16.msra.mxu0 0
        %765 = vmatprep.subr.bf16.mxu0 0
        %766 = vmatpush1.bf16.msra.mxu0 0
        %767 = vmatprep.subr.bf16.mxu0 0
        %768 = vmatpush1.bf16.msra.mxu0 0
        %769 = vmatprep.mubr.bf16.mxu0 0
        %770 = vmatmul.mubr.bf16.gmra.mrb[0].mxu0 %v729
        %v771 = vpop.f32.mrb[0].mxu0
        %v772 = vadd.f32 0.0, %v771
        %v773 = vpop.f32.mrb[0].mxu0
        %v774 = vadd.f32 0.0, %v773
        %v775 = vpop.f32.mrb[0].mxu0
        %v776 = vpop.f32.mrb[0].mxu0
        %777 = vdwg.mxu0
        %v778 = vadd.f32 %v711, %v772
        %v779 = vadd.f32 %v713, %v774
        %v780 = vadd.f32 %v593, %v778
        %v781 = vadd.f32 %v594, %v779
        %s782 = scalar_lea.vmem [#allocation6], 8
        %v783 = vld [vmem:[%s782] sm:$0xf]
        %s784 = scalar_lea.vmem [#allocation6], 20
        %v785 = vld [vmem:[%s784] sm:$0xf]
        %786 = vrot.lane.b32.xlu0 %v408, 110
        %v787 = vpop.permute.xlu0 %786
        %788 = vrot.lane.b32.xlu0 %v409, 110
        %v789 = vpop.permute.xlu0 %788
        %790 = vrot.lane.b32.xlu0 %v410, 110
        %v791 = vpop.permute.xlu0 %790
        %vm792 = vcmask 900096
        %v793 = vsel %vm792, %v787, %v789
        %v794 = vsel %vm792, %v789, %v791
        %v796 = vsel %vm420, %v785, 0
        %v799 = vsel %vm424, %v793, 0
        %v802 = vsel %vm424, %v794, 0
        %804 = vmatprep.subr.bf16.mxu0 %v802
        %805 = vmatpush1.bf16.msra.mxu0 %v799
        %806 = vmatprep.subr.bf16.mxu0 0
        %807 = vmatpush1.bf16.msra.mxu0 0
        %808 = vmatprep.subr.bf16.mxu0 0
        %809 = vmatpush1.bf16.msra.mxu0 0
        %810 = vmatprep.subr.bf16.mxu0 0
        %811 = vmatpush1.bf16.msra.mxu0 0
        %812 = vmatprep.subr.bf16.mxu0 0
        %813 = vmatpush1.bf16.msra.mxu0 0
        %814 = vmatprep.subr.bf16.mxu0 0
        %815 = vmatpush1.bf16.msra.mxu0 0
        %816 = vmatprep.subr.bf16.mxu0 0
        %817 = vmatpush1.bf16.msra.mxu0 0
        %818 = vmatprep.subr.bf16.mxu0 0
        %819 = vmatpush1.bf16.msra.mxu0 0
        %820 = vmatprep.subr.bf16.mxu0 0
        %821 = vmatpush1.bf16.msra.mxu0 0
        %822 = vmatprep.subr.bf16.mxu0 0
        %823 = vmatpush1.bf16.msra.mxu0 0
        %824 = vmatprep.subr.bf16.mxu0 0
        %825 = vmatpush1.bf16.msra.mxu0 0
        %826 = vmatprep.subr.bf16.mxu0 0
        %827 = vmatpush1.bf16.msra.mxu0 0
        %828 = vmatprep.subr.bf16.mxu0 0
        %829 = vmatpush1.bf16.msra.mxu0 0
        %830 = vmatprep.subr.bf16.mxu0 0
        %831 = vmatpush1.bf16.msra.mxu0 0
        %832 = vmatprep.subr.bf16.mxu0 0
        %833 = vmatpush1.bf16.msra.mxu0 0
        %834 = vmatprep.subr.bf16.mxu0 0
        %835 = vmatpush1.bf16.msra.mxu0 0
        %836 = vmatprep.mubr.bf16.mxu0 0
        %837 = vmatmul.mubr.bf16.gmra.mrb[0].mxu0 %v796
        %v838 = vpop.f32.mrb[0].mxu0
        %v839 = vadd.f32 0.0, %v838
        %v840 = vpop.f32.mrb[0].mxu0
        %v841 = vadd.f32 0.0, %v840
        %v842 = vpop.f32.mrb[0].mxu0
        %v843 = vpop.f32.mrb[0].mxu0
        %844 = vdwg.mxu0
        %845 = vrot.lane.b32.xlu0 %v408, 126
        %v846 = vpop.permute.xlu0 %845
        %847 = vrot.lane.b32.xlu0 %v409, 126
        %v848 = vpop.permute.xlu0 %847
        %849 = vrot.lane.b32.xlu0 %v410, 126
        %v850 = vpop.permute.xlu0 %849
        %vm851 = vcmask 1031168
        %v852 = vsel %vm851, %v846, %v848
        %v853 = vsel %vm851, %v848, %v850
        %v855 = vsel %vm420, %v783, 0
        %v858 = vsel %vm424, %v852, 0
        %v861 = vsel %vm424, %v853, 0
        %863 = vmatprep.subr.bf16.mxu0 %v861
        %864 = vmatpush1.bf16.msra.mxu0 %v858
        %865 = vmatprep.subr.bf16.mxu0 0
        %866 = vmatpush1.bf16.msra.mxu0 0
        %867 = vmatprep.subr.bf16.mxu0 0
        %868 = vmatpush1.bf16.msra.mxu0 0
        %869 = vmatprep.subr.bf16.mxu0 0
        %870 = vmatpush1.bf16.msra.mxu0 0
        %871 = vmatprep.subr.bf16.mxu0 0
        %872 = vmatpush1.bf16.msra.mxu0 0
        %873 = vmatprep.subr.bf16.mxu0 0
        %874 = vmatpush1.bf16.msra.mxu0 0
        %875 = vmatprep.subr.bf16.mxu0 0
        %876 = vmatpush1.bf16.msra.mxu0 0
        %877 = vmatprep.subr.bf16.mxu0 0
        %878 = vmatpush1.bf16.msra.mxu0 0
        %879 = vmatprep.subr.bf16.mxu0 0
        %880 = vmatpush1.bf16.msra.mxu0 0
        %881 = vmatprep.subr.bf16.mxu0 0
        %882 = vmatpush1.bf16.msra.mxu0 0
        %883 = vmatprep.subr.bf16.mxu0 0
        %884 = vmatpush1.bf16.msra.mxu0 0
        %885 = vmatprep.subr.bf16.mxu0 0
        %886 = vmatpush1.bf16.msra.mxu0 0
        %887 = vmatprep.subr.bf16.mxu0 0
        %888 = vmatpush1.bf16.msra.mxu0 0
        %889 = vmatprep.subr.bf16.mxu0 0
        %890 = vmatpush1.bf16.msra.mxu0 0
        %891 = vmatprep.subr.bf16.mxu0 0
        %892 = vmatpush1.bf16.msra.mxu0 0
        %893 = vmatprep.subr.bf16.mxu0 0
        %894 = vmatpush1.bf16.msra.mxu0 0
        %895 = vmatprep.mubr.bf16.mxu0 0
        %896 = vmatmul.mubr.bf16.gmra.mrb[0].mxu0 %v855
        %v897 = vpop.f32.mrb[0].mxu0
        %v898 = vadd.f32 %v839, %v897
        %v899 = vpop.f32.mrb[0].mxu0
        %v900 = vadd.f32 %v841, %v899
        %v901 = vpop.f32.mrb[0].mxu0
        %v902 = vpop.f32.mrb[0].mxu0
        %903 = vdwg.mxu0
        %s904 = scalar_lea.vmem [#allocation6], 32
        %v905 = vld [vmem:[%s904] sm:$0xf]
        %906 = vrot.lane.b32.xlu0 %v408, 94
        %v907 = vpop.permute.xlu0 %906
        %908 = vrot.lane.b32.xlu0 %v409, 94
        %v909 = vpop.permute.xlu0 %908
        %910 = vrot.lane.b32.xlu0 %v410, 94
        %v911 = vpop.permute.xlu0 %910
        %vm912 = vcmask 769024
        %v913 = vsel %vm912, %v907, %v909
        %v914 = vsel %vm912, %v909, %v911
        %v916 = vsel %vm420, %v905, 0
        %v919 = vsel %vm424, %v913, 0
        %v922 = vsel %vm424, %v914, 0
        %924 = vmatprep.subr.bf16.mxu0 %v922
        %925 = vmatpush1.bf16.msra.mxu0 %v919
        %926 = vmatprep.subr.bf16.mxu0 0
        %927 = vmatpush1.bf16.msra.mxu0 0
        %928 = vmatprep.subr.bf16.mxu0 0
        %929 = vmatpush1.bf16.msra.mxu0 0
        %930 = vmatprep.subr.bf16.mxu0 0
        %931 = vmatpush1.bf16.msra.mxu0 0
        %932 = vmatprep.subr.bf16.mxu0 0
        %933 = vmatpush1.bf16.msra.mxu0 0
        %934 = vmatprep.subr.bf16.mxu0 0
        %935 = vmatpush1.bf16.msra.mxu0 0
        %936 = vmatprep.subr.bf16.mxu0 0
        %937 = vmatpush1.bf16.msra.mxu0 0
        %938 = vmatprep.subr.bf16.mxu0 0
        %939 = vmatpush1.bf16.msra.mxu0 0
        %940 = vmatprep.subr.bf16.mxu0 0
        %941 = vmatpush1.bf16.msra.mxu0 0
        %942 = vmatprep.subr.bf16.mxu0 0
        %943 = vmatpush1.bf16.msra.mxu0 0
        %944 = vmatprep.subr.bf16.mxu0 0
        %945 = vmatpush1.bf16.msra.mxu0 0
        %946 = vmatprep.subr.bf16.mxu0 0
        %947 = vmatpush1.bf16.msra.mxu0 0
        %948 = vmatprep.subr.bf16.mxu0 0
        %949 = vmatpush1.bf16.msra.mxu0 0
        %950 = vmatprep.subr.bf16.mxu0 0
        %951 = vmatpush1.bf16.msra.mxu0 0
        %952 = vmatprep.subr.bf16.mxu0 0
        %953 = vmatpush1.bf16.msra.mxu0 0
        %954 = vmatprep.subr.bf16.mxu0 0
        %955 = vmatpush1.bf16.msra.mxu0 0
        %956 = vmatprep.mubr.bf16.mxu0 0
        %957 = vmatmul.mubr.bf16.gmra.mrb[0].mxu0 %v916
        %v958 = vpop.f32.mrb[0].mxu0
        %v959 = vadd.f32 0.0, %v958
        %v960 = vpop.f32.mrb[0].mxu0
        %v961 = vadd.f32 0.0, %v960
        %v962 = vpop.f32.mrb[0].mxu0
        %v963 = vpop.f32.mrb[0].mxu0
        %964 = vdwg.mxu0
        %v965 = vadd.f32 %v898, %v959
        %v966 = vadd.f32 %v900, %v961
        %vm967 = vcmp.le.s32.totalorder %v396, 14
        %vm968 = vcmp.le.s32.totalorder %v397, 14
        %v969 = vsel %vm967, 1, 0
        %v970 = vsel %vm968, 1, 0
        %vm971 = vcmp.eq.s32.totalorder %v969, 1
        %vm972 = vcmp.eq.s32.totalorder %v970, 1
        %v973 = vsel %vm971, %v965, 0.0
        %v974 = vsel %vm972, %v966, 0.0
        %v975 = vadd.f32 %v780, %v973
        %v976 = vadd.f32 %v781, %v974
        %v977 = vpack.c.bf16 %v975, %v975
        %v978 = vpack.c.bf16 %v976, %v976
        %v981 = vunpack.c.l.b16 %v977
        %v982 = vunpack.c.l.b16 %v978
        %v983 = vpack.c.b16 %v982, %v981
        %985 = vst [vmem:[%s311] sm:$0xff] %v983
        %v986 = vadd.f32 %v975, %v976
        %987 = vadd.xlane.f32.xlu0 %v986
        %v988 = vpop.xlane.xlu0 %987
        %vm989 = vcmask 7168
        %990 = vst.msk [vmem:[%s318] sm:$0xff] %vm989, %v988
        %v991 = vmul.f32 %v975, %v975
        %v992 = vmul.f32 %v976, %v976
        %v993 = vadd.f32 %v991, %v992
        %994 = vadd.xlane.f32.xlu0 %v993
        %v995 = vpop.xlane.xlu0 %994
        %996 = vst.msk [vmem:[%s325] sm:$0xff] %vm989, %v995
        %s997 = sand.u32 %s126, 1
        %s998 = scalar_lea.sflag [#allocation5], %s997
        %s999 = sand.u32 %s126, 1
        %s1000 = smul.addr %s999, 8
        %s1001 = scalar_lea.vmem [#allocation11], %s1000
        %s1002 = sand.u32 %s29, 1
        %s1003 = scalar_lea.sflag [#allocation13], %s1002
        %s1004 = sand.u32 %s152, 1
        %s1005 = smul.addr %s1004, 8
        %s1006 = scalar_lea.vmem [#allocation12], %s1005
        %s1007 = sand.u32 %s29, 1
        %s1008 = scalar_lea.sflag [#allocation13], %s1007
        %s1009 = sand.u32 %s178, 1
        %s1010 = smul.addr %s1009, 8
        %s1011 = scalar_lea.vmem [#allocation14], %s1010
        // Predicated region
        $region53: #{bottleneck_forward.5} parent=35 // pred_check
          %p1012 = pneg %p136
        $region54: #{bottleneck_forward.5} parent=35 // pred_check_branch
          %1014 = sbr.rel (%p1012) target = $region56
        $region55: #{bottleneck_forward.5} parent=35 // pred_region
          %s1016 = ssub.s32 128, 128
          %1017 = vsyncadd %s998, %s1016
          %s1018 = smul.addr %s29, 2
          %s1019 = smul.addr %s1018, 64
          %s1020 = scalar_lea.hbm %s4, %s1019
          %s1022 = sshll.u32 %s1001, 4
          %s1023 = int_to_ptr.vmem [resolvable:$true] %s1022
          %1025 = dma.vmem_to_hbm [thread:$0]  %s1023, 128, %s1020, %s998
        $region56: #{bottleneck_forward.5} parent=35 // pred_fallthru
          _
        // Predicated region
        $region57: #{bottleneck_forward.5} parent=35 // pred_check
          %p1026 = pneg %p162
        $region58: #{bottleneck_forward.5} parent=35 // pred_check_branch
          %1028 = sbr.rel (%p1026) target = $region60
        $region59: #{bottleneck_forward.5} parent=35 // pred_region
          %s1030 = ssub.s32 128, 128
          %1031 = vsyncadd %s1003, %s1030
          %s1032 = smul.addr %s29, 128
          %s1033 = scalar_lea.hbm %s5, %s1032
          %s1035 = sshll.u32 %s1006, 4
          %s1036 = int_to_ptr.vmem [resolvable:$true] %s1035
          %1038 = dma.vmem_to_hbm [thread:$0]  %s1036, 128, %s1033, %s1003
        $region60: #{bottleneck_forward.5} parent=35 // pred_fallthru
          _
        // Predicated region
        $region61: #{bottleneck_forward.5} parent=35 // pred_check
          %p1039 = pneg %p188
        $region62: #{bottleneck_forward.5} parent=35 // pred_check_branch
          %1041 = sbr.rel (%p1039) target = $region64
        $region63: #{bottleneck_forward.5} parent=35 // pred_region
          %s1043 = ssub.s32 128, 128
          %1044 = vsyncadd %s1008, %s1043
          %s1045 = smul.addr %s29, 128
          %s1046 = scalar_lea.hbm %s6, %s1045
          %s1048 = sshll.u32 %s1011, 4
          %s1049 = int_to_ptr.vmem [resolvable:$true] %s1048
          %1051 = dma.vmem_to_hbm [thread:$0]  %s1049, 128, %s1046, %s1008
        $region64: #{bottleneck_forward.5} parent=35 // pred_fallthru
          _
      $region36: #{bottleneck_forward.5} parent=5 // pred_fallthru
        _
      %p1052 = scmp.le.s32.totalorder 2, %s24
      // Predicated region
      $region65: #{bottleneck_forward.5} parent=5 // pred_check
        %p1053 = pneg %p1052
      $region66: #{bottleneck_forward.5} parent=5 // pred_check_branch
        %1055 = sbr.rel (%p1053) target = $region68
      $region67: #{bottleneck_forward.5} parent=5 // pred_region
        %s1056 = ssub.s32 %s24, 2
        // Predicated region
        $region69: #{bottleneck_forward.5} parent=67 // pred_check
          %p1057 = pneg %p142
        $region70: #{bottleneck_forward.5} parent=67 // pred_check_branch
          %1059 = sbr.rel (%p1057) target = $region72
        $region71: #{bottleneck_forward.5} parent=67 // pred_region
          %s1060 = sand.u32 %s127, 1
          %s1061 = scalar_lea.sflag [#allocation5], %s1060
          %s1062 = sand.u32 %s127, 1
          %s1063 = smul.addr %s1062, 8
          %s1064 = scalar_lea.vmem [#allocation11], %s1063
          %1065 = dma.done %s1061, 128
        $region72: #{bottleneck_forward.5} parent=67 // pred_fallthru
          _
        // Predicated region
        $region73: #{bottleneck_forward.5} parent=67 // pred_check
          %p1066 = pneg %p168
        $region74: #{bottleneck_forward.5} parent=67 // pred_check_branch
          %1068 = sbr.rel (%p1066) target = $region76
        $region75: #{bottleneck_forward.5} parent=67 // pred_region
          %s1069 = sand.u32 %s30, 1
          %s1070 = scalar_lea.sflag [#allocation13], %s1069
          %s1071 = sand.u32 %s153, 1
          %s1072 = smul.addr %s1071, 8
          %s1073 = scalar_lea.vmem [#allocation12], %s1072
          %1074 = dma.done %s1070, 128
        $region76: #{bottleneck_forward.5} parent=67 // pred_fallthru
          _
        // Predicated region
        $region77: #{bottleneck_forward.5} parent=67 // pred_check
          %p1075 = pneg %p194
        $region78: #{bottleneck_forward.5} parent=67 // pred_check_branch
          %1077 = sbr.rel (%p1075) target = $region80
        $region79: #{bottleneck_forward.5} parent=67 // pred_region
          %s1078 = sand.u32 %s30, 1
          %s1079 = scalar_lea.sflag [#allocation13], %s1078
          %s1080 = sand.u32 %s179, 1
          %s1081 = smul.addr %s1080, 8
          %s1082 = scalar_lea.vmem [#allocation14], %s1081
          %1083 = dma.done %s1079, 128
        $region80: #{bottleneck_forward.5} parent=67 // pred_fallthru
          _
      $region68: #{bottleneck_forward.5} parent=5 // pred_fallthru
        _
    $region6: #{bottleneck_forward.5} parent=1 // loop_footer
      %s28 = sadd.s32 1, %s24
    $region7: #{bottleneck_forward.5} parent=1 // loop_footer_branch
      %23 = sbr.rel target = $region3
    $region8: #{bottleneck_forward.5} parent=1 // loop_exit
      _
    %1084 = vsyncpa [#allocation4], 1
    %s1085 = scalar_lea.sflag [#allocation4], 1
    %1086 = vsyncpa %s1085, 1
    %1087 = vsyncpa [#allocation7], 1
    %1088 = vsyncpa [#allocation10], 1
    %1089 = vsyncpa [#allocation5], 1
    %s1090 = scalar_lea.sflag [#allocation5], 1
    %1091 = vsyncpa %s1090, 1
    %1092 = vsyncpa [#allocation13], 1
    %s1093 = scalar_lea.sflag [#allocation13], 1
    %1094 = vsyncpa %s1093, 1

</llo_original>
